<compile_context>
chip_gen: v6e
topology: v6e:2x2x1
jax: 0.10.0
libtpu: 0.0.40
codegen_flags: <defaults>
</compile_context>

<pallas_src>
import jax
import jax.numpy as jnp
from jax.experimental import pallas as pl
from jax.experimental.pallas import tpu as pltpu

LEAKY_SLOPE = 0.01  # torch.nn.LeakyReLU default negative_slope

MAX_TILE_B = 512    # rows per grid step at large batch (keeps MXU fed)


def _round_up(n, m):
    return (n + m - 1) // m * m


def _cdiv(a, b):
    return (a + b - 1) // b


def _fused_mlp_kernel(x_ref,
                      w1_ref, b1_ref, w2_ref, b2_ref, w3_ref, b3_ref,
                      w4_ref, b4_ref, w5_ref, b5_ref,
                      o_ref):
    """Whole 5-layer MLP fused in a single kernel invocation.

    x_ref: (tile_b, F_pad) bf16.  w*_ref: bf16 padded weights (resident in
    VMEM, Buffered(1)).  b*_ref: f32 padded biases.  Matmuls run
    bf16 x bf16 -> f32 on the MXU; activations stay in f32 on the VPU/EUP.
    """
    def layer(h_bf16, w_ref, b_ref):
        y = jnp.dot(h_bf16, w_ref[...], preferred_element_type=jnp.float32)
        return y + b_ref[...]          # (1, out) bias broadcasts over rows

    def leaky(y):
        return jnp.where(y >= 0.0, y, jnp.float32(LEAKY_SLOPE) * y)

    h = x_ref[...]                                  # already bf16
    y = leaky(layer(h, w1_ref, b1_ref))
    y = leaky(layer(y.astype(jnp.bfloat16), w2_ref, b2_ref))
    y = leaky(layer(y.astype(jnp.bfloat16), w3_ref, b3_ref))
    y = leaky(layer(y.astype(jnp.bfloat16), w4_ref, b4_ref))
    y = layer(y.astype(jnp.bfloat16), w5_ref, b5_ref)
    # Exact f32 sigmoid (tensor is only (tile_b, 128); exact recip is free
    # and keeps the output strictly in (0, 1), matching torch.sigmoid).
    y = 1.0 / (1.0 + jnp.exp(-y))
    o_ref[...] = y.astype(o_ref.dtype)


def init_params(dimensions, key, dtype=jnp.float32):
    """f32 master weights, torch.nn.Linear-style U(-1/sqrt(fan_in), +) init.

    Weight stored as (in_features, out_features) so the kernel computes
    y = x @ W + b  (== torch's x @ W_t.T + b with W = W_t.T).
    """
    sizes = [dimensions * 4, 1000, 500, 300, 30, 1]
    params = []
    for i in range(len(sizes) - 1):
        fan_in, fan_out = sizes[i], sizes[i + 1]
        key, kw, kb = jax.random.split(key, 3)
        bound = 1.0 / (fan_in ** 0.5)
        w = jax.random.uniform(kw, (fan_in, fan_out), dtype, -bound, bound)
        b = jax.random.uniform(kb, (1, fan_out), dtype, -bound, bound)
        params.append((w, b))
    return params


def prepare_params(params):
    """Pad every layer to 128-lane multiples, cast weights to bf16 (biases f32)."""
    # TODO(synk): int8 weights + per-layer scales would halve weight DMA on
    # v5e/v6e (the binding cost at small batch); kept bf16 here so one code
    # path is correct on all chips (v7x MXU has no int path).
    flat = []
    for w, b in params:
        in_p = _round_up(w.shape[0], 128)
        out_p = _round_up(w.shape[1], 128)
        w_p = jnp.zeros((in_p, out_p), jnp.bfloat16)
        w_p = w_p.at[: w.shape[0], : w.shape[1]].set(w.astype(jnp.bfloat16))
        b_p = jnp.zeros((1, out_p), jnp.float32)
        b_p = b_p.at[:, : b.shape[1]].set(b.astype(jnp.float32))
        flat.extend([w_p, b_p])
    return tuple(flat)


def _choose_tiling(B):
    """Balanced batch tiles: <=MAX_TILE_B rows, multiple of 16, minimal pad.

    For B >= 512 force at least 2 grid steps so the 'parallel' batch axis can
    shard across both TensorCores on v7x.
    """
    n_steps = _cdiv(B, MAX_TILE_B)
    if B >= 512:
        n_steps = max(n_steps, 2)
    tile_b = _round_up(_cdiv(B, n_steps), 16)   # 16-row align (bf16 sublanes)
    n_steps = _cdiv(B, tile_b)
    return tile_b, n_steps


@jax.jit
def neural_network_forward(x, padded_params):
    """x: (B, 4, dimensions) -> probabilities (B, 1) in f32."""
    (w1, b1, w2, b2, w3, b3, w4, b4, w5, b5) = padded_params

    B = x.shape[0]
    F = 1
    for d in x.shape[1:]:
        F *= d
    F_pad = w1.shape[0]
    out_pad = w5.shape[1]

    # nn.Flatten() + single cast to bf16 (halves input DMA vs f32 blocks).
    h = x.reshape(B, F).astype(jnp.bfloat16)

    tile_b, n_steps = _choose_tiling(B)
    B_pad = tile_b * n_steps
    pad_b, pad_f = B_pad - B, F_pad - F
    if pad_b or pad_f:
        # Zero-pad only the dims that need it (feature pad MUST stay zero so
        # padded lanes contribute nothing through the padded weight rows).
        h = jnp.pad(h, ((0, pad_b), (0, pad_f)))

    weights = (w1, b1, w2, b2, w3, b3, w4, b4, w5, b5)
    in_specs = [pl.BlockSpec((tile_b, F_pad), lambda i: (i, 0))]
    for p in weights:
        # Whole-array blocks, constant block index -> fetched once, resident
        # in VMEM.  Buffered(1): no pointless second buffer.
        in_specs.append(
            pl.BlockSpec(p.shape, lambda i: (0, 0),
                         pipeline_mode=pl.Buffered(1)))

    vmem_bytes = (32 if tile_b > 256 else 16) << 20

    out = pl.pallas_call(
        _fused_mlp_kernel,
        out_shape=jax.ShapeDtypeStruct((B_pad, out_pad), jnp.float32),
        grid=(n_steps,),
        in_specs=in_specs,
        out_specs=pl.BlockSpec((tile_b, out_pad), lambda i: (i, 0)),
        compiler_params=pltpu.CompilerParams(
            dimension_semantics=("parallel",),   # shards batch across TCs
            vmem_limit_bytes=vmem_bytes,
        ),
    )(h, *weights)

    return out[:B, :1]   # drop batch padding and the 127 padded output lanes


def _reference_forward(x, params):
    """Pure-JAX f32 reference (for correctness tolerance check)."""
    h = x.reshape(x.shape[0], -1).astype(jnp.float32)
    for idx, (w, b) in enumerate(params):
        h = h @ w + b
        if idx < len(params) - 1:
            h = jnp.where(h >= 0.0, h, jnp.float32(LEAKY_SLOPE) * h)
        else:
            h = 1.0 / (1.0 + jnp.exp(-h))
    return h


if __name__ == "__main__":
    dimensions = 32          # flattened input dim = 4 * 32 = 128
    batch = 6                # non-multiple of 16 -> exercises the batch pad

    key = jax.random.PRNGKey(0)
    key, kx = jax.random.split(key)
    x = jax.random.normal(kx, (batch, 4, dimensions), jnp.float32)

    params_f32 = init_params(dimensions, key)
    padded_params = prepare_params(params_f32)

    out = neural_network_forward(x, padded_params)
    out = jax.block_until_ready(out)

    assert out.shape == (batch, 1), out.shape
    assert bool(jnp.all((out > 0.0) & (out < 1.0))), "sigmoid output out of range"

    # Loose tolerance: kernel uses bf16 weights/activations between layers.
    ref = _reference_forward(x, params_f32)
    assert bool(jnp.all(jnp.abs(out - ref) < 3e-2)), "mismatch vs f32 reference"

    print("KERNEL_OK")
</pallas_src>

<mosaic_0001>
module attributes {stable_mosaic.version = 11 : i64} {
  func.func @_fused_mlp_kernel(%arg0: i32, %arg1: memref<16x128xbf16, #tpu.memory_space<vmem>>, %arg2: memref<128x1024xbf16, #tpu.memory_space<vmem>>, %arg3: memref<1x1024xf32, #tpu.memory_space<vmem>>, %arg4: memref<1024x512xbf16, #tpu.memory_space<vmem>>, %arg5: memref<1x512xf32, #tpu.memory_space<vmem>>, %arg6: memref<512x384xbf16, #tpu.memory_space<vmem>>, %arg7: memref<1x384xf32, #tpu.memory_space<vmem>>, %arg8: memref<384x128xbf16, #tpu.memory_space<vmem>>, %arg9: memref<1x128xf32, #tpu.memory_space<vmem>>, %arg10: memref<128x128xbf16, #tpu.memory_space<vmem>>, %arg11: memref<1x128xf32, #tpu.memory_space<vmem>>, %arg12: memref<16x128xf32, #tpu.memory_space<vmem>>) attributes {dimension_semantics = [#tpu.dimension_semantics<parallel>], iteration_bounds = array<i64: 1>, scalar_prefetch = 0 : i64, scratch_operands = 0 : i64, tpu.core_type = #tpu.core_type<tc>, window_params = [{transform_indices = @transform_0, window_bounds = array<i64: 16, 128>}, {pipeline_mode = #tpu.pipeline_mode<synchronous>, transform_indices = @transform_1, window_bounds = array<i64: 128, 1024>}, {pipeline_mode = #tpu.pipeline_mode<synchronous>, transform_indices = @transform_2, window_bounds = array<i64: 1, 1024>}, {pipeline_mode = #tpu.pipeline_mode<synchronous>, transform_indices = @transform_3, window_bounds = array<i64: 1024, 512>}, {pipeline_mode = #tpu.pipeline_mode<synchronous>, transform_indices = @transform_4, window_bounds = array<i64: 1, 512>}, {pipeline_mode = #tpu.pipeline_mode<synchronous>, transform_indices = @transform_5, window_bounds = array<i64: 512, 384>}, {pipeline_mode = #tpu.pipeline_mode<synchronous>, transform_indices = @transform_6, window_bounds = array<i64: 1, 384>}, {pipeline_mode = #tpu.pipeline_mode<synchronous>, transform_indices = @transform_7, window_bounds = array<i64: 384, 128>}, {pipeline_mode = #tpu.pipeline_mode<synchronous>, transform_indices = @transform_8, window_bounds = array<i64: 1, 128>}, {pipeline_mode = #tpu.pipeline_mode<synchronous>, transform_indices = @transform_9, window_bounds = array<i64: 128, 128>}, {pipeline_mode = #tpu.pipeline_mode<synchronous>, transform_indices = @transform_10, window_bounds = array<i64: 1, 128>}, {transform_indices = @transform_11, window_bounds = array<i64: 16, 128>}]} {
    %c0 = arith.constant 0 : index
    %c0_0 = arith.constant 0 : index
    %0 = vector.load %arg1[%c0, %c0_0] : memref<16x128xbf16, #tpu.memory_space<vmem>>, vector<16x128xbf16>
    %c0_1 = arith.constant 0 : index
    %c0_2 = arith.constant 0 : index
    %1 = vector.load %arg2[%c0_1, %c0_2] : memref<128x1024xbf16, #tpu.memory_space<vmem>>, vector<128x1024xbf16>
    %cst = arith.constant dense<0.000000e+00> : vector<16x1024xf32>
    %2 = tpu.matmul %0, %1, %cst {dimension_numbers = #tpu.dot_dimension_numbers<[1], [0], [0], [1], [0, 0, 1, 1], [], []>} : vector<16x128xbf16>, vector<128x1024xbf16>, vector<16x1024xf32> -> vector<16x1024xf32>
    %c0_3 = arith.constant 0 : index
    %c0_4 = arith.constant 0 : index
    %3 = vector.load %arg3[%c0_3, %c0_4] : memref<1x1024xf32, #tpu.memory_space<vmem>>, vector<1x1024xf32>
    %4 = vector.broadcast %3 : vector<1x1024xf32> to vector<16x1024xf32>
    %5 = arith.addf %2, %4 : vector<16x1024xf32>
    %cst_5 = arith.constant 0.000000e+00 : f32
    %6 = vector.broadcast %cst_5 : f32 to vector<16x1024xf32>
    %7 = arith.cmpf oge, %5, %6 : vector<16x1024xf32>
    %cst_6 = arith.constant 0.00999999977 : f32
    %8 = vector.broadcast %cst_6 : f32 to vector<16x1024xf32>
    %9 = arith.mulf %8, %5 : vector<16x1024xf32>
    %10 = arith.select %7, %5, %9 : vector<16x1024xi1>, vector<16x1024xf32>
    %11 = arith.truncf %10 : vector<16x1024xf32> to vector<16x1024xbf16>
    %c0_7 = arith.constant 0 : index
    %c0_8 = arith.constant 0 : index
    %12 = vector.load %arg4[%c0_7, %c0_8] : memref<1024x512xbf16, #tpu.memory_space<vmem>>, vector<1024x512xbf16>
    %cst_9 = arith.constant dense<0.000000e+00> : vector<16x512xf32>
    %13 = tpu.matmul %11, %12, %cst_9 {dimension_numbers = #tpu.dot_dimension_numbers<[1], [0], [0], [1], [0, 0, 1, 1], [], []>} : vector<16x1024xbf16>, vector<1024x512xbf16>, vector<16x512xf32> -> vector<16x512xf32>
    %c0_10 = arith.constant 0 : index
    %c0_11 = arith.constant 0 : index
    %14 = vector.load %arg5[%c0_10, %c0_11] : memref<1x512xf32, #tpu.memory_space<vmem>>, vector<1x512xf32>
    %15 = vector.broadcast %14 : vector<1x512xf32> to vector<16x512xf32>
    %16 = arith.addf %13, %15 : vector<16x512xf32>
    %cst_12 = arith.constant 0.000000e+00 : f32
    %17 = vector.broadcast %cst_12 : f32 to vector<16x512xf32>
    %18 = arith.cmpf oge, %16, %17 : vector<16x512xf32>
    %cst_13 = arith.constant 0.00999999977 : f32
    %19 = vector.broadcast %cst_13 : f32 to vector<16x512xf32>
    %20 = arith.mulf %19, %16 : vector<16x512xf32>
    %21 = arith.select %18, %16, %20 : vector<16x512xi1>, vector<16x512xf32>
    %22 = arith.truncf %21 : vector<16x512xf32> to vector<16x512xbf16>
    %c0_14 = arith.constant 0 : index
    %c0_15 = arith.constant 0 : index
    %23 = vector.load %arg6[%c0_14, %c0_15] : memref<512x384xbf16, #tpu.memory_space<vmem>>, vector<512x384xbf16>
    %cst_16 = arith.constant dense<0.000000e+00> : vector<16x384xf32>
    %24 = tpu.matmul %22, %23, %cst_16 {dimension_numbers = #tpu.dot_dimension_numbers<[1], [0], [0], [1], [0, 0, 1, 1], [], []>} : vector<16x512xbf16>, vector<512x384xbf16>, vector<16x384xf32> -> vector<16x384xf32>
    %c0_17 = arith.constant 0 : index
    %c0_18 = arith.constant 0 : index
    %25 = vector.load %arg7[%c0_17, %c0_18] : memref<1x384xf32, #tpu.memory_space<vmem>>, vector<1x384xf32>
    %26 = vector.broadcast %25 : vector<1x384xf32> to vector<16x384xf32>
    %27 = arith.addf %24, %26 : vector<16x384xf32>
    %cst_19 = arith.constant 0.000000e+00 : f32
    %28 = vector.broadcast %cst_19 : f32 to vector<16x384xf32>
    %29 = arith.cmpf oge, %27, %28 : vector<16x384xf32>
    %cst_20 = arith.constant 0.00999999977 : f32
    %30 = vector.broadcast %cst_20 : f32 to vector<16x384xf32>
    %31 = arith.mulf %30, %27 : vector<16x384xf32>
    %32 = arith.select %29, %27, %31 : vector<16x384xi1>, vector<16x384xf32>
    %33 = arith.truncf %32 : vector<16x384xf32> to vector<16x384xbf16>
    %c0_21 = arith.constant 0 : index
    %c0_22 = arith.constant 0 : index
    %34 = vector.load %arg8[%c0_21, %c0_22] : memref<384x128xbf16, #tpu.memory_space<vmem>>, vector<384x128xbf16>
    %cst_23 = arith.constant dense<0.000000e+00> : vector<16x128xf32>
    %35 = tpu.matmul %33, %34, %cst_23 {dimension_numbers = #tpu.dot_dimension_numbers<[1], [0], [0], [1], [0, 0, 1, 1], [], []>} : vector<16x384xbf16>, vector<384x128xbf16>, vector<16x128xf32> -> vector<16x128xf32>
    %c0_24 = arith.constant 0 : index
    %c0_25 = arith.constant 0 : index
    %36 = vector.load %arg9[%c0_24, %c0_25] : memref<1x128xf32, #tpu.memory_space<vmem>>, vector<1x128xf32>
    %37 = vector.broadcast %36 : vector<1x128xf32> to vector<16x128xf32>
    %38 = arith.addf %35, %37 : vector<16x128xf32>
    %cst_26 = arith.constant 0.000000e+00 : f32
    %39 = vector.broadcast %cst_26 : f32 to vector<16x128xf32>
    %40 = arith.cmpf oge, %38, %39 : vector<16x128xf32>
    %cst_27 = arith.constant 0.00999999977 : f32
    %41 = vector.broadcast %cst_27 : f32 to vector<16x128xf32>
    %42 = arith.mulf %41, %38 : vector<16x128xf32>
    %43 = arith.select %40, %38, %42 : vector<16x128xi1>, vector<16x128xf32>
    %44 = arith.truncf %43 : vector<16x128xf32> to vector<16x128xbf16>
    %c0_28 = arith.constant 0 : index
    %c0_29 = arith.constant 0 : index
    %45 = vector.load %arg10[%c0_28, %c0_29] : memref<128x128xbf16, #tpu.memory_space<vmem>>, vector<128x128xbf16>
    %cst_30 = arith.constant dense<0.000000e+00> : vector<16x128xf32>
    %46 = tpu.matmul %44, %45, %cst_30 {dimension_numbers = #tpu.dot_dimension_numbers<[1], [0], [0], [1], [0, 0, 1, 1], [], []>} : vector<16x128xbf16>, vector<128x128xbf16>, vector<16x128xf32> -> vector<16x128xf32>
    %c0_31 = arith.constant 0 : index
    %c0_32 = arith.constant 0 : index
    %47 = vector.load %arg11[%c0_31, %c0_32] : memref<1x128xf32, #tpu.memory_space<vmem>>, vector<1x128xf32>
    %48 = vector.broadcast %47 : vector<1x128xf32> to vector<16x128xf32>
    %49 = arith.addf %46, %48 : vector<16x128xf32>
    %cst_33 = arith.constant 0.000000e+00 : f32
    %50 = vector.broadcast %cst_33 : f32 to vector<16x128xf32>
    %51 = arith.subf %50, %49 : vector<16x128xf32>
    %52 = math.exp %51 : vector<16x128xf32>
    %cst_34 = arith.constant 1.000000e+00 : f32
    %53 = vector.broadcast %cst_34 : f32 to vector<16x128xf32>
    %54 = arith.addf %53, %52 : vector<16x128xf32>
    %cst_35 = arith.constant 1.000000e+00 : f32
    %55 = vector.broadcast %cst_35 : f32 to vector<16x128xf32>
    %56 = arith.divf %55, %54 : vector<16x128xf32>
    %c0_36 = arith.constant 0 : index
    %c0_37 = arith.constant 0 : index
    %57 = vector.load %arg12[%c0_36, %c0_37] : memref<16x128xf32, #tpu.memory_space<vmem>>, vector<16x128xf32>
    tpu.vector_store %arg12[%c0_36, %c0_37], %56 {strides = array<i32>} : memref<16x128xf32, #tpu.memory_space<vmem>>, vector<16x128xf32>,
    return
  }
  func.func @transform_0(%arg0: i32) -> (i32, i32) {
    %c0_i32 = arith.constant 0 : i32
    %c0_i32_0 = arith.constant 0 : i32
    return %arg0, %c0_i32 : i32, i32
  }
  func.func @transform_1(%arg0: i32) -> (i32, i32) {
    %c0_i32 = arith.constant 0 : i32
    %c0_i32_0 = arith.constant 0 : i32
    %c0_i32_1 = arith.constant 0 : i32
    return %c0_i32, %c0_i32_0 : i32, i32
  }
  func.func @transform_2(%arg0: i32) -> (i32, i32) {
    %c0_i32 = arith.constant 0 : i32
    %c0_i32_0 = arith.constant 0 : i32
    %c0_i32_1 = arith.constant 0 : i32
    return %c0_i32, %c0_i32_0 : i32, i32
  }
  func.func @transform_3(%arg0: i32) -> (i32, i32) {
    %c0_i32 = arith.constant 0 : i32
    %c0_i32_0 = arith.constant 0 : i32
    %c0_i32_1 = arith.constant 0 : i32
    return %c0_i32, %c0_i32_0 : i32, i32
  }
  func.func @transform_4(%arg0: i32) -> (i32, i32) {
    %c0_i32 = arith.constant 0 : i32
    %c0_i32_0 = arith.constant 0 : i32
    %c0_i32_1 = arith.constant 0 : i32
    return %c0_i32, %c0_i32_0 : i32, i32
  }
  func.func @transform_5(%arg0: i32) -> (i32, i32) {
    %c0_i32 = arith.constant 0 : i32
    %c0_i32_0 = arith.constant 0 : i32
    %c0_i32_1 = arith.constant 0 : i32
    return %c0_i32, %c0_i32_0 : i32, i32
  }
  func.func @transform_6(%arg0: i32) -> (i32, i32) {
    %c0_i32 = arith.constant 0 : i32
    %c0_i32_0 = arith.constant 0 : i32
    %c0_i32_1 = arith.constant 0 : i32
    return %c0_i32, %c0_i32_0 : i32, i32
  }
  func.func @transform_7(%arg0: i32) -> (i32, i32) {
    %c0_i32 = arith.constant 0 : i32
    %c0_i32_0 = arith.constant 0 : i32
    %c0_i32_1 = arith.constant 0 : i32
    return %c0_i32, %c0_i32_0 : i32, i32
  }
  func.func @transform_8(%arg0: i32) -> (i32, i32) {
    %c0_i32 = arith.constant 0 : i32
    %c0_i32_0 = arith.constant 0 : i32
    %c0_i32_1 = arith.constant 0 : i32
    return %c0_i32, %c0_i32_0 : i32, i32
  }
  func.func @transform_9(%arg0: i32) -> (i32, i32) {
    %c0_i32 = arith.constant 0 : i32
    %c0_i32_0 = arith.constant 0 : i32
    %c0_i32_1 = arith.constant 0 : i32
    return %c0_i32, %c0_i32_0 : i32, i32
  }
  func.func @transform_10(%arg0: i32) -> (i32, i32) {
    %c0_i32 = arith.constant 0 : i32
    %c0_i32_0 = arith.constant 0 : i32
    %c0_i32_1 = arith.constant 0 : i32
    return %c0_i32, %c0_i32_0 : i32, i32
  }
  func.func @transform_11(%arg0: i32) -> (i32, i32) {
    %c0_i32 = arith.constant 0 : i32
    %c0_i32_0 = arith.constant 0 : i32
    return %arg0, %c0_i32 : i32, i32
  }
}

</mosaic_0001>

<llo_original>
// kernel: neural_network_forward.1
$region0: #{neural_network_forward.1}
  #allocation0 [shape = 'u32[]', space=smem, size = 0x4, offset = 0x4, fixed_abs, tag = 'smem constant byte address 0x4 - core index']
  #allocation1 [shape = 'u32[144,128]{1,0:T(1,128)}', space=vmem, size = 0x12000, scoped, tag = 'internal scratch']
  %s0 = inlined_call_operand.vmem [shape: bf16[16,128], index: 0, kind: input, shape index: {}]
  %s1 = inlined_call_operand.hbm [shape: bf16[128,1024], index: 1, kind: input, shape index: {}]
  %s2 = inlined_call_operand.vmem [shape: f32[1,1024], index: 2, kind: input, shape index: {}]
  %s3 = inlined_call_operand.hbm [shape: bf16[1024,512], index: 3, kind: input, shape index: {}]
  %s4 = inlined_call_operand.vmem [shape: f32[1,512], index: 4, kind: input, shape index: {}]
  %s5 = inlined_call_operand.hbm [shape: bf16[512,384], index: 5, kind: input, shape index: {}]
  %s6 = inlined_call_operand.vmem [shape: f32[1,384], index: 6, kind: input, shape index: {}]
  %s7 = inlined_call_operand.hbm [shape: bf16[384,128], index: 7, kind: input, shape index: {}]
  %s8 = inlined_call_operand.vmem [shape: f32[1,128], index: 8, kind: input, shape index: {}]
  %s9 = inlined_call_operand.vmem [shape: bf16[128,128], index: 9, kind: input, shape index: {}]
  %s10 = inlined_call_operand.vmem [shape: f32[1,128], index: 10, kind: input, shape index: {}]
  %s11 = inlined_call_operand.vmem [shape: f32[16,128], index: 11, kind: output, shape index: {}]
  %s12 = sld [smem:[#allocation0]]
  $region70: #{neural_network_forward.1} parent=0
    _
  %s14 = ssub.s32 1, %s12
  %s15 = scalar_select 0, %s14, %s12
  $region1: #{neural_network_forward.1} parent=0
    #allocation2 [shape = 'u8[262144]{0}', space=vmem, size = 0x40000, scoped, tag = 'input window, operand 1, single buffered']
    #allocation3 [shape = 's32[1]{0}', space=sflag, size = 0x4, scoped, tag = 'scoped memory for neural_network_forward.1']
    #allocation4 [shape = 'u8[1048576]{0}', space=vmem, size = 0x100000, scoped, tag = 'input window, operand 3, single buffered']
    #allocation5 [shape = 's32[1]{0}', space=sflag, size = 0x4, scoped, tag = 'scoped memory for neural_network_forward.1']
    #allocation6 [shape = 'u8[393216]{0}', space=vmem, size = 0x60000, scoped, tag = 'input window, operand 5, single buffered']
    #allocation7 [shape = 'u8[98304]{0}', space=vmem, size = 0x18000, scoped, tag = 'input window, operand 7, single buffered']
    #allocation8 [shape = 's32[1]{0}', space=sflag, size = 0x4, scoped, tag = 'scoped memory for neural_network_forward.1']
    %16 = vsyncpa [#allocation3], 0
    %17 = vsyncpa [#allocation5], 0
    %18 = vsyncpa [#allocation8], 0
    // Predicated region
    $region2: #{neural_network_forward.1} parent=1 // pred_check
      _
    $region3: #{neural_network_forward.1} parent=1 // pred_check_branch
      %20 = sbr.rel (0) target = $region5
    $region4: #{neural_network_forward.1} parent=1 // pred_region
      _
    $region5: #{neural_network_forward.1} parent=1 // pred_fallthru
      _
    // Predicated region
    $region6: #{neural_network_forward.1} parent=1 // pred_check
      _
    $region7: #{neural_network_forward.1} parent=1 // pred_check_branch
      %22 = sbr.rel (0) target = $region9
    $region8: #{neural_network_forward.1} parent=1 // pred_region
      %s24 = ssub.s32 8192, 8192
      %25 = vsyncadd [#allocation3], %s24
      %s26 = sshll.u32 [#allocation2], 4
      %s27 = int_to_ptr.vmem [resolvable:$true] %s26
      %32 = dma.hbm_to_vmem [thread:$0]  %s1, 8192, %s27, [#allocation3], 512, 512, 32
    $region9: #{neural_network_forward.1} parent=1 // pred_fallthru
      _
    // Predicated region
    $region10: #{neural_network_forward.1} parent=1 // pred_check
      _
    $region11: #{neural_network_forward.1} parent=1 // pred_check_branch
      %34 = sbr.rel (0) target = $region13
    $region12: #{neural_network_forward.1} parent=1 // pred_region
      _
    $region13: #{neural_network_forward.1} parent=1 // pred_fallthru
      _
    // Predicated region
    $region14: #{neural_network_forward.1} parent=1 // pred_check
      _
    $region15: #{neural_network_forward.1} parent=1 // pred_check_branch
      %36 = sbr.rel (0) target = $region17
    $region16: #{neural_network_forward.1} parent=1 // pred_region
      %s38 = ssub.s32 32768, 32768
      %39 = vsyncadd [#allocation5], %s38
      %s40 = sshll.u32 [#allocation4], 4
      %s41 = int_to_ptr.vmem [resolvable:$true] %s40
      %46 = dma.hbm_to_vmem [thread:$0]  %s3, 32768, %s41, [#allocation5], 256, 256, 16
    $region17: #{neural_network_forward.1} parent=1 // pred_fallthru
      _
    // Predicated region
    $region18: #{neural_network_forward.1} parent=1 // pred_check
      _
    $region19: #{neural_network_forward.1} parent=1 // pred_check_branch
      %48 = sbr.rel (0) target = $region21
    $region20: #{neural_network_forward.1} parent=1 // pred_region
      _
    $region21: #{neural_network_forward.1} parent=1 // pred_fallthru
      _
    // Predicated region
    $region22: #{neural_network_forward.1} parent=1 // pred_check
      _
    $region23: #{neural_network_forward.1} parent=1 // pred_check_branch
      %50 = sbr.rel (0) target = $region25
    $region24: #{neural_network_forward.1} parent=1 // pred_region
      %s52 = ssub.s32 12288, 12288
      %53 = vsyncadd [#allocation5], %s52
      %s54 = sshll.u32 [#allocation6], 4
      %s55 = int_to_ptr.vmem [resolvable:$true] %s54
      %60 = dma.hbm_to_vmem [thread:$0]  %s5, 12288, %s55, [#allocation5], 192, 192, 12
    $region25: #{neural_network_forward.1} parent=1 // pred_fallthru
      _
    // Predicated region
    $region26: #{neural_network_forward.1} parent=1 // pred_check
      _
    $region27: #{neural_network_forward.1} parent=1 // pred_check_branch
      %62 = sbr.rel (0) target = $region29
    $region28: #{neural_network_forward.1} parent=1 // pred_region
      _
    $region29: #{neural_network_forward.1} parent=1 // pred_fallthru
      _
    // Predicated region
    $region30: #{neural_network_forward.1} parent=1 // pred_check
      _
    $region31: #{neural_network_forward.1} parent=1 // pred_check_branch
      %64 = sbr.rel (0) target = $region33
    $region32: #{neural_network_forward.1} parent=1 // pred_region
      %s66 = ssub.s32 3072, 3072
      %67 = vsyncadd [#allocation8], %s66
      %s68 = sshll.u32 [#allocation7], 4
      %s69 = int_to_ptr.vmem [resolvable:$true] %s68
      %74 = dma.hbm_to_vmem [thread:$0]  %s7, 3072, %s69, [#allocation8], 64, 64, 4
    $region33: #{neural_network_forward.1} parent=1 // pred_fallthru
      _
    // Predicated region
    $region34: #{neural_network_forward.1} parent=1 // pred_check
      _
    $region35: #{neural_network_forward.1} parent=1 // pred_check_branch
      %76 = sbr.rel (0) target = $region37
    $region36: #{neural_network_forward.1} parent=1 // pred_region
      _
    $region37: #{neural_network_forward.1} parent=1 // pred_fallthru
      _
    // Predicated region
    $region38: #{neural_network_forward.1} parent=1 // pred_check
      _
    $region39: #{neural_network_forward.1} parent=1 // pred_check_branch
      %78 = sbr.rel (0) target = $region41
    $region40: #{neural_network_forward.1} parent=1 // pred_region
      _
    $region41: #{neural_network_forward.1} parent=1 // pred_fallthru
      _
    // Predicated region
    $region42: #{neural_network_forward.1} parent=1 // pred_check
      _
    $region43: #{neural_network_forward.1} parent=1 // pred_check_branch
      %80 = sbr.rel (0) target = $region45
    $region44: #{neural_network_forward.1} parent=1 // pred_region
      _
    $region45: #{neural_network_forward.1} parent=1 // pred_fallthru
      _
    // Predicated region
    $region46: #{neural_network_forward.1} parent=1 // pred_check
      _
    $region47: #{neural_network_forward.1} parent=1 // pred_check_branch
      %82 = sbr.rel (0) target = $region49
    $region48: #{neural_network_forward.1} parent=1 // pred_region
      %83 = dma.done [#allocation3], 8192
    $region49: #{neural_network_forward.1} parent=1 // pred_fallthru
      _
    // Predicated region
    $region50: #{neural_network_forward.1} parent=1 // pred_check
      _
    $region51: #{neural_network_forward.1} parent=1 // pred_check_branch
      %85 = sbr.rel (0) target = $region53
    $region52: #{neural_network_forward.1} parent=1 // pred_region
      %86 = dma.done [#allocation5], 32768
    $region53: #{neural_network_forward.1} parent=1 // pred_fallthru
      _
    // Predicated region
    $region54: #{neural_network_forward.1} parent=1 // pred_check
      _
    $region55: #{neural_network_forward.1} parent=1 // pred_check_branch
      %88 = sbr.rel (0) target = $region57
    $region56: #{neural_network_forward.1} parent=1 // pred_region
      %89 = dma.done [#allocation5], 12288
    $region57: #{neural_network_forward.1} parent=1 // pred_fallthru
      _
    // Predicated region
    $region58: #{neural_network_forward.1} parent=1 // pred_check
      _
    $region59: #{neural_network_forward.1} parent=1 // pred_check_branch
      %91 = sbr.rel (0) target = $region61
    $region60: #{neural_network_forward.1} parent=1 // pred_region
      %92 = dma.done [#allocation8], 3072
    $region61: #{neural_network_forward.1} parent=1 // pred_fallthru
      _
    %v94 = vld [vmem:[%s0] sm:$0xf]
    %v95 = vld [vmem:[%s0 + $0x4] sm:$0xf]
    %v96 = vld [vmem:[#allocation2] sm:$0xff]
    %v97 = vld [vmem:[#allocation2 + $0x8] sm:$0xff]
    %v98 = vld [vmem:[#allocation2 + $0x10] sm:$0xff]
    %v99 = vld [vmem:[#allocation2 + $0x18] sm:$0xff]
    %v100 = vld [vmem:[#allocation2 + $0x20] sm:$0xff]
    %v101 = vld [vmem:[#allocation2 + $0x28] sm:$0xff]
    %v102 = vld [vmem:[#allocation2 + $0x30] sm:$0xff]
    %v103 = vld [vmem:[#allocation2 + $0x38] sm:$0xff]
    %v104 = vld [vmem:[#allocation2 + $0x40] sm:$0xff]
    %v105 = vld [vmem:[#allocation2 + $0x48] sm:$0xff]
    %v106 = vld [vmem:[#allocation2 + $0x50] sm:$0xff]
    %v107 = vld [vmem:[#allocation2 + $0x58] sm:$0xff]
    %v108 = vld [vmem:[#allocation2 + $0x60] sm:$0xff]
    %v109 = vld [vmem:[#allocation2 + $0x68] sm:$0xff]
    %v110 = vld [vmem:[#allocation2 + $0x70] sm:$0xff]
    %v111 = vld [vmem:[#allocation2 + $0x78] sm:$0xff]
    %v112 = vld [vmem:[#allocation2 + $0x80] sm:$0xff]
    %v113 = vld [vmem:[#allocation2 + $0x88] sm:$0xff]
    %v114 = vld [vmem:[#allocation2 + $0x90] sm:$0xff]
    %v115 = vld [vmem:[#allocation2 + $0x98] sm:$0xff]
    %v116 = vld [vmem:[#allocation2 + $0xa0] sm:$0xff]
    %v117 = vld [vmem:[#allocation2 + $0xa8] sm:$0xff]
    %v118 = vld [vmem:[#allocation2 + $0xb0] sm:$0xff]
    %v119 = vld [vmem:[#allocation2 + $0xb8] sm:$0xff]
    %v120 = vld [vmem:[#allocation2 + $0xc0] sm:$0xff]
    %v121 = vld [vmem:[#allocation2 + $0xc8] sm:$0xff]
    %v122 = vld [vmem:[#allocation2 + $0xd0] sm:$0xff]
    %v123 = vld [vmem:[#allocation2 + $0xd8] sm:$0xff]
    %v124 = vld [vmem:[#allocation2 + $0xe0] sm:$0xff]
    %v125 = vld [vmem:[#allocation2 + $0xe8] sm:$0xff]
    %v126 = vld [vmem:[#allocation2 + $0xf0] sm:$0xff]
    %v127 = vld [vmem:[#allocation2 + $0xf8] sm:$0xff]
    %v128 = vld [vmem:[#allocation2 + $0x100] sm:$0xff]
    %v129 = vld [vmem:[#allocation2 + $0x108] sm:$0xff]
    %v130 = vld [vmem:[#allocation2 + $0x110] sm:$0xff]
    %v131 = vld [vmem:[#allocation2 + $0x118] sm:$0xff]
    %v132 = vld [vmem:[#allocation2 + $0x120] sm:$0xff]
    %v133 = vld [vmem:[#allocation2 + $0x128] sm:$0xff]
    %v134 = vld [vmem:[#allocation2 + $0x130] sm:$0xff]
    %v135 = vld [vmem:[#allocation2 + $0x138] sm:$0xff]
    %v136 = vld [vmem:[#allocation2 + $0x140] sm:$0xff]
    %v137 = vld [vmem:[#allocation2 + $0x148] sm:$0xff]
    %v138 = vld [vmem:[#allocation2 + $0x150] sm:$0xff]
    %v139 = vld [vmem:[#allocation2 + $0x158] sm:$0xff]
    %v140 = vld [vmem:[#allocation2 + $0x160] sm:$0xff]
    %v141 = vld [vmem:[#allocation2 + $0x168] sm:$0xff]
    %v142 = vld [vmem:[#allocation2 + $0x170] sm:$0xff]
    %v143 = vld [vmem:[#allocation2 + $0x178] sm:$0xff]
    %v144 = vld [vmem:[#allocation2 + $0x180] sm:$0xff]
    %v145 = vld [vmem:[#allocation2 + $0x188] sm:$0xff]
    %v146 = vld [vmem:[#allocation2 + $0x190] sm:$0xff]
    %v147 = vld [vmem:[#allocation2 + $0x198] sm:$0xff]
    %v148 = vld [vmem:[#allocation2 + $0x1a0] sm:$0xff]
    %v149 = vld [vmem:[#allocation2 + $0x1a8] sm:$0xff]
    %v150 = vld [vmem:[#allocation2 + $0x1b0] sm:$0xff]
    %v151 = vld [vmem:[#allocation2 + $0x1b8] sm:$0xff]
    %v152 = vld [vmem:[#allocation2 + $0x1c0] sm:$0xff]
    %v153 = vld [vmem:[#allocation2 + $0x1c8] sm:$0xff]
    %v154 = vld [vmem:[#allocation2 + $0x1d0] sm:$0xff]
    %v155 = vld [vmem:[#allocation2 + $0x1d8] sm:$0xff]
    %v156 = vld [vmem:[#allocation2 + $0x1e0] sm:$0xff]
    %v157 = vld [vmem:[#allocation2 + $0x1e8] sm:$0xff]
    %v158 = vld [vmem:[#allocation2 + $0x1f0] sm:$0xff]
    %v159 = vld [vmem:[#allocation2 + $0x1f8] sm:$0xff]
    %v160 = vld [vmem:[%s2] sm:$0xff]
    %v162 = vlaneseq
    %v163 = vshrl.u32 %v162, 7
    %v164 = vsub.s32 0, %v163
    %v165 = vrot.slane %v160, %v164
    %v166 = vlaneseq
    %v167 = vshrl.u32 %v166, 7
    %v168 = vsub.s32 1, %v167
    %v169 = vrot.slane %v160, %v168
    %v170 = vlaneseq
    %v171 = vshrl.u32 %v170, 7
    %v172 = vsub.s32 2, %v171
    %v173 = vrot.slane %v160, %v172
    %v174 = vlaneseq
    %v175 = vshrl.u32 %v174, 7
    %v176 = vsub.s32 3, %v175
    %v177 = vrot.slane %v160, %v176
    %v178 = vlaneseq
    %v179 = vshrl.u32 %v178, 7
    %v180 = vsub.s32 4, %v179
    %v181 = vrot.slane %v160, %v180
    %v182 = vlaneseq
    %v183 = vshrl.u32 %v182, 7
    %v184 = vsub.s32 5, %v183
    %v185 = vrot.slane %v160, %v184
    %v186 = vlaneseq
    %v187 = vshrl.u32 %v186, 7
    %v188 = vsub.s32 6, %v187
    %v189 = vrot.slane %v160, %v188
    %v190 = vlaneseq
    %v191 = vshrl.u32 %v190, 7
    %v192 = vsub.s32 7, %v191
    %v193 = vrot.slane %v160, %v192
    %v204 = vunpack.c.l.b16 %v94
    %v205 = vunpack.c.l.b16 %v95
    %v206 = vpack.c.b16 %v205, %v204
    %v272 = vunpack.c.l.b16 %v96
    %v273 = vunpack.c.h.b16 %v96
    %v274 = vunpack.c.l.b16 %v97
    %v275 = vunpack.c.h.b16 %v97
    %v276 = vunpack.c.l.b16 %v98
    %v277 = vunpack.c.h.b16 %v98
    %v278 = vunpack.c.l.b16 %v99
    %v279 = vunpack.c.h.b16 %v99
    %v280 = vunpack.c.l.b16 %v100
    %v281 = vunpack.c.h.b16 %v100
    %v282 = vunpack.c.l.b16 %v101
    %v283 = vunpack.c.h.b16 %v101
    %v284 = vunpack.c.l.b16 %v102
    %v285 = vunpack.c.h.b16 %v102
    %v286 = vunpack.c.l.b16 %v103
    %v287 = vunpack.c.h.b16 %v103
    %v288 = vunpack.c.l.b16 %v104
    %v289 = vunpack.c.h.b16 %v104
    %v290 = vunpack.c.l.b16 %v105
    %v291 = vunpack.c.h.b16 %v105
    %v292 = vunpack.c.l.b16 %v106
    %v293 = vunpack.c.h.b16 %v106
    %v294 = vunpack.c.l.b16 %v107
    %v295 = vunpack.c.h.b16 %v107
    %v296 = vunpack.c.l.b16 %v108
    %v297 = vunpack.c.h.b16 %v108
    %v298 = vunpack.c.l.b16 %v109
    %v299 = vunpack.c.h.b16 %v109
    %v300 = vunpack.c.l.b16 %v110
    %v301 = vunpack.c.h.b16 %v110
    %v302 = vunpack.c.l.b16 %v111
    %v303 = vunpack.c.h.b16 %v111
    %v304 = vunpack.c.l.b16 %v112
    %v305 = vunpack.c.h.b16 %v112
    %v306 = vunpack.c.l.b16 %v113
    %v307 = vunpack.c.h.b16 %v113
    %v308 = vunpack.c.l.b16 %v114
    %v309 = vunpack.c.h.b16 %v114
    %v310 = vunpack.c.l.b16 %v115
    %v311 = vunpack.c.h.b16 %v115
    %v312 = vunpack.c.l.b16 %v116
    %v313 = vunpack.c.h.b16 %v116
    %v314 = vunpack.c.l.b16 %v117
    %v315 = vunpack.c.h.b16 %v117
    %v316 = vunpack.c.l.b16 %v118
    %v317 = vunpack.c.h.b16 %v118
    %v318 = vunpack.c.l.b16 %v119
    %v319 = vunpack.c.h.b16 %v119
    %v320 = vunpack.c.l.b16 %v120
    %v321 = vunpack.c.h.b16 %v120
    %v322 = vunpack.c.l.b16 %v121
    %v323 = vunpack.c.h.b16 %v121
    %v324 = vunpack.c.l.b16 %v122
    %v325 = vunpack.c.h.b16 %v122
    %v326 = vunpack.c.l.b16 %v123
    %v327 = vunpack.c.h.b16 %v123
    %v328 = vunpack.c.l.b16 %v124
    %v329 = vunpack.c.h.b16 %v124
    %v330 = vunpack.c.l.b16 %v125
    %v331 = vunpack.c.h.b16 %v125
    %v332 = vunpack.c.l.b16 %v126
    %v333 = vunpack.c.h.b16 %v126
    %v334 = vunpack.c.l.b16 %v127
    %v335 = vunpack.c.h.b16 %v127
    %v336 = vunpack.c.l.b16 %v128
    %v337 = vunpack.c.h.b16 %v128
    %v338 = vunpack.c.l.b16 %v129
    %v339 = vunpack.c.h.b16 %v129
    %v340 = vunpack.c.l.b16 %v130
    %v341 = vunpack.c.h.b16 %v130
    %v342 = vunpack.c.l.b16 %v131
    %v343 = vunpack.c.h.b16 %v131
    %v344 = vunpack.c.l.b16 %v132
    %v345 = vunpack.c.h.b16 %v132
    %v346 = vunpack.c.l.b16 %v133
    %v347 = vunpack.c.h.b16 %v133
    %v348 = vunpack.c.l.b16 %v134
    %v349 = vunpack.c.h.b16 %v134
    %v350 = vunpack.c.l.b16 %v135
    %v351 = vunpack.c.h.b16 %v135
    %v352 = vunpack.c.l.b16 %v136
    %v353 = vunpack.c.h.b16 %v136
    %v354 = vunpack.c.l.b16 %v137
    %v355 = vunpack.c.h.b16 %v137
    %v356 = vunpack.c.l.b16 %v138
    %v357 = vunpack.c.h.b16 %v138
    %v358 = vunpack.c.l.b16 %v139
    %v359 = vunpack.c.h.b16 %v139
    %v360 = vunpack.c.l.b16 %v140
    %v361 = vunpack.c.h.b16 %v140
    %v362 = vunpack.c.l.b16 %v141
    %v363 = vunpack.c.h.b16 %v141
    %v364 = vunpack.c.l.b16 %v142
    %v365 = vunpack.c.h.b16 %v142
    %v366 = vunpack.c.l.b16 %v143
    %v367 = vunpack.c.h.b16 %v143
    %v368 = vunpack.c.l.b16 %v144
    %v369 = vunpack.c.h.b16 %v144
    %v370 = vunpack.c.l.b16 %v145
    %v371 = vunpack.c.h.b16 %v145
    %v372 = vunpack.c.l.b16 %v146
    %v373 = vunpack.c.h.b16 %v146
    %v374 = vunpack.c.l.b16 %v147
    %v375 = vunpack.c.h.b16 %v147
    %v376 = vunpack.c.l.b16 %v148
    %v377 = vunpack.c.h.b16 %v148
    %v378 = vunpack.c.l.b16 %v149
    %v379 = vunpack.c.h.b16 %v149
    %v380 = vunpack.c.l.b16 %v150
    %v381 = vunpack.c.h.b16 %v150
    %v382 = vunpack.c.l.b16 %v151
    %v383 = vunpack.c.h.b16 %v151
    %v384 = vunpack.c.l.b16 %v152
    %v385 = vunpack.c.h.b16 %v152
    %v386 = vunpack.c.l.b16 %v153
    %v387 = vunpack.c.h.b16 %v153
    %v388 = vunpack.c.l.b16 %v154
    %v389 = vunpack.c.h.b16 %v154
    %v390 = vunpack.c.l.b16 %v155
    %v391 = vunpack.c.h.b16 %v155
    %v392 = vunpack.c.l.b16 %v156
    %v393 = vunpack.c.h.b16 %v156
    %v394 = vunpack.c.l.b16 %v157
    %v395 = vunpack.c.h.b16 %v157
    %v396 = vunpack.c.l.b16 %v158
    %v397 = vunpack.c.h.b16 %v158
    %v398 = vunpack.c.l.b16 %v159
    %v399 = vunpack.c.h.b16 %v159
    %v400 = vpack.c.b16 %v280, %v272
    %v401 = vpack.c.b16 %v281, %v273
    %v402 = vpack.c.b16 %v282, %v274
    %v403 = vpack.c.b16 %v283, %v275
    %v404 = vpack.c.b16 %v284, %v276
    %v405 = vpack.c.b16 %v285, %v277
    %v406 = vpack.c.b16 %v286, %v278
    %v407 = vpack.c.b16 %v287, %v279
    %v408 = vpack.c.b16 %v296, %v288
    %v409 = vpack.c.b16 %v297, %v289
    %v410 = vpack.c.b16 %v298, %v290
    %v411 = vpack.c.b16 %v299, %v291
    %v412 = vpack.c.b16 %v300, %v292
    %v413 = vpack.c.b16 %v301, %v293
    %v414 = vpack.c.b16 %v302, %v294
    %v415 = vpack.c.b16 %v303, %v295
    %v416 = vpack.c.b16 %v312, %v304
    %v417 = vpack.c.b16 %v313, %v305
    %v418 = vpack.c.b16 %v314, %v306
    %v419 = vpack.c.b16 %v315, %v307
    %v420 = vpack.c.b16 %v316, %v308
    %v421 = vpack.c.b16 %v317, %v309
    %v422 = vpack.c.b16 %v318, %v310
    %v423 = vpack.c.b16 %v319, %v311
    %v424 = vpack.c.b16 %v328, %v320
    %v425 = vpack.c.b16 %v329, %v321
    %v426 = vpack.c.b16 %v330, %v322
    %v427 = vpack.c.b16 %v331, %v323
    %v428 = vpack.c.b16 %v332, %v324
    %v429 = vpack.c.b16 %v333, %v325
    %v430 = vpack.c.b16 %v334, %v326
    %v431 = vpack.c.b16 %v335, %v327
    %v432 = vpack.c.b16 %v344, %v336
    %v433 = vpack.c.b16 %v345, %v337
    %v434 = vpack.c.b16 %v346, %v338
    %v435 = vpack.c.b16 %v347, %v339
    %v436 = vpack.c.b16 %v348, %v340
    %v437 = vpack.c.b16 %v349, %v341
    %v438 = vpack.c.b16 %v350, %v342
    %v439 = vpack.c.b16 %v351, %v343
    %v440 = vpack.c.b16 %v360, %v352
    %v441 = vpack.c.b16 %v361, %v353
    %v442 = vpack.c.b16 %v362, %v354
    %v443 = vpack.c.b16 %v363, %v355
    %v444 = vpack.c.b16 %v364, %v356
    %v445 = vpack.c.b16 %v365, %v357
    %v446 = vpack.c.b16 %v366, %v358
    %v447 = vpack.c.b16 %v367, %v359
    %v448 = vpack.c.b16 %v376, %v368
    %v449 = vpack.c.b16 %v377, %v369
    %v450 = vpack.c.b16 %v378, %v370
    %v451 = vpack.c.b16 %v379, %v371
    %v452 = vpack.c.b16 %v380, %v372
    %v453 = vpack.c.b16 %v381, %v373
    %v454 = vpack.c.b16 %v382, %v374
    %v455 = vpack.c.b16 %v383, %v375
    %v456 = vpack.c.b16 %v392, %v384
    %v457 = vpack.c.b16 %v393, %v385
    %v458 = vpack.c.b16 %v394, %v386
    %v459 = vpack.c.b16 %v395, %v387
    %v460 = vpack.c.b16 %v396, %v388
    %v461 = vpack.c.b16 %v397, %v389
    %v462 = vpack.c.b16 %v398, %v390
    %v463 = vpack.c.b16 %v399, %v391
    %528 = vmatprep.subr.bf16.mxu0 %v457
    %529 = vmatpush1.bf16.msra.mxu0 %v456
    %530 = vmatprep.subr.bf16.mxu0 %v449
    %531 = vmatpush1.bf16.msra.mxu0 %v448
    %532 = vmatprep.subr.bf16.mxu0 %v441
    %533 = vmatpush1.bf16.msra.mxu0 %v440
    %534 = vmatprep.subr.bf16.mxu0 %v433
    %535 = vmatpush1.bf16.msra.mxu0 %v432
    %536 = vmatprep.subr.bf16.mxu0 %v425
    %537 = vmatpush1.bf16.msra.mxu0 %v424
    %538 = vmatprep.subr.bf16.mxu0 %v417
    %539 = vmatpush1.bf16.msra.mxu0 %v416
    %540 = vmatprep.subr.bf16.mxu0 %v409
    %541 = vmatpush1.bf16.msra.mxu0 %v408
    %542 = vmatprep.subr.bf16.mxu0 %v401
    %543 = vmatpush1.bf16.msra.mxu0 %v400
    %544 = vmatprep.subr.bf16.mxu0 0
    %545 = vmatpush2.bf16.msra.mxu0 0
    %546 = vmatprep.subr.bf16.mxu0 0
    %547 = vmatpush2.bf16.msra.mxu0 0
    %548 = vmatprep.subr.bf16.mxu0 0
    %549 = vmatpush2.bf16.msra.mxu0 0
    %550 = vmatprep.subr.bf16.mxu0 0
    %551 = vmatpush2.bf16.msra.mxu0 0
    %552 = vmatprep.subr.bf16.mxu0 0
    %553 = vmatpush2.bf16.msra.mxu0 0
    %554 = vmatprep.subr.bf16.mxu0 0
    %555 = vmatpush2.bf16.msra.mxu0 0
    %556 = vmatprep.subr.bf16.mxu0 0
    %557 = vmatpush2.bf16.msra.mxu0 0
    %558 = vmatprep.subr.bf16.mxu0 0
    %559 = vmatpush2.bf16.msra.mxu0 0
    %560 = vmatprep.mubr.bf16.mxu0 0
    %561 = vmatmul.mubr.bf16.gmra.mxu0 %v206
    %v562 = vpop.f32.mrf.mxu0
    %v563 = vadd.f32 %v165, %v562
    %v564 = vpop.f32.mrf.mxu0
    %v565 = vadd.f32 %v169, %v564
    %v566 = vpop.f32.mrf.mxu0
    %v567 = vadd.f32 %v165, %v566
    %v568 = vpop.f32.mrf.mxu0
    %v569 = vadd.f32 %v169, %v568
    %570 = vdwg.mxu0
    %571 = vmatprep.subr.bf16.mxu0 %v459
    %572 = vmatpush1.bf16.msra.mxu0 %v458
    %573 = vmatprep.subr.bf16.mxu0 %v451
    %574 = vmatpush1.bf16.msra.mxu0 %v450
    %575 = vmatprep.subr.bf16.mxu0 %v443
    %576 = vmatpush1.bf16.msra.mxu0 %v442
    %577 = vmatprep.subr.bf16.mxu0 %v435
    %578 = vmatpush1.bf16.msra.mxu0 %v434
    %579 = vmatprep.subr.bf16.mxu0 %v427
    %580 = vmatpush1.bf16.msra.mxu0 %v426
    %581 = vmatprep.subr.bf16.mxu0 %v419
    %582 = vmatpush1.bf16.msra.mxu0 %v418
    %583 = vmatprep.subr.bf16.mxu0 %v411
    %584 = vmatpush1.bf16.msra.mxu0 %v410
    %585 = vmatprep.subr.bf16.mxu0 %v403
    %586 = vmatpush1.bf16.msra.mxu0 %v402
    %587 = vmatprep.subr.bf16.mxu0 0
    %588 = vmatpush2.bf16.msra.mxu0 0
    %589 = vmatprep.subr.bf16.mxu0 0
    %590 = vmatpush2.bf16.msra.mxu0 0
    %591 = vmatprep.subr.bf16.mxu0 0
    %592 = vmatpush2.bf16.msra.mxu0 0
    %593 = vmatprep.subr.bf16.mxu0 0
    %594 = vmatpush2.bf16.msra.mxu0 0
    %595 = vmatprep.subr.bf16.mxu0 0
    %596 = vmatpush2.bf16.msra.mxu0 0
    %597 = vmatprep.subr.bf16.mxu0 0
    %598 = vmatpush2.bf16.msra.mxu0 0
    %599 = vmatprep.subr.bf16.mxu0 0
    %600 = vmatpush2.bf16.msra.mxu0 0
    %601 = vmatprep.subr.bf16.mxu0 0
    %602 = vmatpush2.bf16.msra.mxu0 0
    %603 = vmatprep.mubr.bf16.mxu0 0
    %604 = vmatmul.mubr.bf16.gmra.mxu0 %v206
    %v605 = vpop.f32.mrf.mxu0
    %v606 = vadd.f32 %v173, %v605
    %v607 = vpop.f32.mrf.mxu0
    %v608 = vadd.f32 %v177, %v607
    %v609 = vpop.f32.mrf.mxu0
    %v610 = vadd.f32 %v173, %v609
    %v611 = vpop.f32.mrf.mxu0
    %v612 = vadd.f32 %v177, %v611
    %613 = vdwg.mxu0
    %614 = vmatprep.subr.bf16.mxu0 %v461
    %615 = vmatpush1.bf16.msra.mxu0 %v460
    %616 = vmatprep.subr.bf16.mxu0 %v453
    %617 = vmatpush1.bf16.msra.mxu0 %v452
    %618 = vmatprep.subr.bf16.mxu0 %v445
    %619 = vmatpush1.bf16.msra.mxu0 %v444
    %620 = vmatprep.subr.bf16.mxu0 %v437
    %621 = vmatpush1.bf16.msra.mxu0 %v436
    %622 = vmatprep.subr.bf16.mxu0 %v429
    %623 = vmatpush1.bf16.msra.mxu0 %v428
    %624 = vmatprep.subr.bf16.mxu0 %v421
    %625 = vmatpush1.bf16.msra.mxu0 %v420
    %626 = vmatprep.subr.bf16.mxu0 %v413
    %627 = vmatpush1.bf16.msra.mxu0 %v412
    %628 = vmatprep.subr.bf16.mxu0 %v405
    %629 = vmatpush1.bf16.msra.mxu0 %v404
    %630 = vmatprep.subr.bf16.mxu0 0
    %631 = vmatpush2.bf16.msra.mxu0 0
    %632 = vmatprep.subr.bf16.mxu0 0
    %633 = vmatpush2.bf16.msra.mxu0 0
    %634 = vmatprep.subr.bf16.mxu0 0
    %635 = vmatpush2.bf16.msra.mxu0 0
    %636 = vmatprep.subr.bf16.mxu0 0
    %637 = vmatpush2.bf16.msra.mxu0 0
    %638 = vmatprep.subr.bf16.mxu0 0
    %639 = vmatpush2.bf16.msra.mxu0 0
    %640 = vmatprep.subr.bf16.mxu0 0
    %641 = vmatpush2.bf16.msra.mxu0 0
    %642 = vmatprep.subr.bf16.mxu0 0
    %643 = vmatpush2.bf16.msra.mxu0 0
    %644 = vmatprep.subr.bf16.mxu0 0
    %645 = vmatpush2.bf16.msra.mxu0 0
    %646 = vmatprep.mubr.bf16.mxu0 0
    %647 = vmatmul.mubr.bf16.gmra.mxu0 %v206
    %v648 = vpop.f32.mrf.mxu0
    %v649 = vadd.f32 %v181, %v648
    %v650 = vpop.f32.mrf.mxu0
    %v651 = vadd.f32 %v185, %v650
    %v652 = vpop.f32.mrf.mxu0
    %v653 = vadd.f32 %v181, %v652
    %v654 = vpop.f32.mrf.mxu0
    %v655 = vadd.f32 %v185, %v654
    %656 = vdwg.mxu0
    %657 = vmatprep.subr.bf16.mxu0 %v463
    %658 = vmatpush1.bf16.msra.mxu0 %v462
    %659 = vmatprep.subr.bf16.mxu0 %v455
    %660 = vmatpush1.bf16.msra.mxu0 %v454
    %661 = vmatprep.subr.bf16.mxu0 %v447
    %662 = vmatpush1.bf16.msra.mxu0 %v446
    %663 = vmatprep.subr.bf16.mxu0 %v439
    %664 = vmatpush1.bf16.msra.mxu0 %v438
    %665 = vmatprep.subr.bf16.mxu0 %v431
    %666 = vmatpush1.bf16.msra.mxu0 %v430
    %667 = vmatprep.subr.bf16.mxu0 %v423
    %668 = vmatpush1.bf16.msra.mxu0 %v422
    %669 = vmatprep.subr.bf16.mxu0 %v415
    %670 = vmatpush1.bf16.msra.mxu0 %v414
    %671 = vmatprep.subr.bf16.mxu0 %v407
    %672 = vmatpush1.bf16.msra.mxu0 %v406
    %673 = vmatprep.subr.bf16.mxu0 0
    %674 = vmatpush2.bf16.msra.mxu0 0
    %675 = vmatprep.subr.bf16.mxu0 0
    %676 = vmatpush2.bf16.msra.mxu0 0
    %677 = vmatprep.subr.bf16.mxu0 0
    %678 = vmatpush2.bf16.msra.mxu0 0
    %679 = vmatprep.subr.bf16.mxu0 0
    %680 = vmatpush2.bf16.msra.mxu0 0
    %681 = vmatprep.subr.bf16.mxu0 0
    %682 = vmatpush2.bf16.msra.mxu0 0
    %683 = vmatprep.subr.bf16.mxu0 0
    %684 = vmatpush2.bf16.msra.mxu0 0
    %685 = vmatprep.subr.bf16.mxu0 0
    %686 = vmatpush2.bf16.msra.mxu0 0
    %687 = vmatprep.subr.bf16.mxu0 0
    %688 = vmatpush2.bf16.msra.mxu0 0
    %689 = vmatprep.mubr.bf16.mxu0 0
    %690 = vmatmul.mubr.bf16.gmra.mxu0 %v206
    %v691 = vpop.f32.mrf.mxu0
    %v692 = vadd.f32 %v189, %v691
    %v693 = vpop.f32.mrf.mxu0
    %v694 = vadd.f32 %v193, %v693
    %v695 = vpop.f32.mrf.mxu0
    %v696 = vadd.f32 %v189, %v695
    %v697 = vpop.f32.mrf.mxu0
    %v698 = vadd.f32 %v193, %v697
    %699 = vdwg.mxu0
    %vm700 = vcmp.ge.f32.partialorder %v563, 0.0
    %vm701 = vcmp.ge.f32.partialorder %v565, 0.0
    %vm702 = vcmp.ge.f32.partialorder %v606, 0.0
    %vm703 = vcmp.ge.f32.partialorder %v608, 0.0
    %vm704 = vcmp.ge.f32.partialorder %v649, 0.0
    %vm705 = vcmp.ge.f32.partialorder %v651, 0.0
    %vm706 = vcmp.ge.f32.partialorder %v692, 0.0
    %vm707 = vcmp.ge.f32.partialorder %v694, 0.0
    %vm708 = vcmp.ge.f32.partialorder %v567, 0.0
    %vm709 = vcmp.ge.f32.partialorder %v569, 0.0
    %vm710 = vcmp.ge.f32.partialorder %v610, 0.0
    %vm711 = vcmp.ge.f32.partialorder %v612, 0.0
    %vm712 = vcmp.ge.f32.partialorder %v653, 0.0
    %vm713 = vcmp.ge.f32.partialorder %v655, 0.0
    %vm714 = vcmp.ge.f32.partialorder %v696, 0.0
    %vm715 = vcmp.ge.f32.partialorder %v698, 0.0
    %v716 = vmul.f32 %v563, 0.01
    %v717 = vmul.f32 %v565, 0.01
    %v718 = vmul.f32 %v606, 0.01
    %v719 = vmul.f32 %v608, 0.01
    %v720 = vmul.f32 %v649, 0.01
    %v721 = vmul.f32 %v651, 0.01
    %v722 = vmul.f32 %v692, 0.01
    %v723 = vmul.f32 %v694, 0.01
    %v724 = vmul.f32 %v567, 0.01
    %v725 = vmul.f32 %v569, 0.01
    %v726 = vmul.f32 %v610, 0.01
    %v727 = vmul.f32 %v612, 0.01
    %v728 = vmul.f32 %v653, 0.01
    %v729 = vmul.f32 %v655, 0.01
    %v730 = vmul.f32 %v696, 0.01
    %v731 = vmul.f32 %v698, 0.01
    %v732 = vsel %vm700, %v563, %v716
    %v733 = vsel %vm701, %v565, %v717
    %v734 = vsel %vm702, %v606, %v718
    %v735 = vsel %vm703, %v608, %v719
    %v736 = vsel %vm704, %v649, %v720
    %v737 = vsel %vm705, %v651, %v721
    %v738 = vsel %vm706, %v692, %v722
    %v739 = vsel %vm707, %v694, %v723
    %v740 = vsel %vm708, %v567, %v724
    %v741 = vsel %vm709, %v569, %v725
    %v742 = vsel %vm710, %v610, %v726
    %v743 = vsel %vm711, %v612, %v727
    %v744 = vsel %vm712, %v653, %v728
    %v745 = vsel %vm713, %v655, %v729
    %v746 = vsel %vm714, %v696, %v730
    %v747 = vsel %vm715, %v698, %v731
    %v748 = vpack.c.bf16 %v740, %v732
    %v749 = vpack.c.bf16 %v741, %v733
    %v750 = vpack.c.bf16 %v742, %v734
    %v751 = vpack.c.bf16 %v743, %v735
    %v752 = vpack.c.bf16 %v744, %v736
    %v753 = vpack.c.bf16 %v745, %v737
    %v754 = vpack.c.bf16 %v746, %v738
    %v755 = vpack.c.bf16 %v747, %v739
    %v756 = vld [vmem:[#allocation4] sm:$0xff]
    %v757 = vld [vmem:[#allocation4 + $0x8] sm:$0xff]
    %v758 = vld [vmem:[#allocation4 + $0x10] sm:$0xff]
    %v759 = vld [vmem:[#allocation4 + $0x18] sm:$0xff]
    %v760 = vld [vmem:[#allocation4 + $0x20] sm:$0xff]
    %v761 = vld [vmem:[#allocation4 + $0x28] sm:$0xff]
    %v762 = vld [vmem:[#allocation4 + $0x30] sm:$0xff]
    %v763 = vld [vmem:[#allocation4 + $0x38] sm:$0xff]
    %v764 = vld [vmem:[#allocation4 + $0x40] sm:$0xff]
    %v765 = vld [vmem:[#allocation4 + $0x48] sm:$0xff]
    %v766 = vld [vmem:[#allocation4 + $0x50] sm:$0xff]
    %v767 = vld [vmem:[#allocation4 + $0x58] sm:$0xff]
    %v768 = vld [vmem:[#allocation4 + $0x60] sm:$0xff]
    %v769 = vld [vmem:[#allocation4 + $0x68] sm:$0xff]
    %v770 = vld [vmem:[#allocation4 + $0x70] sm:$0xff]
    %v771 = vld [vmem:[#allocation4 + $0x78] sm:$0xff]
    %v772 = vld [vmem:[#allocation4 + $0x80] sm:$0xff]
    %v773 = vld [vmem:[#allocation4 + $0x88] sm:$0xff]
    %v774 = vld [vmem:[#allocation4 + $0x90] sm:$0xff]
    %v775 = vld [vmem:[#allocation4 + $0x98] sm:$0xff]
    %v776 = vld [vmem:[#allocation4 + $0xa0] sm:$0xff]
    %v777 = vld [vmem:[#allocation4 + $0xa8] sm:$0xff]
    %v778 = vld [vmem:[#allocation4 + $0xb0] sm:$0xff]
    %v779 = vld [vmem:[#allocation4 + $0xb8] sm:$0xff]
    %v780 = vld [vmem:[#allocation4 + $0xc0] sm:$0xff]
    %v781 = vld [vmem:[#allocation4 + $0xc8] sm:$0xff]
    %v782 = vld [vmem:[#allocation4 + $0xd0] sm:$0xff]
    %v783 = vld [vmem:[#allocation4 + $0xd8] sm:$0xff]
    %v784 = vld [vmem:[#allocation4 + $0xe0] sm:$0xff]
    %v785 = vld [vmem:[#allocation4 + $0xe8] sm:$0xff]
    %v786 = vld [vmem:[#allocation4 + $0xf0] sm:$0xff]
    %v787 = vld [vmem:[#allocation4 + $0xf8] sm:$0xff]
    %v788 = vld [vmem:[#allocation4 + $0x100] sm:$0xff]
    %v789 = vld [vmem:[#allocation4 + $0x108] sm:$0xff]
    %v790 = vld [vmem:[#allocation4 + $0x110] sm:$0xff]
    %v791 = vld [vmem:[#allocation4 + $0x118] sm:$0xff]
    %v792 = vld [vmem:[#allocation4 + $0x120] sm:$0xff]
    %v793 = vld [vmem:[#allocation4 + $0x128] sm:$0xff]
    %v794 = vld [vmem:[#allocation4 + $0x130] sm:$0xff]
    %v795 = vld [vmem:[#allocation4 + $0x138] sm:$0xff]
    %v796 = vld [vmem:[#allocation4 + $0x140] sm:$0xff]
    %v797 = vld [vmem:[#allocation4 + $0x148] sm:$0xff]
    %v798 = vld [vmem:[#allocation4 + $0x150] sm:$0xff]
    %v799 = vld [vmem:[#allocation4 + $0x158] sm:$0xff]
    %v800 = vld [vmem:[#allocation4 + $0x160] sm:$0xff]
    %v801 = vld [vmem:[#allocation4 + $0x168] sm:$0xff]
    %v802 = vld [vmem:[#allocation4 + $0x170] sm:$0xff]
    %v803 = vld [vmem:[#allocation4 + $0x178] sm:$0xff]
    %v804 = vld [vmem:[#allocation4 + $0x180] sm:$0xff]
    %v805 = vld [vmem:[#allocation4 + $0x188] sm:$0xff]
    %v806 = vld [vmem:[#allocation4 + $0x190] sm:$0xff]
    %v807 = vld [vmem:[#allocation4 + $0x198] sm:$0xff]
    %v808 = vld [vmem:[#allocation4 + $0x1a0] sm:$0xff]
    %v809 = vld [vmem:[#allocation4 + $0x1a8] sm:$0xff]
    %v810 = vld [vmem:[#allocation4 + $0x1b0] sm:$0xff]
    %v811 = vld [vmem:[#allocation4 + $0x1b8] sm:$0xff]
    %v812 = vld [vmem:[#allocation4 + $0x1c0] sm:$0xff]
    %v813 = vld [vmem:[#allocation4 + $0x1c8] sm:$0xff]
    %v814 = vld [vmem:[#allocation4 + $0x1d0] sm:$0xff]
    %v815 = vld [vmem:[#allocation4 + $0x1d8] sm:$0xff]
    %v816 = vld [vmem:[#allocation4 + $0x1e0] sm:$0xff]
    %v817 = vld [vmem:[#allocation4 + $0x1e8] sm:$0xff]
    %v818 = vld [vmem:[#allocation4 + $0x1f0] sm:$0xff]
    %v819 = vld [vmem:[#allocation4 + $0x1f8] sm:$0xff]
    %v820 = vld [vmem:[#allocation4 + $0x200] sm:$0xff]
    %v821 = vld [vmem:[#allocation4 + $0x208] sm:$0xff]
    %v822 = vld [vmem:[#allocation4 + $0x210] sm:$0xff]
    %v823 = vld [vmem:[#allocation4 + $0x218] sm:$0xff]
    %v824 = vld [vmem:[#allocation4 + $0x220] sm:$0xff]
    %v825 = vld [vmem:[#allocation4 + $0x228] sm:$0xff]
    %v826 = vld [vmem:[#allocation4 + $0x230] sm:$0xff]
    %v827 = vld [vmem:[#allocation4 + $0x238] sm:$0xff]
    %v828 = vld [vmem:[#allocation4 + $0x240] sm:$0xff]
    %v829 = vld [vmem:[#allocation4 + $0x248] sm:$0xff]
    %v830 = vld [vmem:[#allocation4 + $0x250] sm:$0xff]
    %v831 = vld [vmem:[#allocation4 + $0x258] sm:$0xff]
    %v832 = vld [vmem:[#allocation4 + $0x260] sm:$0xff]
    %v833 = vld [vmem:[#allocation4 + $0x268] sm:$0xff]
    %v834 = vld [vmem:[#allocation4 + $0x270] sm:$0xff]
    %v835 = vld [vmem:[#allocation4 + $0x278] sm:$0xff]
    %v836 = vld [vmem:[#allocation4 + $0x280] sm:$0xff]
    %v837 = vld [vmem:[#allocation4 + $0x288] sm:$0xff]
    %v838 = vld [vmem:[#allocation4 + $0x290] sm:$0xff]
    %v839 = vld [vmem:[#allocation4 + $0x298] sm:$0xff]
    %v840 = vld [vmem:[#allocation4 + $0x2a0] sm:$0xff]
    %v841 = vld [vmem:[#allocation4 + $0x2a8] sm:$0xff]
    %v842 = vld [vmem:[#allocation4 + $0x2b0] sm:$0xff]
    %v843 = vld [vmem:[#allocation4 + $0x2b8] sm:$0xff]
    %v844 = vld [vmem:[#allocation4 + $0x2c0] sm:$0xff]
    %v845 = vld [vmem:[#allocation4 + $0x2c8] sm:$0xff]
    %v846 = vld [vmem:[#allocation4 + $0x2d0] sm:$0xff]
    %v847 = vld [vmem:[#allocation4 + $0x2d8] sm:$0xff]
    %v848 = vld [vmem:[#allocation4 + $0x2e0] sm:$0xff]
    %v849 = vld [vmem:[#allocation4 + $0x2e8] sm:$0xff]
    %v850 = vld [vmem:[#allocation4 + $0x2f0] sm:$0xff]
    %v851 = vld [vmem:[#allocation4 + $0x2f8] sm:$0xff]
    %v852 = vld [vmem:[#allocation4 + $0x300] sm:$0xff]
    %v853 = vld [vmem:[#allocation4 + $0x308] sm:$0xff]
    %v854 = vld [vmem:[#allocation4 + $0x310] sm:$0xff]
    %v855 = vld [vmem:[#allocation4 + $0x318] sm:$0xff]
    %v856 = vld [vmem:[#allocation4 + $0x320] sm:$0xff]
    %v857 = vld [vmem:[#allocation4 + $0x328] sm:$0xff]
    %v858 = vld [vmem:[#allocation4 + $0x330] sm:$0xff]
    %v859 = vld [vmem:[#allocation4 + $0x338] sm:$0xff]
    %v860 = vld [vmem:[#allocation4 + $0x340] sm:$0xff]
    %v861 = vld [vmem:[#allocation4 + $0x348] sm:$0xff]
    %v862 = vld [vmem:[#allocation4 + $0x350] sm:$0xff]
    %v863 = vld [vmem:[#allocation4 + $0x358] sm:$0xff]
    %v864 = vld [vmem:[#allocation4 + $0x360] sm:$0xff]
    %v865 = vld [vmem:[#allocation4 + $0x368] sm:$0xff]
    %v866 = vld [vmem:[#allocation4 + $0x370] sm:$0xff]
    %v867 = vld [vmem:[#allocation4 + $0x378] sm:$0xff]
    %v868 = vld [vmem:[#allocation4 + $0x380] sm:$0xff]
    %v869 = vld [vmem:[#allocation4 + $0x388] sm:$0xff]
    %v870 = vld [vmem:[#allocation4 + $0x390] sm:$0xff]
    %v871 = vld [vmem:[#allocation4 + $0x398] sm:$0xff]
    %v872 = vld [vmem:[#allocation4 + $0x3a0] sm:$0xff]
    %v873 = vld [vmem:[#allocation4 + $0x3a8] sm:$0xff]
    %v874 = vld [vmem:[#allocation4 + $0x3b0] sm:$0xff]
    %v875 = vld [vmem:[#allocation4 + $0x3b8] sm:$0xff]
    %v876 = vld [vmem:[#allocation4 + $0x3c0] sm:$0xff]
    %v877 = vld [vmem:[#allocation4 + $0x3c8] sm:$0xff]
    %v878 = vld [vmem:[#allocation4 + $0x3d0] sm:$0xff]
    %v879 = vld [vmem:[#allocation4 + $0x3d8] sm:$0xff]
    %v880 = vld [vmem:[#allocation4 + $0x3e0] sm:$0xff]
    %v881 = vld [vmem:[#allocation4 + $0x3e8] sm:$0xff]
    %v882 = vld [vmem:[#allocation4 + $0x3f0] sm:$0xff]
    %v883 = vld [vmem:[#allocation4 + $0x3f8] sm:$0xff]
    %v884 = vld [vmem:[#allocation4 + $0x400] sm:$0xff]
    %v885 = vld [vmem:[#allocation4 + $0x408] sm:$0xff]
    %v886 = vld [vmem:[#allocation4 + $0x410] sm:$0xff]
    %v887 = vld [vmem:[#allocation4 + $0x418] sm:$0xff]
    %v888 = vld [vmem:[#allocation4 + $0x420] sm:$0xff]
    %v889 = vld [vmem:[#allocation4 + $0x428] sm:$0xff]
    %v890 = vld [vmem:[#allocation4 + $0x430] sm:$0xff]
    %v891 = vld [vmem:[#allocation4 + $0x438] sm:$0xff]
    %v892 = vld [vmem:[#allocation4 + $0x440] sm:$0xff]
    %v893 = vld [vmem:[#allocation4 + $0x448] sm:$0xff]
    %v894 = vld [vmem:[#allocation4 + $0x450] sm:$0xff]
    %v895 = vld [vmem:[#allocation4 + $0x458] sm:$0xff]
    %v896 = vld [vmem:[#allocation4 + $0x460] sm:$0xff]
    %v897 = vld [vmem:[#allocation4 + $0x468] sm:$0xff]
    %v898 = vld [vmem:[#allocation4 + $0x470] sm:$0xff]
    %v899 = vld [vmem:[#allocation4 + $0x478] sm:$0xff]
    %v900 = vld [vmem:[#allocation4 + $0x480] sm:$0xff]
    %v901 = vld [vmem:[#allocation4 + $0x488] sm:$0xff]
    %v902 = vld [vmem:[#allocation4 + $0x490] sm:$0xff]
    %v903 = vld [vmem:[#allocation4 + $0x498] sm:$0xff]
    %v904 = vld [vmem:[#allocation4 + $0x4a0] sm:$0xff]
    %v905 = vld [vmem:[#allocation4 + $0x4a8] sm:$0xff]
    %v906 = vld [vmem:[#allocation4 + $0x4b0] sm:$0xff]
    %v907 = vld [vmem:[#allocation4 + $0x4b8] sm:$0xff]
    %v908 = vld [vmem:[#allocation4 + $0x4c0] sm:$0xff]
    %v909 = vld [vmem:[#allocation4 + $0x4c8] sm:$0xff]
    %v910 = vld [vmem:[#allocation4 + $0x4d0] sm:$0xff]
    %v911 = vld [vmem:[#allocation4 + $0x4d8] sm:$0xff]
    %v912 = vld [vmem:[#allocation4 + $0x4e0] sm:$0xff]
    %v913 = vld [vmem:[#allocation4 + $0x4e8] sm:$0xff]
    %v914 = vld [vmem:[#allocation4 + $0x4f0] sm:$0xff]
    %v915 = vld [vmem:[#allocation4 + $0x4f8] sm:$0xff]
    %v916 = vld [vmem:[#allocation4 + $0x500] sm:$0xff]
    %v917 = vld [vmem:[#allocation4 + $0x508] sm:$0xff]
    %v918 = vld [vmem:[#allocation4 + $0x510] sm:$0xff]
    %v919 = vld [vmem:[#allocation4 + $0x518] sm:$0xff]
    %v920 = vld [vmem:[#allocation4 + $0x520] sm:$0xff]
    %v921 = vld [vmem:[#allocation4 + $0x528] sm:$0xff]
    %v922 = vld [vmem:[#allocation4 + $0x530] sm:$0xff]
    %v923 = vld [vmem:[#allocation4 + $0x538] sm:$0xff]
    %v924 = vld [vmem:[#allocation4 + $0x540] sm:$0xff]
    %v925 = vld [vmem:[#allocation4 + $0x548] sm:$0xff]
    %v926 = vld [vmem:[#allocation4 + $0x550] sm:$0xff]
    %v927 = vld [vmem:[#allocation4 + $0x558] sm:$0xff]
    %v928 = vld [vmem:[#allocation4 + $0x560] sm:$0xff]
    %v929 = vld [vmem:[#allocation4 + $0x568] sm:$0xff]
    %v930 = vld [vmem:[#allocation4 + $0x570] sm:$0xff]
    %v931 = vld [vmem:[#allocation4 + $0x578] sm:$0xff]
    %v932 = vld [vmem:[#allocation4 + $0x580] sm:$0xff]
    %v933 = vld [vmem:[#allocation4 + $0x588] sm:$0xff]
    %v934 = vld [vmem:[#allocation4 + $0x590] sm:$0xff]
    %v935 = vld [vmem:[#allocation4 + $0x598] sm:$0xff]
    %v936 = vld [vmem:[#allocation4 + $0x5a0] sm:$0xff]
    %v937 = vld [vmem:[#allocation4 + $0x5a8] sm:$0xff]
    %v938 = vld [vmem:[#allocation4 + $0x5b0] sm:$0xff]
    %v939 = vld [vmem:[#allocation4 + $0x5b8] sm:$0xff]
    %v940 = vld [vmem:[#allocation4 + $0x5c0] sm:$0xff]
    %v941 = vld [vmem:[#allocation4 + $0x5c8] sm:$0xff]
    %v942 = vld [vmem:[#allocation4 + $0x5d0] sm:$0xff]
    %v943 = vld [vmem:[#allocation4 + $0x5d8] sm:$0xff]
    %v944 = vld [vmem:[#allocation4 + $0x5e0] sm:$0xff]
    %v945 = vld [vmem:[#allocation4 + $0x5e8] sm:$0xff]
    %v946 = vld [vmem:[#allocation4 + $0x5f0] sm:$0xff]
    %v947 = vld [vmem:[#allocation4 + $0x5f8] sm:$0xff]
    %v948 = vld [vmem:[#allocation4 + $0x600] sm:$0xff]
    %v949 = vld [vmem:[#allocation4 + $0x608] sm:$0xff]
    %v950 = vld [vmem:[#allocation4 + $0x610] sm:$0xff]
    %v951 = vld [vmem:[#allocation4 + $0x618] sm:$0xff]
    %v952 = vld [vmem:[#allocation4 + $0x620] sm:$0xff]
    %v953 = vld [vmem:[#allocation4 + $0x628] sm:$0xff]
    %v954 = vld [vmem:[#allocation4 + $0x630] sm:$0xff]
    %v955 = vld [vmem:[#allocation4 + $0x638] sm:$0xff]
    %v956 = vld [vmem:[#allocation4 + $0x640] sm:$0xff]
    %v957 = vld [vmem:[#allocation4 + $0x648] sm:$0xff]
    %v958 = vld [vmem:[#allocation4 + $0x650] sm:$0xff]
    %v959 = vld [vmem:[#allocation4 + $0x658] sm:$0xff]
    %v960 = vld [vmem:[#allocation4 + $0x660] sm:$0xff]
    %v961 = vld [vmem:[#allocation4 + $0x668] sm:$0xff]
    %v962 = vld [vmem:[#allocation4 + $0x670] sm:$0xff]
    %v963 = vld [vmem:[#allocation4 + $0x678] sm:$0xff]
    %v964 = vld [vmem:[#allocation4 + $0x680] sm:$0xff]
    %v965 = vld [vmem:[#allocation4 + $0x688] sm:$0xff]
    %v966 = vld [vmem:[#allocation4 + $0x690] sm:$0xff]
    %v967 = vld [vmem:[#allocation4 + $0x698] sm:$0xff]
    %v968 = vld [vmem:[#allocation4 + $0x6a0] sm:$0xff]
    %v969 = vld [vmem:[#allocation4 + $0x6a8] sm:$0xff]
    %v970 = vld [vmem:[#allocation4 + $0x6b0] sm:$0xff]
    %v971 = vld [vmem:[#allocation4 + $0x6b8] sm:$0xff]
    %v972 = vld [vmem:[#allocation4 + $0x6c0] sm:$0xff]
    %v973 = vld [vmem:[#allocation4 + $0x6c8] sm:$0xff]
    %v974 = vld [vmem:[#allocation4 + $0x6d0] sm:$0xff]
    %v975 = vld [vmem:[#allocation4 + $0x6d8] sm:$0xff]
    %v976 = vld [vmem:[#allocation4 + $0x6e0] sm:$0xff]
    %v977 = vld [vmem:[#allocation4 + $0x6e8] sm:$0xff]
    %v978 = vld [vmem:[#allocation4 + $0x6f0] sm:$0xff]
    %v979 = vld [vmem:[#allocation4 + $0x6f8] sm:$0xff]
    %v980 = vld [vmem:[#allocation4 + $0x700] sm:$0xff]
    %v981 = vld [vmem:[#allocation4 + $0x708] sm:$0xff]
    %v982 = vld [vmem:[#allocation4 + $0x710] sm:$0xff]
    %v983 = vld [vmem:[#allocation4 + $0x718] sm:$0xff]
    %v984 = vld [vmem:[#allocation4 + $0x720] sm:$0xff]
    %v985 = vld [vmem:[#allocation4 + $0x728] sm:$0xff]
    %v986 = vld [vmem:[#allocation4 + $0x730] sm:$0xff]
    %v987 = vld [vmem:[#allocation4 + $0x738] sm:$0xff]
    %v988 = vld [vmem:[#allocation4 + $0x740] sm:$0xff]
    %v989 = vld [vmem:[#allocation4 + $0x748] sm:$0xff]
    %v990 = vld [vmem:[#allocation4 + $0x750] sm:$0xff]
    %v991 = vld [vmem:[#allocation4 + $0x758] sm:$0xff]
    %v992 = vld [vmem:[#allocation4 + $0x760] sm:$0xff]
    %v993 = vld [vmem:[#allocation4 + $0x768] sm:$0xff]
    %v994 = vld [vmem:[#allocation4 + $0x770] sm:$0xff]
    %v995 = vld [vmem:[#allocation4 + $0x778] sm:$0xff]
    %v996 = vld [vmem:[#allocation4 + $0x780] sm:$0xff]
    %v997 = vld [vmem:[#allocation4 + $0x788] sm:$0xff]
    %v998 = vld [vmem:[#allocation4 + $0x790] sm:$0xff]
    %v999 = vld [vmem:[#allocation4 + $0x798] sm:$0xff]
    %v1000 = vld [vmem:[#allocation4 + $0x7a0] sm:$0xff]
    %v1001 = vld [vmem:[#allocation4 + $0x7a8] sm:$0xff]
    %v1002 = vld [vmem:[#allocation4 + $0x7b0] sm:$0xff]
    %v1003 = vld [vmem:[#allocation4 + $0x7b8] sm:$0xff]
    %v1004 = vld [vmem:[#allocation4 + $0x7c0] sm:$0xff]
    %v1005 = vld [vmem:[#allocation4 + $0x7c8] sm:$0xff]
    %v1006 = vld [vmem:[#allocation4 + $0x7d0] sm:$0xff]
    %v1007 = vld [vmem:[#allocation4 + $0x7d8] sm:$0xff]
    %v1008 = vld [vmem:[#allocation4 + $0x7e0] sm:$0xff]
    %v1009 = vld [vmem:[#allocation4 + $0x7e8] sm:$0xff]
    %v1010 = vld [vmem:[#allocation4 + $0x7f0] sm:$0xff]
    %v1011 = vld [vmem:[#allocation4 + $0x7f8] sm:$0xff]
    %v1012 = vld [vmem:[%s4] sm:$0xf]
    %v1014 = vlaneseq
    %v1015 = vshrl.u32 %v1014, 7
    %v1016 = vsub.s32 0, %v1015
    %v1017 = vrot.slane %v1012, %v1016
    %v1018 = vlaneseq
    %v1019 = vshrl.u32 %v1018, 7
    %v1020 = vsub.s32 1, %v1019
    %v1021 = vrot.slane %v1012, %v1020
    %v1022 = vlaneseq
    %v1023 = vshrl.u32 %v1022, 7
    %v1024 = vsub.s32 2, %v1023
    %v1025 = vrot.slane %v1012, %v1024
    %v1026 = vlaneseq
    %v1027 = vshrl.u32 %v1026, 7
    %v1028 = vsub.s32 3, %v1027
    %v1029 = vrot.slane %v1012, %v1028
    %v1290 = vunpack.c.l.b16 %v756
    %v1291 = vunpack.c.h.b16 %v756
    %v1292 = vunpack.c.l.b16 %v757
    %v1293 = vunpack.c.h.b16 %v757
    %v1294 = vunpack.c.l.b16 %v758
    %v1295 = vunpack.c.h.b16 %v758
    %v1296 = vunpack.c.l.b16 %v759
    %v1297 = vunpack.c.h.b16 %v759
    %v1298 = vunpack.c.l.b16 %v760
    %v1299 = vunpack.c.h.b16 %v760
    %v1300 = vunpack.c.l.b16 %v761
    %v1301 = vunpack.c.h.b16 %v761
    %v1302 = vunpack.c.l.b16 %v762
    %v1303 = vunpack.c.h.b16 %v762
    %v1304 = vunpack.c.l.b16 %v763
    %v1305 = vunpack.c.h.b16 %v763
    %v1306 = vunpack.c.l.b16 %v764
    %v1307 = vunpack.c.h.b16 %v764
    %v1308 = vunpack.c.l.b16 %v765
    %v1309 = vunpack.c.h.b16 %v765
    %v1310 = vunpack.c.l.b16 %v766
    %v1311 = vunpack.c.h.b16 %v766
    %v1312 = vunpack.c.l.b16 %v767
    %v1313 = vunpack.c.h.b16 %v767
    %v1314 = vunpack.c.l.b16 %v768
    %v1315 = vunpack.c.h.b16 %v768
    %v1316 = vunpack.c.l.b16 %v769
    %v1317 = vunpack.c.h.b16 %v769
    %v1318 = vunpack.c.l.b16 %v770
    %v1319 = vunpack.c.h.b16 %v770
    %v1320 = vunpack.c.l.b16 %v771
    %v1321 = vunpack.c.h.b16 %v771
    %v1322 = vunpack.c.l.b16 %v772
    %v1323 = vunpack.c.h.b16 %v772
    %v1324 = vunpack.c.l.b16 %v773
    %v1325 = vunpack.c.h.b16 %v773
    %v1326 = vunpack.c.l.b16 %v774
    %v1327 = vunpack.c.h.b16 %v774
    %v1328 = vunpack.c.l.b16 %v775
    %v1329 = vunpack.c.h.b16 %v775
    %v1330 = vunpack.c.l.b16 %v776
    %v1331 = vunpack.c.h.b16 %v776
    %v1332 = vunpack.c.l.b16 %v777
    %v1333 = vunpack.c.h.b16 %v777
    %v1334 = vunpack.c.l.b16 %v778
    %v1335 = vunpack.c.h.b16 %v778
    %v1336 = vunpack.c.l.b16 %v779
    %v1337 = vunpack.c.h.b16 %v779
    %v1338 = vunpack.c.l.b16 %v780
    %v1339 = vunpack.c.h.b16 %v780
    %v1340 = vunpack.c.l.b16 %v781
    %v1341 = vunpack.c.h.b16 %v781
    %v1342 = vunpack.c.l.b16 %v782
    %v1343 = vunpack.c.h.b16 %v782
    %v1344 = vunpack.c.l.b16 %v783
    %v1345 = vunpack.c.h.b16 %v783
    %v1346 = vunpack.c.l.b16 %v784
    %v1347 = vunpack.c.h.b16 %v784
    %v1348 = vunpack.c.l.b16 %v785
    %v1349 = vunpack.c.h.b16 %v785
    %v1350 = vunpack.c.l.b16 %v786
    %v1351 = vunpack.c.h.b16 %v786
    %v1352 = vunpack.c.l.b16 %v787
    %v1353 = vunpack.c.h.b16 %v787
    %v1354 = vunpack.c.l.b16 %v788
    %v1355 = vunpack.c.h.b16 %v788
    %v1356 = vunpack.c.l.b16 %v789
    %v1357 = vunpack.c.h.b16 %v789
    %v1358 = vunpack.c.l.b16 %v790
    %v1359 = vunpack.c.h.b16 %v790
    %v1360 = vunpack.c.l.b16 %v791
    %v1361 = vunpack.c.h.b16 %v791
    %v1362 = vunpack.c.l.b16 %v792
    %v1363 = vunpack.c.h.b16 %v792
    %v1364 = vunpack.c.l.b16 %v793
    %v1365 = vunpack.c.h.b16 %v793
    %v1366 = vunpack.c.l.b16 %v794
    %v1367 = vunpack.c.h.b16 %v794
    %v1368 = vunpack.c.l.b16 %v795
    %v1369 = vunpack.c.h.b16 %v795
    %v1370 = vunpack.c.l.b16 %v796
    %v1371 = vunpack.c.h.b16 %v796
    %v1372 = vunpack.c.l.b16 %v797
    %v1373 = vunpack.c.h.b16 %v797
    %v1374 = vunpack.c.l.b16 %v798
    %v1375 = vunpack.c.h.b16 %v798
    %v1376 = vunpack.c.l.b16 %v799
    %v1377 = vunpack.c.h.b16 %v799
    %v1378 = vunpack.c.l.b16 %v800
    %v1379 = vunpack.c.h.b16 %v800
    %v1380 = vunpack.c.l.b16 %v801
    %v1381 = vunpack.c.h.b16 %v801
    %v1382 = vunpack.c.l.b16 %v802
    %v1383 = vunpack.c.h.b16 %v802
    %v1384 = vunpack.c.l.b16 %v803
    %v1385 = vunpack.c.h.b16 %v803
    %v1386 = vunpack.c.l.b16 %v804
    %v1387 = vunpack.c.h.b16 %v804
    %v1388 = vunpack.c.l.b16 %v805
    %v1389 = vunpack.c.h.b16 %v805
    %v1390 = vunpack.c.l.b16 %v806
    %v1391 = vunpack.c.h.b16 %v806
    %v1392 = vunpack.c.l.b16 %v807
    %v1393 = vunpack.c.h.b16 %v807
    %v1394 = vunpack.c.l.b16 %v808
    %v1395 = vunpack.c.h.b16 %v808
    %v1396 = vunpack.c.l.b16 %v809
    %v1397 = vunpack.c.h.b16 %v809
    %v1398 = vunpack.c.l.b16 %v810
    %v1399 = vunpack.c.h.b16 %v810
    %v1400 = vunpack.c.l.b16 %v811
    %v1401 = vunpack.c.h.b16 %v811
    %v1402 = vunpack.c.l.b16 %v812
    %v1403 = vunpack.c.h.b16 %v812
    %v1404 = vunpack.c.l.b16 %v813
    %v1405 = vunpack.c.h.b16 %v813
    %v1406 = vunpack.c.l.b16 %v814
    %v1407 = vunpack.c.h.b16 %v814
    %v1408 = vunpack.c.l.b16 %v815
    %v1409 = vunpack.c.h.b16 %v815
    %v1410 = vunpack.c.l.b16 %v816
    %v1411 = vunpack.c.h.b16 %v816
    %v1412 = vunpack.c.l.b16 %v817
    %v1413 = vunpack.c.h.b16 %v817
    %v1414 = vunpack.c.l.b16 %v818
    %v1415 = vunpack.c.h.b16 %v818
    %v1416 = vunpack.c.l.b16 %v819
    %v1417 = vunpack.c.h.b16 %v819
    %v1418 = vunpack.c.l.b16 %v820
    %v1419 = vunpack.c.h.b16 %v820
    %v1420 = vunpack.c.l.b16 %v821
    %v1421 = vunpack.c.h.b16 %v821
    %v1422 = vunpack.c.l.b16 %v822
    %v1423 = vunpack.c.h.b16 %v822
    %v1424 = vunpack.c.l.b16 %v823
    %v1425 = vunpack.c.h.b16 %v823
    %v1426 = vunpack.c.l.b16 %v824
    %v1427 = vunpack.c.h.b16 %v824
    %v1428 = vunpack.c.l.b16 %v825
    %v1429 = vunpack.c.h.b16 %v825
    %v1430 = vunpack.c.l.b16 %v826
    %v1431 = vunpack.c.h.b16 %v826
    %v1432 = vunpack.c.l.b16 %v827
    %v1433 = vunpack.c.h.b16 %v827
    %v1434 = vunpack.c.l.b16 %v828
    %v1435 = vunpack.c.h.b16 %v828
    %v1436 = vunpack.c.l.b16 %v829
    %v1437 = vunpack.c.h.b16 %v829
    %v1438 = vunpack.c.l.b16 %v830
    %v1439 = vunpack.c.h.b16 %v830
    %v1440 = vunpack.c.l.b16 %v831
    %v1441 = vunpack.c.h.b16 %v831
    %v1442 = vunpack.c.l.b16 %v832
    %v1443 = vunpack.c.h.b16 %v832
    %v1444 = vunpack.c.l.b16 %v833
    %v1445 = vunpack.c.h.b16 %v833
    %v1446 = vunpack.c.l.b16 %v834
    %v1447 = vunpack.c.h.b16 %v834
    %v1448 = vunpack.c.l.b16 %v835
    %v1449 = vunpack.c.h.b16 %v835
    %v1450 = vunpack.c.l.b16 %v836
    %v1451 = vunpack.c.h.b16 %v836
    %v1452 = vunpack.c.l.b16 %v837
    %v1453 = vunpack.c.h.b16 %v837
    %v1454 = vunpack.c.l.b16 %v838
    %v1455 = vunpack.c.h.b16 %v838
    %v1456 = vunpack.c.l.b16 %v839
    %v1457 = vunpack.c.h.b16 %v839
    %v1458 = vunpack.c.l.b16 %v840
    %v1459 = vunpack.c.h.b16 %v840
    %v1460 = vunpack.c.l.b16 %v841
    %v1461 = vunpack.c.h.b16 %v841
    %v1462 = vunpack.c.l.b16 %v842
    %v1463 = vunpack.c.h.b16 %v842
    %v1464 = vunpack.c.l.b16 %v843
    %v1465 = vunpack.c.h.b16 %v843
    %v1466 = vunpack.c.l.b16 %v844
    %v1467 = vunpack.c.h.b16 %v844
    %v1468 = vunpack.c.l.b16 %v845
    %v1469 = vunpack.c.h.b16 %v845
    %v1470 = vunpack.c.l.b16 %v846
    %v1471 = vunpack.c.h.b16 %v846
    %v1472 = vunpack.c.l.b16 %v847
    %v1473 = vunpack.c.h.b16 %v847
    %v1474 = vunpack.c.l.b16 %v848
    %v1475 = vunpack.c.h.b16 %v848
    %v1476 = vunpack.c.l.b16 %v849
    %v1477 = vunpack.c.h.b16 %v849
    %v1478 = vunpack.c.l.b16 %v850
    %v1479 = vunpack.c.h.b16 %v850
    %v1480 = vunpack.c.l.b16 %v851
    %v1481 = vunpack.c.h.b16 %v851
    %v1482 = vunpack.c.l.b16 %v852
    %v1483 = vunpack.c.h.b16 %v852
    %v1484 = vunpack.c.l.b16 %v853
    %v1485 = vunpack.c.h.b16 %v853
    %v1486 = vunpack.c.l.b16 %v854
    %v1487 = vunpack.c.h.b16 %v854
    %v1488 = vunpack.c.l.b16 %v855
    %v1489 = vunpack.c.h.b16 %v855
    %v1490 = vunpack.c.l.b16 %v856
    %v1491 = vunpack.c.h.b16 %v856
    %v1492 = vunpack.c.l.b16 %v857
    %v1493 = vunpack.c.h.b16 %v857
    %v1494 = vunpack.c.l.b16 %v858
    %v1495 = vunpack.c.h.b16 %v858
    %v1496 = vunpack.c.l.b16 %v859
    %v1497 = vunpack.c.h.b16 %v859
    %v1498 = vunpack.c.l.b16 %v860
    %v1499 = vunpack.c.h.b16 %v860
    %v1500 = vunpack.c.l.b16 %v861
    %v1501 = vunpack.c.h.b16 %v861
    %v1502 = vunpack.c.l.b16 %v862
    %v1503 = vunpack.c.h.b16 %v862
    %v1504 = vunpack.c.l.b16 %v863
    %v1505 = vunpack.c.h.b16 %v863
    %v1506 = vunpack.c.l.b16 %v864
    %v1507 = vunpack.c.h.b16 %v864
    %v1508 = vunpack.c.l.b16 %v865
    %v1509 = vunpack.c.h.b16 %v865
    %v1510 = vunpack.c.l.b16 %v866
    %v1511 = vunpack.c.h.b16 %v866
    %v1512 = vunpack.c.l.b16 %v867
    %v1513 = vunpack.c.h.b16 %v867
    %v1514 = vunpack.c.l.b16 %v868
    %v1515 = vunpack.c.h.b16 %v868
    %v1516 = vunpack.c.l.b16 %v869
    %v1517 = vunpack.c.h.b16 %v869
    %v1518 = vunpack.c.l.b16 %v870
    %v1519 = vunpack.c.h.b16 %v870
    %v1520 = vunpack.c.l.b16 %v871
    %v1521 = vunpack.c.h.b16 %v871
    %v1522 = vunpack.c.l.b16 %v872
    %v1523 = vunpack.c.h.b16 %v872
    %v1524 = vunpack.c.l.b16 %v873
    %v1525 = vunpack.c.h.b16 %v873
    %v1526 = vunpack.c.l.b16 %v874
    %v1527 = vunpack.c.h.b16 %v874
    %v1528 = vunpack.c.l.b16 %v875
    %v1529 = vunpack.c.h.b16 %v875
    %v1530 = vunpack.c.l.b16 %v876
    %v1531 = vunpack.c.h.b16 %v876
    %v1532 = vunpack.c.l.b16 %v877
    %v1533 = vunpack.c.h.b16 %v877
    %v1534 = vunpack.c.l.b16 %v878
    %v1535 = vunpack.c.h.b16 %v878
    %v1536 = vunpack.c.l.b16 %v879
    %v1537 = vunpack.c.h.b16 %v879
    %v1538 = vunpack.c.l.b16 %v880
    %v1539 = vunpack.c.h.b16 %v880
    %v1540 = vunpack.c.l.b16 %v881
    %v1541 = vunpack.c.h.b16 %v881
    %v1542 = vunpack.c.l.b16 %v882
    %v1543 = vunpack.c.h.b16 %v882
    %v1544 = vunpack.c.l.b16 %v883
    %v1545 = vunpack.c.h.b16 %v883
    %v1546 = vunpack.c.l.b16 %v884
    %v1547 = vunpack.c.h.b16 %v884
    %v1548 = vunpack.c.l.b16 %v885
    %v1549 = vunpack.c.h.b16 %v885
    %v1550 = vunpack.c.l.b16 %v886
    %v1551 = vunpack.c.h.b16 %v886
    %v1552 = vunpack.c.l.b16 %v887
    %v1553 = vunpack.c.h.b16 %v887
    %v1554 = vunpack.c.l.b16 %v888
    %v1555 = vunpack.c.h.b16 %v888
    %v1556 = vunpack.c.l.b16 %v889
    %v1557 = vunpack.c.h.b16 %v889
    %v1558 = vunpack.c.l.b16 %v890
    %v1559 = vunpack.c.h.b16 %v890
    %v1560 = vunpack.c.l.b16 %v891
    %v1561 = vunpack.c.h.b16 %v891
    %v1562 = vunpack.c.l.b16 %v892
    %v1563 = vunpack.c.h.b16 %v892
    %v1564 = vunpack.c.l.b16 %v893
    %v1565 = vunpack.c.h.b16 %v893
    %v1566 = vunpack.c.l.b16 %v894
    %v1567 = vunpack.c.h.b16 %v894
    %v1568 = vunpack.c.l.b16 %v895
    %v1569 = vunpack.c.h.b16 %v895
    %v1570 = vunpack.c.l.b16 %v896
    %v1571 = vunpack.c.h.b16 %v896
    %v1572 = vunpack.c.l.b16 %v897
    %v1573 = vunpack.c.h.b16 %v897
    %v1574 = vunpack.c.l.b16 %v898
    %v1575 = vunpack.c.h.b16 %v898
    %v1576 = vunpack.c.l.b16 %v899
    %v1577 = vunpack.c.h.b16 %v899
    %v1578 = vunpack.c.l.b16 %v900
    %v1579 = vunpack.c.h.b16 %v900
    %v1580 = vunpack.c.l.b16 %v901
    %v1581 = vunpack.c.h.b16 %v901
    %v1582 = vunpack.c.l.b16 %v902
    %v1583 = vunpack.c.h.b16 %v902
    %v1584 = vunpack.c.l.b16 %v903
    %v1585 = vunpack.c.h.b16 %v903
    %v1586 = vunpack.c.l.b16 %v904
    %v1587 = vunpack.c.h.b16 %v904
    %v1588 = vunpack.c.l.b16 %v905
    %v1589 = vunpack.c.h.b16 %v905
    %v1590 = vunpack.c.l.b16 %v906
    %v1591 = vunpack.c.h.b16 %v906
    %v1592 = vunpack.c.l.b16 %v907
    %v1593 = vunpack.c.h.b16 %v907
    %v1594 = vunpack.c.l.b16 %v908
    %v1595 = vunpack.c.h.b16 %v908
    %v1596 = vunpack.c.l.b16 %v909
    %v1597 = vunpack.c.h.b16 %v909
    %v1598 = vunpack.c.l.b16 %v910
    %v1599 = vunpack.c.h.b16 %v910
    %v1600 = vunpack.c.l.b16 %v911
    %v1601 = vunpack.c.h.b16 %v911
    %v1602 = vunpack.c.l.b16 %v912
    %v1603 = vunpack.c.h.b16 %v912
    %v1604 = vunpack.c.l.b16 %v913
    %v1605 = vunpack.c.h.b16 %v913
    %v1606 = vunpack.c.l.b16 %v914
    %v1607 = vunpack.c.h.b16 %v914
    %v1608 = vunpack.c.l.b16 %v915
    %v1609 = vunpack.c.h.b16 %v915
    %v1610 = vunpack.c.l.b16 %v916
    %v1611 = vunpack.c.h.b16 %v916
    %v1612 = vunpack.c.l.b16 %v917
    %v1613 = vunpack.c.h.b16 %v917
    %v1614 = vunpack.c.l.b16 %v918
    %v1615 = vunpack.c.h.b16 %v918
    %v1616 = vunpack.c.l.b16 %v919
    %v1617 = vunpack.c.h.b16 %v919
    %v1618 = vunpack.c.l.b16 %v920
    %v1619 = vunpack.c.h.b16 %v920
    %v1620 = vunpack.c.l.b16 %v921
    %v1621 = vunpack.c.h.b16 %v921
    %v1622 = vunpack.c.l.b16 %v922
    %v1623 = vunpack.c.h.b16 %v922
    %v1624 = vunpack.c.l.b16 %v923
    %v1625 = vunpack.c.h.b16 %v923
    %v1626 = vunpack.c.l.b16 %v924
    %v1627 = vunpack.c.h.b16 %v924
    %v1628 = vunpack.c.l.b16 %v925
    %v1629 = vunpack.c.h.b16 %v925
    %v1630 = vunpack.c.l.b16 %v926
    %v1631 = vunpack.c.h.b16 %v926
    %v1632 = vunpack.c.l.b16 %v927
    %v1633 = vunpack.c.h.b16 %v927
    %v1634 = vunpack.c.l.b16 %v928
    %v1635 = vunpack.c.h.b16 %v928
    %v1636 = vunpack.c.l.b16 %v929
    %v1637 = vunpack.c.h.b16 %v929
    %v1638 = vunpack.c.l.b16 %v930
    %v1639 = vunpack.c.h.b16 %v930
    %v1640 = vunpack.c.l.b16 %v931
    %v1641 = vunpack.c.h.b16 %v931
    %v1642 = vunpack.c.l.b16 %v932
    %v1643 = vunpack.c.h.b16 %v932
    %v1644 = vunpack.c.l.b16 %v933
    %v1645 = vunpack.c.h.b16 %v933
    %v1646 = vunpack.c.l.b16 %v934
    %v1647 = vunpack.c.h.b16 %v934
    %v1648 = vunpack.c.l.b16 %v935
    %v1649 = vunpack.c.h.b16 %v935
    %v1650 = vunpack.c.l.b16 %v936
    %v1651 = vunpack.c.h.b16 %v936
    %v1652 = vunpack.c.l.b16 %v937
    %v1653 = vunpack.c.h.b16 %v937
    %v1654 = vunpack.c.l.b16 %v938
    %v1655 = vunpack.c.h.b16 %v938
    %v1656 = vunpack.c.l.b16 %v939
    %v1657 = vunpack.c.h.b16 %v939
    %v1658 = vunpack.c.l.b16 %v940
    %v1659 = vunpack.c.h.b16 %v940
    %v1660 = vunpack.c.l.b16 %v941
    %v1661 = vunpack.c.h.b16 %v941
    %v1662 = vunpack.c.l.b16 %v942
    %v1663 = vunpack.c.h.b16 %v942
    %v1664 = vunpack.c.l.b16 %v943
    %v1665 = vunpack.c.h.b16 %v943
    %v1666 = vunpack.c.l.b16 %v944
    %v1667 = vunpack.c.h.b16 %v944
    %v1668 = vunpack.c.l.b16 %v945
    %v1669 = vunpack.c.h.b16 %v945
    %v1670 = vunpack.c.l.b16 %v946
    %v1671 = vunpack.c.h.b16 %v946
    %v1672 = vunpack.c.l.b16 %v947
    %v1673 = vunpack.c.h.b16 %v947
    %v1674 = vunpack.c.l.b16 %v948
    %v1675 = vunpack.c.h.b16 %v948
    %v1676 = vunpack.c.l.b16 %v949
    %v1677 = vunpack.c.h.b16 %v949
    %v1678 = vunpack.c.l.b16 %v950
    %v1679 = vunpack.c.h.b16 %v950
    %v1680 = vunpack.c.l.b16 %v951
    %v1681 = vunpack.c.h.b16 %v951
    %v1682 = vunpack.c.l.b16 %v952
    %v1683 = vunpack.c.h.b16 %v952
    %v1684 = vunpack.c.l.b16 %v953
    %v1685 = vunpack.c.h.b16 %v953
    %v1686 = vunpack.c.l.b16 %v954
    %v1687 = vunpack.c.h.b16 %v954
    %v1688 = vunpack.c.l.b16 %v955
    %v1689 = vunpack.c.h.b16 %v955
    %v1690 = vunpack.c.l.b16 %v956
    %v1691 = vunpack.c.h.b16 %v956
    %v1692 = vunpack.c.l.b16 %v957
    %v1693 = vunpack.c.h.b16 %v957
    %v1694 = vunpack.c.l.b16 %v958
    %v1695 = vunpack.c.h.b16 %v958
    %v1696 = vunpack.c.l.b16 %v959
    %v1697 = vunpack.c.h.b16 %v959
    %v1698 = vunpack.c.l.b16 %v960
    %v1699 = vunpack.c.h.b16 %v960
    %v1700 = vunpack.c.l.b16 %v961
    %v1701 = vunpack.c.h.b16 %v961
    %v1702 = vunpack.c.l.b16 %v962
    %v1703 = vunpack.c.h.b16 %v962
    %v1704 = vunpack.c.l.b16 %v963
    %v1705 = vunpack.c.h.b16 %v963
    %v1706 = vunpack.c.l.b16 %v964
    %v1707 = vunpack.c.h.b16 %v964
    %v1708 = vunpack.c.l.b16 %v965
    %v1709 = vunpack.c.h.b16 %v965
    %v1710 = vunpack.c.l.b16 %v966
    %v1711 = vunpack.c.h.b16 %v966
    %v1712 = vunpack.c.l.b16 %v967
    %v1713 = vunpack.c.h.b16 %v967
    %v1714 = vunpack.c.l.b16 %v968
    %v1715 = vunpack.c.h.b16 %v968
    %v1716 = vunpack.c.l.b16 %v969
    %v1717 = vunpack.c.h.b16 %v969
    %v1718 = vunpack.c.l.b16 %v970
    %v1719 = vunpack.c.h.b16 %v970
    %v1720 = vunpack.c.l.b16 %v971
    %v1721 = vunpack.c.h.b16 %v971
    %v1722 = vunpack.c.l.b16 %v972
    %v1723 = vunpack.c.h.b16 %v972
    %v1724 = vunpack.c.l.b16 %v973
    %v1725 = vunpack.c.h.b16 %v973
    %v1726 = vunpack.c.l.b16 %v974
    %v1727 = vunpack.c.h.b16 %v974
    %v1728 = vunpack.c.l.b16 %v975
    %v1729 = vunpack.c.h.b16 %v975
    %v1730 = vunpack.c.l.b16 %v976
    %v1731 = vunpack.c.h.b16 %v976
    %v1732 = vunpack.c.l.b16 %v977
    %v1733 = vunpack.c.h.b16 %v977
    %v1734 = vunpack.c.l.b16 %v978
    %v1735 = vunpack.c.h.b16 %v978
    %v1736 = vunpack.c.l.b16 %v979
    %v1737 = vunpack.c.h.b16 %v979
    %v1738 = vunpack.c.l.b16 %v980
    %v1739 = vunpack.c.h.b16 %v980
    %v1740 = vunpack.c.l.b16 %v981
    %v1741 = vunpack.c.h.b16 %v981
    %v1742 = vunpack.c.l.b16 %v982
    %v1743 = vunpack.c.h.b16 %v982
    %v1744 = vunpack.c.l.b16 %v983
    %v1745 = vunpack.c.h.b16 %v983
    %v1746 = vunpack.c.l.b16 %v984
    %v1747 = vunpack.c.h.b16 %v984
    %v1748 = vunpack.c.l.b16 %v985
    %v1749 = vunpack.c.h.b16 %v985
    %v1750 = vunpack.c.l.b16 %v986
    %v1751 = vunpack.c.h.b16 %v986
    %v1752 = vunpack.c.l.b16 %v987
    %v1753 = vunpack.c.h.b16 %v987
    %v1754 = vunpack.c.l.b16 %v988
    %v1755 = vunpack.c.h.b16 %v988
    %v1756 = vunpack.c.l.b16 %v989
    %v1757 = vunpack.c.h.b16 %v989
    %v1758 = vunpack.c.l.b16 %v990
    %v1759 = vunpack.c.h.b16 %v990
    %v1760 = vunpack.c.l.b16 %v991
    %v1761 = vunpack.c.h.b16 %v991
    %v1762 = vunpack.c.l.b16 %v992
    %v1763 = vunpack.c.h.b16 %v992
    %v1764 = vunpack.c.l.b16 %v993
    %v1765 = vunpack.c.h.b16 %v993
    %v1766 = vunpack.c.l.b16 %v994
    %v1767 = vunpack.c.h.b16 %v994
    %v1768 = vunpack.c.l.b16 %v995
    %v1769 = vunpack.c.h.b16 %v995
    %v1770 = vunpack.c.l.b16 %v996
    %v1771 = vunpack.c.h.b16 %v996
    %v1772 = vunpack.c.l.b16 %v997
    %v1773 = vunpack.c.h.b16 %v997
    %v1774 = vunpack.c.l.b16 %v998
    %v1775 = vunpack.c.h.b16 %v998
    %v1776 = vunpack.c.l.b16 %v999
    %v1777 = vunpack.c.h.b16 %v999
    %v1778 = vunpack.c.l.b16 %v1000
    %v1779 = vunpack.c.h.b16 %v1000
    %v1780 = vunpack.c.l.b16 %v1001
    %v1781 = vunpack.c.h.b16 %v1001
    %v1782 = vunpack.c.l.b16 %v1002
    %v1783 = vunpack.c.h.b16 %v1002
    %v1784 = vunpack.c.l.b16 %v1003
    %v1785 = vunpack.c.h.b16 %v1003
    %v1786 = vunpack.c.l.b16 %v1004
    %v1787 = vunpack.c.h.b16 %v1004
    %v1788 = vunpack.c.l.b16 %v1005
    %v1789 = vunpack.c.h.b16 %v1005
    %v1790 = vunpack.c.l.b16 %v1006
    %v1791 = vunpack.c.h.b16 %v1006
    %v1792 = vunpack.c.l.b16 %v1007
    %v1793 = vunpack.c.h.b16 %v1007
    %v1794 = vunpack.c.l.b16 %v1008
    %v1795 = vunpack.c.h.b16 %v1008
    %v1796 = vunpack.c.l.b16 %v1009
    %v1797 = vunpack.c.h.b16 %v1009
    %v1798 = vunpack.c.l.b16 %v1010
    %v1799 = vunpack.c.h.b16 %v1010
    %v1800 = vunpack.c.l.b16 %v1011
    %v1801 = vunpack.c.h.b16 %v1011
    %v1802 = vpack.c.b16 %v1294, %v1290
    %v1803 = vpack.c.b16 %v1295, %v1291
    %v1804 = vpack.c.b16 %v1296, %v1292
    %v1805 = vpack.c.b16 %v1297, %v1293
    %v1806 = vpack.c.b16 %v1302, %v1298
    %v1807 = vpack.c.b16 %v1303, %v1299
    %v1808 = vpack.c.b16 %v1304, %v1300
    %v1809 = vpack.c.b16 %v1305, %v1301
    %v1810 = vpack.c.b16 %v1310, %v1306
    %v1811 = vpack.c.b16 %v1311, %v1307
    %v1812 = vpack.c.b16 %v1312, %v1308
    %v1813 = vpack.c.b16 %v1313, %v1309
    %v1814 = vpack.c.b16 %v1318, %v1314
    %v1815 = vpack.c.b16 %v1319, %v1315
    %v1816 = vpack.c.b16 %v1320, %v1316
    %v1817 = vpack.c.b16 %v1321, %v1317
    %v1818 = vpack.c.b16 %v1326, %v1322
    %v1819 = vpack.c.b16 %v1327, %v1323
    %v1820 = vpack.c.b16 %v1328, %v1324
    %v1821 = vpack.c.b16 %v1329, %v1325
    %v1822 = vpack.c.b16 %v1334, %v1330
    %v1823 = vpack.c.b16 %v1335, %v1331
    %v1824 = vpack.c.b16 %v1336, %v1332
    %v1825 = vpack.c.b16 %v1337, %v1333
    %v1826 = vpack.c.b16 %v1342, %v1338
    %v1827 = vpack.c.b16 %v1343, %v1339
    %v1828 = vpack.c.b16 %v1344, %v1340
    %v1829 = vpack.c.b16 %v1345, %v1341
    %v1830 = vpack.c.b16 %v1350, %v1346
    %v1831 = vpack.c.b16 %v1351, %v1347
    %v1832 = vpack.c.b16 %v1352, %v1348
    %v1833 = vpack.c.b16 %v1353, %v1349
    %v1834 = vpack.c.b16 %v1358, %v1354
    %v1835 = vpack.c.b16 %v1359, %v1355
    %v1836 = vpack.c.b16 %v1360, %v1356
    %v1837 = vpack.c.b16 %v1361, %v1357
    %v1838 = vpack.c.b16 %v1366, %v1362
    %v1839 = vpack.c.b16 %v1367, %v1363
    %v1840 = vpack.c.b16 %v1368, %v1364
    %v1841 = vpack.c.b16 %v1369, %v1365
    %v1842 = vpack.c.b16 %v1374, %v1370
    %v1843 = vpack.c.b16 %v1375, %v1371
    %v1844 = vpack.c.b16 %v1376, %v1372
    %v1845 = vpack.c.b16 %v1377, %v1373
    %v1846 = vpack.c.b16 %v1382, %v1378
    %v1847 = vpack.c.b16 %v1383, %v1379
    %v1848 = vpack.c.b16 %v1384, %v1380
    %v1849 = vpack.c.b16 %v1385, %v1381
    %v1850 = vpack.c.b16 %v1390, %v1386
    %v1851 = vpack.c.b16 %v1391, %v1387
    %v1852 = vpack.c.b16 %v1392, %v1388
    %v1853 = vpack.c.b16 %v1393, %v1389
    %v1854 = vpack.c.b16 %v1398, %v1394
    %v1855 = vpack.c.b16 %v1399, %v1395
    %v1856 = vpack.c.b16 %v1400, %v1396
    %v1857 = vpack.c.b16 %v1401, %v1397
    %v1858 = vpack.c.b16 %v1406, %v1402
    %v1859 = vpack.c.b16 %v1407, %v1403
    %v1860 = vpack.c.b16 %v1408, %v1404
    %v1861 = vpack.c.b16 %v1409, %v1405
    %v1862 = vpack.c.b16 %v1414, %v1410
    %v1863 = vpack.c.b16 %v1415, %v1411
    %v1864 = vpack.c.b16 %v1416, %v1412
    %v1865 = vpack.c.b16 %v1417, %v1413
    %v1866 = vpack.c.b16 %v1422, %v1418
    %v1867 = vpack.c.b16 %v1423, %v1419
    %v1868 = vpack.c.b16 %v1424, %v1420
    %v1869 = vpack.c.b16 %v1425, %v1421
    %v1870 = vpack.c.b16 %v1430, %v1426
    %v1871 = vpack.c.b16 %v1431, %v1427
    %v1872 = vpack.c.b16 %v1432, %v1428
    %v1873 = vpack.c.b16 %v1433, %v1429
    %v1874 = vpack.c.b16 %v1438, %v1434
    %v1875 = vpack.c.b16 %v1439, %v1435
    %v1876 = vpack.c.b16 %v1440, %v1436
    %v1877 = vpack.c.b16 %v1441, %v1437
    %v1878 = vpack.c.b16 %v1446, %v1442
    %v1879 = vpack.c.b16 %v1447, %v1443
    %v1880 = vpack.c.b16 %v1448, %v1444
    %v1881 = vpack.c.b16 %v1449, %v1445
    %v1882 = vpack.c.b16 %v1454, %v1450
    %v1883 = vpack.c.b16 %v1455, %v1451
    %v1884 = vpack.c.b16 %v1456, %v1452
    %v1885 = vpack.c.b16 %v1457, %v1453
    %v1886 = vpack.c.b16 %v1462, %v1458
    %v1887 = vpack.c.b16 %v1463, %v1459
    %v1888 = vpack.c.b16 %v1464, %v1460
    %v1889 = vpack.c.b16 %v1465, %v1461
    %v1890 = vpack.c.b16 %v1470, %v1466
    %v1891 = vpack.c.b16 %v1471, %v1467
    %v1892 = vpack.c.b16 %v1472, %v1468
    %v1893 = vpack.c.b16 %v1473, %v1469
    %v1894 = vpack.c.b16 %v1478, %v1474
    %v1895 = vpack.c.b16 %v1479, %v1475
    %v1896 = vpack.c.b16 %v1480, %v1476
    %v1897 = vpack.c.b16 %v1481, %v1477
    %v1898 = vpack.c.b16 %v1486, %v1482
    %v1899 = vpack.c.b16 %v1487, %v1483
    %v1900 = vpack.c.b16 %v1488, %v1484
    %v1901 = vpack.c.b16 %v1489, %v1485
    %v1902 = vpack.c.b16 %v1494, %v1490
    %v1903 = vpack.c.b16 %v1495, %v1491
    %v1904 = vpack.c.b16 %v1496, %v1492
    %v1905 = vpack.c.b16 %v1497, %v1493
    %v1906 = vpack.c.b16 %v1502, %v1498
    %v1907 = vpack.c.b16 %v1503, %v1499
    %v1908 = vpack.c.b16 %v1504, %v1500
    %v1909 = vpack.c.b16 %v1505, %v1501
    %v1910 = vpack.c.b16 %v1510, %v1506
    %v1911 = vpack.c.b16 %v1511, %v1507
    %v1912 = vpack.c.b16 %v1512, %v1508
    %v1913 = vpack.c.b16 %v1513, %v1509
    %v1914 = vpack.c.b16 %v1518, %v1514
    %v1915 = vpack.c.b16 %v1519, %v1515
    %v1916 = vpack.c.b16 %v1520, %v1516
    %v1917 = vpack.c.b16 %v1521, %v1517
    %v1918 = vpack.c.b16 %v1526, %v1522
    %v1919 = vpack.c.b16 %v1527, %v1523
    %v1920 = vpack.c.b16 %v1528, %v1524
    %v1921 = vpack.c.b16 %v1529, %v1525
    %v1922 = vpack.c.b16 %v1534, %v1530
    %v1923 = vpack.c.b16 %v1535, %v1531
    %v1924 = vpack.c.b16 %v1536, %v1532
    %v1925 = vpack.c.b16 %v1537, %v1533
    %v1926 = vpack.c.b16 %v1542, %v1538
    %v1927 = vpack.c.b16 %v1543, %v1539
    %v1928 = vpack.c.b16 %v1544, %v1540
    %v1929 = vpack.c.b16 %v1545, %v1541
    %v1930 = vpack.c.b16 %v1550, %v1546
    %v1931 = vpack.c.b16 %v1551, %v1547
    %v1932 = vpack.c.b16 %v1552, %v1548
    %v1933 = vpack.c.b16 %v1553, %v1549
    %v1934 = vpack.c.b16 %v1558, %v1554
    %v1935 = vpack.c.b16 %v1559, %v1555
    %v1936 = vpack.c.b16 %v1560, %v1556
    %v1937 = vpack.c.b16 %v1561, %v1557
    %v1938 = vpack.c.b16 %v1566, %v1562
    %v1939 = vpack.c.b16 %v1567, %v1563
    %v1940 = vpack.c.b16 %v1568, %v1564
    %v1941 = vpack.c.b16 %v1569, %v1565
    %v1942 = vpack.c.b16 %v1574, %v1570
    %v1943 = vpack.c.b16 %v1575, %v1571
    %v1944 = vpack.c.b16 %v1576, %v1572
    %v1945 = vpack.c.b16 %v1577, %v1573
    %v1946 = vpack.c.b16 %v1582, %v1578
    %v1947 = vpack.c.b16 %v1583, %v1579
    %v1948 = vpack.c.b16 %v1584, %v1580
    %v1949 = vpack.c.b16 %v1585, %v1581
    %v1950 = vpack.c.b16 %v1590, %v1586
    %v1951 = vpack.c.b16 %v1591, %v1587
    %v1952 = vpack.c.b16 %v1592, %v1588
    %v1953 = vpack.c.b16 %v1593, %v1589
    %v1954 = vpack.c.b16 %v1598, %v1594
    %v1955 = vpack.c.b16 %v1599, %v1595
    %v1956 = vpack.c.b16 %v1600, %v1596
    %v1957 = vpack.c.b16 %v1601, %v1597
    %v1958 = vpack.c.b16 %v1606, %v1602
    %v1959 = vpack.c.b16 %v1607, %v1603
    %v1960 = vpack.c.b16 %v1608, %v1604
    %v1961 = vpack.c.b16 %v1609, %v1605
    %v1962 = vpack.c.b16 %v1614, %v1610
    %v1963 = vpack.c.b16 %v1615, %v1611
    %v1964 = vpack.c.b16 %v1616, %v1612
    %v1965 = vpack.c.b16 %v1617, %v1613
    %v1966 = vpack.c.b16 %v1622, %v1618
    %v1967 = vpack.c.b16 %v1623, %v1619
    %v1968 = vpack.c.b16 %v1624, %v1620
    %v1969 = vpack.c.b16 %v1625, %v1621
    %v1970 = vpack.c.b16 %v1630, %v1626
    %v1971 = vpack.c.b16 %v1631, %v1627
    %v1972 = vpack.c.b16 %v1632, %v1628
    %v1973 = vpack.c.b16 %v1633, %v1629
    %v1974 = vpack.c.b16 %v1638, %v1634
    %v1975 = vpack.c.b16 %v1639, %v1635
    %v1976 = vpack.c.b16 %v1640, %v1636
    %v1977 = vpack.c.b16 %v1641, %v1637
    %v1978 = vpack.c.b16 %v1646, %v1642
    %v1979 = vpack.c.b16 %v1647, %v1643
    %v1980 = vpack.c.b16 %v1648, %v1644
    %v1981 = vpack.c.b16 %v1649, %v1645
    %v1982 = vpack.c.b16 %v1654, %v1650
    %v1983 = vpack.c.b16 %v1655, %v1651
    %v1984 = vpack.c.b16 %v1656, %v1652
    %v1985 = vpack.c.b16 %v1657, %v1653
    %v1986 = vpack.c.b16 %v1662, %v1658
    %v1987 = vpack.c.b16 %v1663, %v1659
    %v1988 = vpack.c.b16 %v1664, %v1660
    %v1989 = vpack.c.b16 %v1665, %v1661
    %v1990 = vpack.c.b16 %v1670, %v1666
    %v1991 = vpack.c.b16 %v1671, %v1667
    %v1992 = vpack.c.b16 %v1672, %v1668
    %v1993 = vpack.c.b16 %v1673, %v1669
    %v1994 = vpack.c.b16 %v1678, %v1674
    %v1995 = vpack.c.b16 %v1679, %v1675
    %v1996 = vpack.c.b16 %v1680, %v1676
    %v1997 = vpack.c.b16 %v1681, %v1677
    %v1998 = vpack.c.b16 %v1686, %v1682
    %v1999 = vpack.c.b16 %v1687, %v1683
    %v2000 = vpack.c.b16 %v1688, %v1684
    %v2001 = vpack.c.b16 %v1689, %v1685
    %v2002 = vpack.c.b16 %v1694, %v1690
    %v2003 = vpack.c.b16 %v1695, %v1691
    %v2004 = vpack.c.b16 %v1696, %v1692
    %v2005 = vpack.c.b16 %v1697, %v1693
    %v2006 = vpack.c.b16 %v1702, %v1698
    %v2007 = vpack.c.b16 %v1703, %v1699
    %v2008 = vpack.c.b16 %v1704, %v1700
    %v2009 = vpack.c.b16 %v1705, %v1701
    %v2010 = vpack.c.b16 %v1710, %v1706
    %v2011 = vpack.c.b16 %v1711, %v1707
    %v2012 = vpack.c.b16 %v1712, %v1708
    %v2013 = vpack.c.b16 %v1713, %v1709
    %v2014 = vpack.c.b16 %v1718, %v1714
    %v2015 = vpack.c.b16 %v1719, %v1715
    %v2016 = vpack.c.b16 %v1720, %v1716
    %v2017 = vpack.c.b16 %v1721, %v1717
    %v2018 = vpack.c.b16 %v1726, %v1722
    %v2019 = vpack.c.b16 %v1727, %v1723
    %v2020 = vpack.c.b16 %v1728, %v1724
    %v2021 = vpack.c.b16 %v1729, %v1725
    %v2022 = vpack.c.b16 %v1734, %v1730
    %v2023 = vpack.c.b16 %v1735, %v1731
    %v2024 = vpack.c.b16 %v1736, %v1732
    %v2025 = vpack.c.b16 %v1737, %v1733
    %v2026 = vpack.c.b16 %v1742, %v1738
    %v2027 = vpack.c.b16 %v1743, %v1739
    %v2028 = vpack.c.b16 %v1744, %v1740
    %v2029 = vpack.c.b16 %v1745, %v1741
    %v2030 = vpack.c.b16 %v1750, %v1746
    %v2031 = vpack.c.b16 %v1751, %v1747
    %v2032 = vpack.c.b16 %v1752, %v1748
    %v2033 = vpack.c.b16 %v1753, %v1749
    %v2034 = vpack.c.b16 %v1758, %v1754
    %v2035 = vpack.c.b16 %v1759, %v1755
    %v2036 = vpack.c.b16 %v1760, %v1756
    %v2037 = vpack.c.b16 %v1761, %v1757
    %v2038 = vpack.c.b16 %v1766, %v1762
    %v2039 = vpack.c.b16 %v1767, %v1763
    %v2040 = vpack.c.b16 %v1768, %v1764
    %v2041 = vpack.c.b16 %v1769, %v1765
    %v2042 = vpack.c.b16 %v1774, %v1770
    %v2043 = vpack.c.b16 %v1775, %v1771
    %v2044 = vpack.c.b16 %v1776, %v1772
    %v2045 = vpack.c.b16 %v1777, %v1773
    %v2046 = vpack.c.b16 %v1782, %v1778
    %v2047 = vpack.c.b16 %v1783, %v1779
    %v2048 = vpack.c.b16 %v1784, %v1780
    %v2049 = vpack.c.b16 %v1785, %v1781
    %v2050 = vpack.c.b16 %v1790, %v1786
    %v2051 = vpack.c.b16 %v1791, %v1787
    %v2052 = vpack.c.b16 %v1792, %v1788
    %v2053 = vpack.c.b16 %v1793, %v1789
    %v2054 = vpack.c.b16 %v1798, %v1794
    %v2055 = vpack.c.b16 %v1799, %v1795
    %v2056 = vpack.c.b16 %v1800, %v1796
    %v2057 = vpack.c.b16 %v1801, %v1797
    %2314 = vmatprep.subr.bf16.mxu0 %v1831
    %2315 = vmatpush1.bf16.msra.mxu0 %v1830
    %2316 = vmatprep.subr.bf16.mxu0 %v1827
    %2317 = vmatpush1.bf16.msra.mxu0 %v1826
    %2318 = vmatprep.subr.bf16.mxu0 %v1823
    %2319 = vmatpush1.bf16.msra.mxu0 %v1822
    %2320 = vmatprep.subr.bf16.mxu0 %v1819
    %2321 = vmatpush1.bf16.msra.mxu0 %v1818
    %2322 = vmatprep.subr.bf16.mxu0 %v1815
    %2323 = vmatpush1.bf16.msra.mxu0 %v1814
    %2324 = vmatprep.subr.bf16.mxu0 %v1811
    %2325 = vmatpush1.bf16.msra.mxu0 %v1810
    %2326 = vmatprep.subr.bf16.mxu0 %v1807
    %2327 = vmatpush1.bf16.msra.mxu0 %v1806
    %2328 = vmatprep.subr.bf16.mxu0 %v1803
    %2329 = vmatpush1.bf16.msra.mxu0 %v1802
    %2330 = vmatprep.subr.bf16.mxu0 %v1863
    %2331 = vmatpush2.bf16.msra.mxu0 %v1862
    %2332 = vmatprep.subr.bf16.mxu0 %v1859
    %2333 = vmatpush2.bf16.msra.mxu0 %v1858
    %2334 = vmatprep.subr.bf16.mxu0 %v1855
    %2335 = vmatpush2.bf16.msra.mxu0 %v1854
    %2336 = vmatprep.subr.bf16.mxu0 %v1851
    %2337 = vmatpush2.bf16.msra.mxu0 %v1850
    %2338 = vmatprep.subr.bf16.mxu0 %v1847
    %2339 = vmatpush2.bf16.msra.mxu0 %v1846
    %2340 = vmatprep.subr.bf16.mxu0 %v1843
    %2341 = vmatpush2.bf16.msra.mxu0 %v1842
    %2342 = vmatprep.subr.bf16.mxu0 %v1839
    %2343 = vmatpush2.bf16.msra.mxu0 %v1838
    %2344 = vmatprep.subr.bf16.mxu0 %v1835
    %2345 = vmatpush2.bf16.msra.mxu0 %v1834
    %2346 = vmatprep.mubr.bf16.mxu0 %v749
    %2347 = vmatmul.mubr.bf16.gmra.mxu0 %v748
    %v2348 = vpop.f32.mrf.mxu0
    %v2349 = vadd.f32 %v1017, %v2348
    %v2350 = vpop.f32.mrf.mxu0
    %v2351 = vadd.f32 %v1021, %v2350
    %v2352 = vpop.f32.mrf.mxu0
    %v2353 = vadd.f32 %v1017, %v2352
    %v2354 = vpop.f32.mrf.mxu0
    %v2355 = vadd.f32 %v1021, %v2354
    %2356 = vdwg.mxu0
    %2357 = vmatprep.subr.bf16.mxu0 %v1895
    %2358 = vmatpush1.bf16.msra.mxu0 %v1894
    %2359 = vmatprep.subr.bf16.mxu0 %v1891
    %2360 = vmatpush1.bf16.msra.mxu0 %v1890
    %2361 = vmatprep.subr.bf16.mxu0 %v1887
    %2362 = vmatpush1.bf16.msra.mxu0 %v1886
    %2363 = vmatprep.subr.bf16.mxu0 %v1883
    %2364 = vmatpush1.bf16.msra.mxu0 %v1882
    %2365 = vmatprep.subr.bf16.mxu0 %v1879
    %2366 = vmatpush1.bf16.msra.mxu0 %v1878
    %2367 = vmatprep.subr.bf16.mxu0 %v1875
    %2368 = vmatpush1.bf16.msra.mxu0 %v1874
    %2369 = vmatprep.subr.bf16.mxu0 %v1871
    %2370 = vmatpush1.bf16.msra.mxu0 %v1870
    %2371 = vmatprep.subr.bf16.mxu0 %v1867
    %2372 = vmatpush1.bf16.msra.mxu0 %v1866
    %2373 = vmatprep.subr.bf16.mxu0 %v1927
    %2374 = vmatpush2.bf16.msra.mxu0 %v1926
    %2375 = vmatprep.subr.bf16.mxu0 %v1923
    %2376 = vmatpush2.bf16.msra.mxu0 %v1922
    %2377 = vmatprep.subr.bf16.mxu0 %v1919
    %2378 = vmatpush2.bf16.msra.mxu0 %v1918
    %2379 = vmatprep.subr.bf16.mxu0 %v1915
    %2380 = vmatpush2.bf16.msra.mxu0 %v1914
    %2381 = vmatprep.subr.bf16.mxu0 %v1911
    %2382 = vmatpush2.bf16.msra.mxu0 %v1910
    %2383 = vmatprep.subr.bf16.mxu0 %v1907
    %2384 = vmatpush2.bf16.msra.mxu0 %v1906
    %2385 = vmatprep.subr.bf16.mxu0 %v1903
    %2386 = vmatpush2.bf16.msra.mxu0 %v1902
    %2387 = vmatprep.subr.bf16.mxu0 %v1899
    %2388 = vmatpush2.bf16.msra.mxu0 %v1898
    %2389 = vmatprep.mubr.bf16.mxu0 %v751
    %2390 = vmatmul.mubr.bf16.gmra.mxu0 %v750
    %v2391 = vpop.f32.mrf.mxu0
    %v2392 = vadd.f32 %v2349, %v2391
    %v2393 = vpop.f32.mrf.mxu0
    %v2394 = vadd.f32 %v2351, %v2393
    %v2395 = vpop.f32.mrf.mxu0
    %v2396 = vadd.f32 %v2353, %v2395
    %v2397 = vpop.f32.mrf.mxu0
    %v2398 = vadd.f32 %v2355, %v2397
    %2399 = vdwg.mxu0
    %2400 = vmatprep.subr.bf16.mxu0 %v1959
    %2401 = vmatpush1.bf16.msra.mxu0 %v1958
    %2402 = vmatprep.subr.bf16.mxu0 %v1955
    %2403 = vmatpush1.bf16.msra.mxu0 %v1954
    %2404 = vmatprep.subr.bf16.mxu0 %v1951
    %2405 = vmatpush1.bf16.msra.mxu0 %v1950
    %2406 = vmatprep.subr.bf16.mxu0 %v1947
    %2407 = vmatpush1.bf16.msra.mxu0 %v1946
    %2408 = vmatprep.subr.bf16.mxu0 %v1943
    %2409 = vmatpush1.bf16.msra.mxu0 %v1942
    %2410 = vmatprep.subr.bf16.mxu0 %v1939
    %2411 = vmatpush1.bf16.msra.mxu0 %v1938
    %2412 = vmatprep.subr.bf16.mxu0 %v1935
    %2413 = vmatpush1.bf16.msra.mxu0 %v1934
    %2414 = vmatprep.subr.bf16.mxu0 %v1931
    %2415 = vmatpush1.bf16.msra.mxu0 %v1930
    %2416 = vmatprep.subr.bf16.mxu0 %v1991
    %2417 = vmatpush2.bf16.msra.mxu0 %v1990
    %2418 = vmatprep.subr.bf16.mxu0 %v1987
    %2419 = vmatpush2.bf16.msra.mxu0 %v1986
    %2420 = vmatprep.subr.bf16.mxu0 %v1983
    %2421 = vmatpush2.bf16.msra.mxu0 %v1982
    %2422 = vmatprep.subr.bf16.mxu0 %v1979
    %2423 = vmatpush2.bf16.msra.mxu0 %v1978
    %2424 = vmatprep.subr.bf16.mxu0 %v1975
    %2425 = vmatpush2.bf16.msra.mxu0 %v1974
    %2426 = vmatprep.subr.bf16.mxu0 %v1971
    %2427 = vmatpush2.bf16.msra.mxu0 %v1970
    %2428 = vmatprep.subr.bf16.mxu0 %v1967
    %2429 = vmatpush2.bf16.msra.mxu0 %v1966
    %2430 = vmatprep.subr.bf16.mxu0 %v1963
    %2431 = vmatpush2.bf16.msra.mxu0 %v1962
    %2432 = vmatprep.mubr.bf16.mxu0 %v753
    %2433 = vmatmul.mubr.bf16.gmra.mxu0 %v752
    %v2434 = vpop.f32.mrf.mxu0
    %v2435 = vadd.f32 %v2392, %v2434
    %v2436 = vpop.f32.mrf.mxu0
    %v2437 = vadd.f32 %v2394, %v2436
    %v2438 = vpop.f32.mrf.mxu0
    %v2439 = vadd.f32 %v2396, %v2438
    %v2440 = vpop.f32.mrf.mxu0
    %v2441 = vadd.f32 %v2398, %v2440
    %2442 = vdwg.mxu0
    %2443 = vmatprep.subr.bf16.mxu0 %v2023
    %2444 = vmatpush1.bf16.msra.mxu0 %v2022
    %2445 = vmatprep.subr.bf16.mxu0 %v2019
    %2446 = vmatpush1.bf16.msra.mxu0 %v2018
    %2447 = vmatprep.subr.bf16.mxu0 %v2015
    %2448 = vmatpush1.bf16.msra.mxu0 %v2014
    %2449 = vmatprep.subr.bf16.mxu0 %v2011
    %2450 = vmatpush1.bf16.msra.mxu0 %v2010
    %2451 = vmatprep.subr.bf16.mxu0 %v2007
    %2452 = vmatpush1.bf16.msra.mxu0 %v2006
    %2453 = vmatprep.subr.bf16.mxu0 %v2003
    %2454 = vmatpush1.bf16.msra.mxu0 %v2002
    %2455 = vmatprep.subr.bf16.mxu0 %v1999
    %2456 = vmatpush1.bf16.msra.mxu0 %v1998
    %2457 = vmatprep.subr.bf16.mxu0 %v1995
    %2458 = vmatpush1.bf16.msra.mxu0 %v1994
    %2459 = vmatprep.subr.bf16.mxu0 %v2055
    %2460 = vmatpush2.bf16.msra.mxu0 %v2054
    %2461 = vmatprep.subr.bf16.mxu0 %v2051
    %2462 = vmatpush2.bf16.msra.mxu0 %v2050
    %2463 = vmatprep.subr.bf16.mxu0 %v2047
    %2464 = vmatpush2.bf16.msra.mxu0 %v2046
    %2465 = vmatprep.subr.bf16.mxu0 %v2043
    %2466 = vmatpush2.bf16.msra.mxu0 %v2042
    %2467 = vmatprep.subr.bf16.mxu0 %v2039
    %2468 = vmatpush2.bf16.msra.mxu0 %v2038
    %2469 = vmatprep.subr.bf16.mxu0 %v2035
    %2470 = vmatpush2.bf16.msra.mxu0 %v2034
    %2471 = vmatprep.subr.bf16.mxu0 %v2031
    %2472 = vmatpush2.bf16.msra.mxu0 %v2030
    %2473 = vmatprep.subr.bf16.mxu0 %v2027
    %2474 = vmatpush2.bf16.msra.mxu0 %v2026
    %2475 = vmatprep.mubr.bf16.mxu0 %v755
    %2476 = vmatmul.mubr.bf16.gmra.mxu0 %v754
    %v2477 = vpop.f32.mrf.mxu0
    %v2478 = vadd.f32 %v2435, %v2477
    %v2479 = vpop.f32.mrf.mxu0
    %v2480 = vadd.f32 %v2437, %v2479
    %v2481 = vpop.f32.mrf.mxu0
    %v2482 = vadd.f32 %v2439, %v2481
    %v2483 = vpop.f32.mrf.mxu0
    %v2484 = vadd.f32 %v2441, %v2483
    %2485 = vdwg.mxu0
    %2486 = vmatprep.subr.bf16.mxu0 %v1833
    %2487 = vmatpush1.bf16.msra.mxu0 %v1832
    %2488 = vmatprep.subr.bf16.mxu0 %v1829
    %2489 = vmatpush1.bf16.msra.mxu0 %v1828
    %2490 = vmatprep.subr.bf16.mxu0 %v1825
    %2491 = vmatpush1.bf16.msra.mxu0 %v1824
    %2492 = vmatprep.subr.bf16.mxu0 %v1821
    %2493 = vmatpush1.bf16.msra.mxu0 %v1820
    %2494 = vmatprep.subr.bf16.mxu0 %v1817
    %2495 = vmatpush1.bf16.msra.mxu0 %v1816
    %2496 = vmatprep.subr.bf16.mxu0 %v1813
    %2497 = vmatpush1.bf16.msra.mxu0 %v1812
    %2498 = vmatprep.subr.bf16.mxu0 %v1809
    %2499 = vmatpush1.bf16.msra.mxu0 %v1808
    %2500 = vmatprep.subr.bf16.mxu0 %v1805
    %2501 = vmatpush1.bf16.msra.mxu0 %v1804
    %2502 = vmatprep.subr.bf16.mxu0 %v1865
    %2503 = vmatpush2.bf16.msra.mxu0 %v1864
    %2504 = vmatprep.subr.bf16.mxu0 %v1861
    %2505 = vmatpush2.bf16.msra.mxu0 %v1860
    %2506 = vmatprep.subr.bf16.mxu0 %v1857
    %2507 = vmatpush2.bf16.msra.mxu0 %v1856
    %2508 = vmatprep.subr.bf16.mxu0 %v1853
    %2509 = vmatpush2.bf16.msra.mxu0 %v1852
    %2510 = vmatprep.subr.bf16.mxu0 %v1849
    %2511 = vmatpush2.bf16.msra.mxu0 %v1848
    %2512 = vmatprep.subr.bf16.mxu0 %v1845
    %2513 = vmatpush2.bf16.msra.mxu0 %v1844
    %2514 = vmatprep.subr.bf16.mxu0 %v1841
    %2515 = vmatpush2.bf16.msra.mxu0 %v1840
    %2516 = vmatprep.subr.bf16.mxu0 %v1837
    %2517 = vmatpush2.bf16.msra.mxu0 %v1836
    %2518 = vmatprep.mubr.bf16.mxu0 %v749
    %2519 = vmatmul.mubr.bf16.gmra.mxu0 %v748
    %v2520 = vpop.f32.mrf.mxu0
    %v2521 = vadd.f32 %v1025, %v2520
    %v2522 = vpop.f32.mrf.mxu0
    %v2523 = vadd.f32 %v1029, %v2522
    %v2524 = vpop.f32.mrf.mxu0
    %v2525 = vadd.f32 %v1025, %v2524
    %v2526 = vpop.f32.mrf.mxu0
    %v2527 = vadd.f32 %v1029, %v2526
    %2528 = vdwg.mxu0
    %2529 = vmatprep.subr.bf16.mxu0 %v1897
    %2530 = vmatpush1.bf16.msra.mxu0 %v1896
    %2531 = vmatprep.subr.bf16.mxu0 %v1893
    %2532 = vmatpush1.bf16.msra.mxu0 %v1892
    %2533 = vmatprep.subr.bf16.mxu0 %v1889
    %2534 = vmatpush1.bf16.msra.mxu0 %v1888
    %2535 = vmatprep.subr.bf16.mxu0 %v1885
    %2536 = vmatpush1.bf16.msra.mxu0 %v1884
    %2537 = vmatprep.subr.bf16.mxu0 %v1881
    %2538 = vmatpush1.bf16.msra.mxu0 %v1880
    %2539 = vmatprep.subr.bf16.mxu0 %v1877
    %2540 = vmatpush1.bf16.msra.mxu0 %v1876
    %2541 = vmatprep.subr.bf16.mxu0 %v1873
    %2542 = vmatpush1.bf16.msra.mxu0 %v1872
    %2543 = vmatprep.subr.bf16.mxu0 %v1869
    %2544 = vmatpush1.bf16.msra.mxu0 %v1868
    %2545 = vmatprep.subr.bf16.mxu0 %v1929
    %2546 = vmatpush2.bf16.msra.mxu0 %v1928
    %2547 = vmatprep.subr.bf16.mxu0 %v1925
    %2548 = vmatpush2.bf16.msra.mxu0 %v1924
    %2549 = vmatprep.subr.bf16.mxu0 %v1921
    %2550 = vmatpush2.bf16.msra.mxu0 %v1920
    %2551 = vmatprep.subr.bf16.mxu0 %v1917
    %2552 = vmatpush2.bf16.msra.mxu0 %v1916
    %2553 = vmatprep.subr.bf16.mxu0 %v1913
    %2554 = vmatpush2.bf16.msra.mxu0 %v1912
    %2555 = vmatprep.subr.bf16.mxu0 %v1909
    %2556 = vmatpush2.bf16.msra.mxu0 %v1908
    %2557 = vmatprep.subr.bf16.mxu0 %v1905
    %2558 = vmatpush2.bf16.msra.mxu0 %v1904
    %2559 = vmatprep.subr.bf16.mxu0 %v1901
    %2560 = vmatpush2.bf16.msra.mxu0 %v1900
    %2561 = vmatprep.mubr.bf16.mxu0 %v751
    %2562 = vmatmul.mubr.bf16.gmra.mxu0 %v750
    %v2563 = vpop.f32.mrf.mxu0
    %v2564 = vadd.f32 %v2521, %v2563
    %v2565 = vpop.f32.mrf.mxu0
    %v2566 = vadd.f32 %v2523, %v2565
    %v2567 = vpop.f32.mrf.mxu0
    %v2568 = vadd.f32 %v2525, %v2567
    %v2569 = vpop.f32.mrf.mxu0
    %v2570 = vadd.f32 %v2527, %v2569
    %2571 = vdwg.mxu0
    %2572 = vmatprep.subr.bf16.mxu0 %v1961
    %2573 = vmatpush1.bf16.msra.mxu0 %v1960
    %2574 = vmatprep.subr.bf16.mxu0 %v1957
    %2575 = vmatpush1.bf16.msra.mxu0 %v1956
    %2576 = vmatprep.subr.bf16.mxu0 %v1953
    %2577 = vmatpush1.bf16.msra.mxu0 %v1952
    %2578 = vmatprep.subr.bf16.mxu0 %v1949
    %2579 = vmatpush1.bf16.msra.mxu0 %v1948
    %2580 = vmatprep.subr.bf16.mxu0 %v1945
    %2581 = vmatpush1.bf16.msra.mxu0 %v1944
    %2582 = vmatprep.subr.bf16.mxu0 %v1941
    %2583 = vmatpush1.bf16.msra.mxu0 %v1940
    %2584 = vmatprep.subr.bf16.mxu0 %v1937
    %2585 = vmatpush1.bf16.msra.mxu0 %v1936
    %2586 = vmatprep.subr.bf16.mxu0 %v1933
    %2587 = vmatpush1.bf16.msra.mxu0 %v1932
    %2588 = vmatprep.subr.bf16.mxu0 %v1993
    %2589 = vmatpush2.bf16.msra.mxu0 %v1992
    %2590 = vmatprep.subr.bf16.mxu0 %v1989
    %2591 = vmatpush2.bf16.msra.mxu0 %v1988
    %2592 = vmatprep.subr.bf16.mxu0 %v1985
    %2593 = vmatpush2.bf16.msra.mxu0 %v1984
    %2594 = vmatprep.subr.bf16.mxu0 %v1981
    %2595 = vmatpush2.bf16.msra.mxu0 %v1980
    %2596 = vmatprep.subr.bf16.mxu0 %v1977
    %2597 = vmatpush2.bf16.msra.mxu0 %v1976
    %2598 = vmatprep.subr.bf16.mxu0 %v1973
    %2599 = vmatpush2.bf16.msra.mxu0 %v1972
    %2600 = vmatprep.subr.bf16.mxu0 %v1969
    %2601 = vmatpush2.bf16.msra.mxu0 %v1968
    %2602 = vmatprep.subr.bf16.mxu0 %v1965
    %2603 = vmatpush2.bf16.msra.mxu0 %v1964
    %2604 = vmatprep.mubr.bf16.mxu0 %v753
    %2605 = vmatmul.mubr.bf16.gmra.mxu0 %v752
    %v2606 = vpop.f32.mrf.mxu0
    %v2607 = vadd.f32 %v2564, %v2606
    %v2608 = vpop.f32.mrf.mxu0
    %v2609 = vadd.f32 %v2566, %v2608
    %v2610 = vpop.f32.mrf.mxu0
    %v2611 = vadd.f32 %v2568, %v2610
    %v2612 = vpop.f32.mrf.mxu0
    %v2613 = vadd.f32 %v2570, %v2612
    %2614 = vdwg.mxu0
    %2615 = vmatprep.subr.bf16.mxu0 %v2025
    %2616 = vmatpush1.bf16.msra.mxu0 %v2024
    %2617 = vmatprep.subr.bf16.mxu0 %v2021
    %2618 = vmatpush1.bf16.msra.mxu0 %v2020
    %2619 = vmatprep.subr.bf16.mxu0 %v2017
    %2620 = vmatpush1.bf16.msra.mxu0 %v2016
    %2621 = vmatprep.subr.bf16.mxu0 %v2013
    %2622 = vmatpush1.bf16.msra.mxu0 %v2012
    %2623 = vmatprep.subr.bf16.mxu0 %v2009
    %2624 = vmatpush1.bf16.msra.mxu0 %v2008
    %2625 = vmatprep.subr.bf16.mxu0 %v2005
    %2626 = vmatpush1.bf16.msra.mxu0 %v2004
    %2627 = vmatprep.subr.bf16.mxu0 %v2001
    %2628 = vmatpush1.bf16.msra.mxu0 %v2000
    %2629 = vmatprep.subr.bf16.mxu0 %v1997
    %2630 = vmatpush1.bf16.msra.mxu0 %v1996
    %2631 = vmatprep.subr.bf16.mxu0 %v2057
    %2632 = vmatpush2.bf16.msra.mxu0 %v2056
    %2633 = vmatprep.subr.bf16.mxu0 %v2053
    %2634 = vmatpush2.bf16.msra.mxu0 %v2052
    %2635 = vmatprep.subr.bf16.mxu0 %v2049
    %2636 = vmatpush2.bf16.msra.mxu0 %v2048
    %2637 = vmatprep.subr.bf16.mxu0 %v2045
    %2638 = vmatpush2.bf16.msra.mxu0 %v2044
    %2639 = vmatprep.subr.bf16.mxu0 %v2041
    %2640 = vmatpush2.bf16.msra.mxu0 %v2040
    %2641 = vmatprep.subr.bf16.mxu0 %v2037
    %2642 = vmatpush2.bf16.msra.mxu0 %v2036
    %2643 = vmatprep.subr.bf16.mxu0 %v2033
    %2644 = vmatpush2.bf16.msra.mxu0 %v2032
    %2645 = vmatprep.subr.bf16.mxu0 %v2029
    %2646 = vmatpush2.bf16.msra.mxu0 %v2028
    %2647 = vmatprep.mubr.bf16.mxu0 %v755
    %2648 = vmatmul.mubr.bf16.gmra.mxu0 %v754
    %v2649 = vpop.f32.mrf.mxu0
    %v2650 = vadd.f32 %v2607, %v2649
    %v2651 = vpop.f32.mrf.mxu0
    %v2652 = vadd.f32 %v2609, %v2651
    %v2653 = vpop.f32.mrf.mxu0
    %v2654 = vadd.f32 %v2611, %v2653
    %v2655 = vpop.f32.mrf.mxu0
    %v2656 = vadd.f32 %v2613, %v2655
    %2657 = vdwg.mxu0
    %vm2658 = vcmp.ge.f32.partialorder %v2478, 0.0
    %vm2659 = vcmp.ge.f32.partialorder %v2480, 0.0
    %vm2660 = vcmp.ge.f32.partialorder %v2650, 0.0
    %vm2661 = vcmp.ge.f32.partialorder %v2652, 0.0
    %vm2662 = vcmp.ge.f32.partialorder %v2482, 0.0
    %vm2663 = vcmp.ge.f32.partialorder %v2484, 0.0
    %vm2664 = vcmp.ge.f32.partialorder %v2654, 0.0
    %vm2665 = vcmp.ge.f32.partialorder %v2656, 0.0
    %v2666 = vmul.f32 %v2478, 0.01
    %v2667 = vmul.f32 %v2480, 0.01
    %v2668 = vmul.f32 %v2650, 0.01
    %v2669 = vmul.f32 %v2652, 0.01
    %v2670 = vmul.f32 %v2482, 0.01
    %v2671 = vmul.f32 %v2484, 0.01
    %v2672 = vmul.f32 %v2654, 0.01
    %v2673 = vmul.f32 %v2656, 0.01
    %v2674 = vsel %vm2658, %v2478, %v2666
    %v2675 = vsel %vm2659, %v2480, %v2667
    %v2676 = vsel %vm2660, %v2650, %v2668
    %v2677 = vsel %vm2661, %v2652, %v2669
    %v2678 = vsel %vm2662, %v2482, %v2670
    %v2679 = vsel %vm2663, %v2484, %v2671
    %v2680 = vsel %vm2664, %v2654, %v2672
    %v2681 = vsel %vm2665, %v2656, %v2673
    %v2682 = vpack.c.bf16 %v2678, %v2674
    %v2683 = vpack.c.bf16 %v2679, %v2675
    %v2684 = vpack.c.bf16 %v2680, %v2676
    %v2685 = vpack.c.bf16 %v2681, %v2677
    %v2686 = vld [vmem:[#allocation6] sm:$0xff]
    %v2687 = vld [vmem:[#allocation6 + $0x8] sm:$0xf]
    %v2688 = vld [vmem:[#allocation6 + $0xc] sm:$0xff]
    %v2689 = vld [vmem:[#allocation6 + $0x14] sm:$0xf]
    %v2690 = vld [vmem:[#allocation6 + $0x18] sm:$0xff]
    %v2691 = vld [vmem:[#allocation6 + $0x20] sm:$0xf]
    %v2692 = vld [vmem:[#allocation6 + $0x24] sm:$0xff]
    %v2693 = vld [vmem:[#allocation6 + $0x2c] sm:$0xf]
    %v2694 = vld [vmem:[#allocation6 + $0x30] sm:$0xff]
    %v2695 = vld [vmem:[#allocation6 + $0x38] sm:$0xf]
    %v2696 = vld [vmem:[#allocation6 + $0x3c] sm:$0xff]
    %v2697 = vld [vmem:[#allocation6 + $0x44] sm:$0xf]
    %v2698 = vld [vmem:[#allocation6 + $0x48] sm:$0xff]
    %v2699 = vld [vmem:[#allocation6 + $0x50] sm:$0xf]
    %v2700 = vld [vmem:[#allocation6 + $0x54] sm:$0xff]
    %v2701 = vld [vmem:[#allocation6 + $0x5c] sm:$0xf]
    %v2702 = vld [vmem:[#allocation6 + $0x60] sm:$0xff]
    %v2703 = vld [vmem:[#allocation6 + $0x68] sm:$0xf]
    %v2704 = vld [vmem:[#allocation6 + $0x6c] sm:$0xff]
    %v2705 = vld [vmem:[#allocation6 + $0x74] sm:$0xf]
    %v2706 = vld [vmem:[#allocation6 + $0x78] sm:$0xff]
    %v2707 = vld [vmem:[#allocation6 + $0x80] sm:$0xf]
    %v2708 = vld [vmem:[#allocation6 + $0x84] sm:$0xff]
    %v2709 = vld [vmem:[#allocation6 + $0x8c] sm:$0xf]
    %v2710 = vld [vmem:[#allocation6 + $0x90] sm:$0xff]
    %v2711 = vld [vmem:[#allocation6 + $0x98] sm:$0xf]
    %v2712 = vld [vmem:[#allocation6 + $0x9c] sm:$0xff]
    %v2713 = vld [vmem:[#allocation6 + $0xa4] sm:$0xf]
    %v2714 = vld [vmem:[#allocation6 + $0xa8] sm:$0xff]
    %v2715 = vld [vmem:[#allocation6 + $0xb0] sm:$0xf]
    %v2716 = vld [vmem:[#allocation6 + $0xb4] sm:$0xff]
    %v2717 = vld [vmem:[#allocation6 + $0xbc] sm:$0xf]
    %v2718 = vld [vmem:[#allocation6 + $0xc0] sm:$0xff]
    %v2719 = vld [vmem:[#allocation6 + $0xc8] sm:$0xf]
    %v2720 = vld [vmem:[#allocation6 + $0xcc] sm:$0xff]
    %v2721 = vld [vmem:[#allocation6 + $0xd4] sm:$0xf]
    %v2722 = vld [vmem:[#allocation6 + $0xd8] sm:$0xff]
    %v2723 = vld [vmem:[#allocation6 + $0xe0] sm:$0xf]
    %v2724 = vld [vmem:[#allocation6 + $0xe4] sm:$0xff]
    %v2725 = vld [vmem:[#allocation6 + $0xec] sm:$0xf]
    %v2726 = vld [vmem:[#allocation6 + $0xf0] sm:$0xff]
    %v2727 = vld [vmem:[#allocation6 + $0xf8] sm:$0xf]
    %v2728 = vld [vmem:[#allocation6 + $0xfc] sm:$0xff]
    %v2729 = vld [vmem:[#allocation6 + $0x104] sm:$0xf]
    %v2730 = vld [vmem:[#allocation6 + $0x108] sm:$0xff]
    %v2731 = vld [vmem:[#allocation6 + $0x110] sm:$0xf]
    %v2732 = vld [vmem:[#allocation6 + $0x114] sm:$0xff]
    %v2733 = vld [vmem:[#allocation6 + $0x11c] sm:$0xf]
    %v2734 = vld [vmem:[#allocation6 + $0x120] sm:$0xff]
    %v2735 = vld [vmem:[#allocation6 + $0x128] sm:$0xf]
    %v2736 = vld [vmem:[#allocation6 + $0x12c] sm:$0xff]
    %v2737 = vld [vmem:[#allocation6 + $0x134] sm:$0xf]
    %v2738 = vld [vmem:[#allocation6 + $0x138] sm:$0xff]
    %v2739 = vld [vmem:[#allocation6 + $0x140] sm:$0xf]
    %v2740 = vld [vmem:[#allocation6 + $0x144] sm:$0xff]
    %v2741 = vld [vmem:[#allocation6 + $0x14c] sm:$0xf]
    %v2742 = vld [vmem:[#allocation6 + $0x150] sm:$0xff]
    %v2743 = vld [vmem:[#allocation6 + $0x158] sm:$0xf]
    %v2744 = vld [vmem:[#allocation6 + $0x15c] sm:$0xff]
    %v2745 = vld [vmem:[#allocation6 + $0x164] sm:$0xf]
    %v2746 = vld [vmem:[#allocation6 + $0x168] sm:$0xff]
    %v2747 = vld [vmem:[#allocation6 + $0x170] sm:$0xf]
    %v2748 = vld [vmem:[#allocation6 + $0x174] sm:$0xff]
    %v2749 = vld [vmem:[#allocation6 + $0x17c] sm:$0xf]
    %v2750 = vld [vmem:[#allocation6 + $0x180] sm:$0xff]
    %v2751 = vld [vmem:[#allocation6 + $0x188] sm:$0xf]
    %v2752 = vld [vmem:[#allocation6 + $0x18c] sm:$0xff]
    %v2753 = vld [vmem:[#allocation6 + $0x194] sm:$0xf]
    %v2754 = vld [vmem:[#allocation6 + $0x198] sm:$0xff]
    %v2755 = vld [vmem:[#allocation6 + $0x1a0] sm:$0xf]
    %v2756 = vld [vmem:[#allocation6 + $0x1a4] sm:$0xff]
    %v2757 = vld [vmem:[#allocation6 + $0x1ac] sm:$0xf]
    %v2758 = vld [vmem:[#allocation6 + $0x1b0] sm:$0xff]
    %v2759 = vld [vmem:[#allocation6 + $0x1b8] sm:$0xf]
    %v2760 = vld [vmem:[#allocation6 + $0x1bc] sm:$0xff]
    %v2761 = vld [vmem:[#allocation6 + $0x1c4] sm:$0xf]
    %v2762 = vld [vmem:[#allocation6 + $0x1c8] sm:$0xff]
    %v2763 = vld [vmem:[#allocation6 + $0x1d0] sm:$0xf]
    %v2764 = vld [vmem:[#allocation6 + $0x1d4] sm:$0xff]
    %v2765 = vld [vmem:[#allocation6 + $0x1dc] sm:$0xf]
    %v2766 = vld [vmem:[#allocation6 + $0x1e0] sm:$0xff]
    %v2767 = vld [vmem:[#allocation6 + $0x1e8] sm:$0xf]
    %v2768 = vld [vmem:[#allocation6 + $0x1ec] sm:$0xff]
    %v2769 = vld [vmem:[#allocation6 + $0x1f4] sm:$0xf]
    %v2770 = vld [vmem:[#allocation6 + $0x1f8] sm:$0xff]
    %v2771 = vld [vmem:[#allocation6 + $0x200] sm:$0xf]
    %v2772 = vld [vmem:[#allocation6 + $0x204] sm:$0xff]
    %v2773 = vld [vmem:[#allocation6 + $0x20c] sm:$0xf]
    %v2774 = vld [vmem:[#allocation6 + $0x210] sm:$0xff]
    %v2775 = vld [vmem:[#allocation6 + $0x218] sm:$0xf]
    %v2776 = vld [vmem:[#allocation6 + $0x21c] sm:$0xff]
    %v2777 = vld [vmem:[#allocation6 + $0x224] sm:$0xf]
    %v2778 = vld [vmem:[#allocation6 + $0x228] sm:$0xff]
    %v2779 = vld [vmem:[#allocation6 + $0x230] sm:$0xf]
    %v2780 = vld [vmem:[#allocation6 + $0x234] sm:$0xff]
    %v2781 = vld [vmem:[#allocation6 + $0x23c] sm:$0xf]
    %v2782 = vld [vmem:[#allocation6 + $0x240] sm:$0xff]
    %v2783 = vld [vmem:[#allocation6 + $0x248] sm:$0xf]
    %v2784 = vld [vmem:[#allocation6 + $0x24c] sm:$0xff]
    %v2785 = vld [vmem:[#allocation6 + $0x254] sm:$0xf]
    %v2786 = vld [vmem:[#allocation6 + $0x258] sm:$0xff]
    %v2787 = vld [vmem:[#allocation6 + $0x260] sm:$0xf]
    %v2788 = vld [vmem:[#allocation6 + $0x264] sm:$0xff]
    %v2789 = vld [vmem:[#allocation6 + $0x26c] sm:$0xf]
    %v2790 = vld [vmem:[#allocation6 + $0x270] sm:$0xff]
    %v2791 = vld [vmem:[#allocation6 + $0x278] sm:$0xf]
    %v2792 = vld [vmem:[#allocation6 + $0x27c] sm:$0xff]
    %v2793 = vld [vmem:[#allocation6 + $0x284] sm:$0xf]
    %v2794 = vld [vmem:[#allocation6 + $0x288] sm:$0xff]
    %v2795 = vld [vmem:[#allocation6 + $0x290] sm:$0xf]
    %v2796 = vld [vmem:[#allocation6 + $0x294] sm:$0xff]
    %v2797 = vld [vmem:[#allocation6 + $0x29c] sm:$0xf]
    %v2798 = vld [vmem:[#allocation6 + $0x2a0] sm:$0xff]
    %v2799 = vld [vmem:[#allocation6 + $0x2a8] sm:$0xf]
    %v2800 = vld [vmem:[#allocation6 + $0x2ac] sm:$0xff]
    %v2801 = vld [vmem:[#allocation6 + $0x2b4] sm:$0xf]
    %v2802 = vld [vmem:[#allocation6 + $0x2b8] sm:$0xff]
    %v2803 = vld [vmem:[#allocation6 + $0x2c0] sm:$0xf]
    %v2804 = vld [vmem:[#allocation6 + $0x2c4] sm:$0xff]
    %v2805 = vld [vmem:[#allocation6 + $0x2cc] sm:$0xf]
    %v2806 = vld [vmem:[#allocation6 + $0x2d0] sm:$0xff]
    %v2807 = vld [vmem:[#allocation6 + $0x2d8] sm:$0xf]
    %v2808 = vld [vmem:[#allocation6 + $0x2dc] sm:$0xff]
    %v2809 = vld [vmem:[#allocation6 + $0x2e4] sm:$0xf]
    %v2810 = vld [vmem:[#allocation6 + $0x2e8] sm:$0xff]
    %v2811 = vld [vmem:[#allocation6 + $0x2f0] sm:$0xf]
    %v2812 = vld [vmem:[#allocation6 + $0x2f4] sm:$0xff]
    %v2813 = vld [vmem:[#allocation6 + $0x2fc] sm:$0xf]
    %v2814 = vld [vmem:[%s6] sm:$0x7]
    %v2816 = vlaneseq
    %v2817 = vshrl.u32 %v2816, 7
    %v2818 = vsub.s32 0, %v2817
    %v2819 = vrot.slane %v2814, %v2818
    %v2820 = vlaneseq
    %v2821 = vshrl.u32 %v2820, 7
    %v2822 = vsub.s32 1, %v2821
    %v2823 = vrot.slane %v2814, %v2822
    %v2824 = vlaneseq
    %v2825 = vshrl.u32 %v2824, 7
    %v2826 = vsub.s32 2, %v2825
    %v2827 = vrot.slane %v2814, %v2826
    %v2959 = vunpack.c.l.b16 %v2686
    %v2960 = vunpack.c.h.b16 %v2686
    %v2961 = vunpack.c.l.b16 %v2687
    %v2962 = vunpack.c.l.b16 %v2688
    %v2963 = vunpack.c.h.b16 %v2688
    %v2964 = vunpack.c.l.b16 %v2689
    %v2965 = vunpack.c.l.b16 %v2690
    %v2966 = vunpack.c.h.b16 %v2690
    %v2967 = vunpack.c.l.b16 %v2691
    %v2968 = vunpack.c.l.b16 %v2692
    %v2969 = vunpack.c.h.b16 %v2692
    %v2970 = vunpack.c.l.b16 %v2693
    %v2971 = vunpack.c.l.b16 %v2694
    %v2972 = vunpack.c.h.b16 %v2694
    %v2973 = vunpack.c.l.b16 %v2695
    %v2974 = vunpack.c.l.b16 %v2696
    %v2975 = vunpack.c.h.b16 %v2696
    %v2976 = vunpack.c.l.b16 %v2697
    %v2977 = vunpack.c.l.b16 %v2698
    %v2978 = vunpack.c.h.b16 %v2698
    %v2979 = vunpack.c.l.b16 %v2699
    %v2980 = vunpack.c.l.b16 %v2700
    %v2981 = vunpack.c.h.b16 %v2700
    %v2982 = vunpack.c.l.b16 %v2701
    %v2983 = vunpack.c.l.b16 %v2702
    %v2984 = vunpack.c.h.b16 %v2702
    %v2985 = vunpack.c.l.b16 %v2703
    %v2986 = vunpack.c.l.b16 %v2704
    %v2987 = vunpack.c.h.b16 %v2704
    %v2988 = vunpack.c.l.b16 %v2705
    %v2989 = vunpack.c.l.b16 %v2706
    %v2990 = vunpack.c.h.b16 %v2706
    %v2991 = vunpack.c.l.b16 %v2707
    %v2992 = vunpack.c.l.b16 %v2708
    %v2993 = vunpack.c.h.b16 %v2708
    %v2994 = vunpack.c.l.b16 %v2709
    %v2995 = vunpack.c.l.b16 %v2710
    %v2996 = vunpack.c.h.b16 %v2710
    %v2997 = vunpack.c.l.b16 %v2711
    %v2998 = vunpack.c.l.b16 %v2712
    %v2999 = vunpack.c.h.b16 %v2712
    %v3000 = vunpack.c.l.b16 %v2713
    %v3001 = vunpack.c.l.b16 %v2714
    %v3002 = vunpack.c.h.b16 %v2714
    %v3003 = vunpack.c.l.b16 %v2715
    %v3004 = vunpack.c.l.b16 %v2716
    %v3005 = vunpack.c.h.b16 %v2716
    %v3006 = vunpack.c.l.b16 %v2717
    %v3007 = vunpack.c.l.b16 %v2718
    %v3008 = vunpack.c.h.b16 %v2718
    %v3009 = vunpack.c.l.b16 %v2719
    %v3010 = vunpack.c.l.b16 %v2720
    %v3011 = vunpack.c.h.b16 %v2720
    %v3012 = vunpack.c.l.b16 %v2721
    %v3013 = vunpack.c.l.b16 %v2722
    %v3014 = vunpack.c.h.b16 %v2722
    %v3015 = vunpack.c.l.b16 %v2723
    %v3016 = vunpack.c.l.b16 %v2724
    %v3017 = vunpack.c.h.b16 %v2724
    %v3018 = vunpack.c.l.b16 %v2725
    %v3019 = vunpack.c.l.b16 %v2726
    %v3020 = vunpack.c.h.b16 %v2726
    %v3021 = vunpack.c.l.b16 %v2727
    %v3022 = vunpack.c.l.b16 %v2728
    %v3023 = vunpack.c.h.b16 %v2728
    %v3024 = vunpack.c.l.b16 %v2729
    %v3025 = vunpack.c.l.b16 %v2730
    %v3026 = vunpack.c.h.b16 %v2730
    %v3027 = vunpack.c.l.b16 %v2731
    %v3028 = vunpack.c.l.b16 %v2732
    %v3029 = vunpack.c.h.b16 %v2732
    %v3030 = vunpack.c.l.b16 %v2733
    %v3031 = vunpack.c.l.b16 %v2734
    %v3032 = vunpack.c.h.b16 %v2734
    %v3033 = vunpack.c.l.b16 %v2735
    %v3034 = vunpack.c.l.b16 %v2736
    %v3035 = vunpack.c.h.b16 %v2736
    %v3036 = vunpack.c.l.b16 %v2737
    %v3037 = vunpack.c.l.b16 %v2738
    %v3038 = vunpack.c.h.b16 %v2738
    %v3039 = vunpack.c.l.b16 %v2739
    %v3040 = vunpack.c.l.b16 %v2740
    %v3041 = vunpack.c.h.b16 %v2740
    %v3042 = vunpack.c.l.b16 %v2741
    %v3043 = vunpack.c.l.b16 %v2742
    %v3044 = vunpack.c.h.b16 %v2742
    %v3045 = vunpack.c.l.b16 %v2743
    %v3046 = vunpack.c.l.b16 %v2744
    %v3047 = vunpack.c.h.b16 %v2744
    %v3048 = vunpack.c.l.b16 %v2745
    %v3049 = vunpack.c.l.b16 %v2746
    %v3050 = vunpack.c.h.b16 %v2746
    %v3051 = vunpack.c.l.b16 %v2747
    %v3052 = vunpack.c.l.b16 %v2748
    %v3053 = vunpack.c.h.b16 %v2748
    %v3054 = vunpack.c.l.b16 %v2749
    %v3055 = vunpack.c.l.b16 %v2750
    %v3056 = vunpack.c.h.b16 %v2750
    %v3057 = vunpack.c.l.b16 %v2751
    %v3058 = vunpack.c.l.b16 %v2752
    %v3059 = vunpack.c.h.b16 %v2752
    %v3060 = vunpack.c.l.b16 %v2753
    %v3061 = vunpack.c.l.b16 %v2754
    %v3062 = vunpack.c.h.b16 %v2754
    %v3063 = vunpack.c.l.b16 %v2755
    %v3064 = vunpack.c.l.b16 %v2756
    %v3065 = vunpack.c.h.b16 %v2756
    %v3066 = vunpack.c.l.b16 %v2757
    %v3067 = vunpack.c.l.b16 %v2758
    %v3068 = vunpack.c.h.b16 %v2758
    %v3069 = vunpack.c.l.b16 %v2759
    %v3070 = vunpack.c.l.b16 %v2760
    %v3071 = vunpack.c.h.b16 %v2760
    %v3072 = vunpack.c.l.b16 %v2761
    %v3073 = vunpack.c.l.b16 %v2762
    %v3074 = vunpack.c.h.b16 %v2762
    %v3075 = vunpack.c.l.b16 %v2763
    %v3076 = vunpack.c.l.b16 %v2764
    %v3077 = vunpack.c.h.b16 %v2764
    %v3078 = vunpack.c.l.b16 %v2765
    %v3079 = vunpack.c.l.b16 %v2766
    %v3080 = vunpack.c.h.b16 %v2766
    %v3081 = vunpack.c.l.b16 %v2767
    %v3082 = vunpack.c.l.b16 %v2768
    %v3083 = vunpack.c.h.b16 %v2768
    %v3084 = vunpack.c.l.b16 %v2769
    %v3085 = vunpack.c.l.b16 %v2770
    %v3086 = vunpack.c.h.b16 %v2770
    %v3087 = vunpack.c.l.b16 %v2771
    %v3088 = vunpack.c.l.b16 %v2772
    %v3089 = vunpack.c.h.b16 %v2772
    %v3090 = vunpack.c.l.b16 %v2773
    %v3091 = vunpack.c.l.b16 %v2774
    %v3092 = vunpack.c.h.b16 %v2774
    %v3093 = vunpack.c.l.b16 %v2775
    %v3094 = vunpack.c.l.b16 %v2776
    %v3095 = vunpack.c.h.b16 %v2776
    %v3096 = vunpack.c.l.b16 %v2777
    %v3097 = vunpack.c.l.b16 %v2778
    %v3098 = vunpack.c.h.b16 %v2778
    %v3099 = vunpack.c.l.b16 %v2779
    %v3100 = vunpack.c.l.b16 %v2780
    %v3101 = vunpack.c.h.b16 %v2780
    %v3102 = vunpack.c.l.b16 %v2781
    %v3103 = vunpack.c.l.b16 %v2782
    %v3104 = vunpack.c.h.b16 %v2782
    %v3105 = vunpack.c.l.b16 %v2783
    %v3106 = vunpack.c.l.b16 %v2784
    %v3107 = vunpack.c.h.b16 %v2784
    %v3108 = vunpack.c.l.b16 %v2785
    %v3109 = vunpack.c.l.b16 %v2786
    %v3110 = vunpack.c.h.b16 %v2786
    %v3111 = vunpack.c.l.b16 %v2787
    %v3112 = vunpack.c.l.b16 %v2788
    %v3113 = vunpack.c.h.b16 %v2788
    %v3114 = vunpack.c.l.b16 %v2789
    %v3115 = vunpack.c.l.b16 %v2790
    %v3116 = vunpack.c.h.b16 %v2790
    %v3117 = vunpack.c.l.b16 %v2791
    %v3118 = vunpack.c.l.b16 %v2792
    %v3119 = vunpack.c.h.b16 %v2792
    %v3120 = vunpack.c.l.b16 %v2793
    %v3121 = vunpack.c.l.b16 %v2794
    %v3122 = vunpack.c.h.b16 %v2794
    %v3123 = vunpack.c.l.b16 %v2795
    %v3124 = vunpack.c.l.b16 %v2796
    %v3125 = vunpack.c.h.b16 %v2796
    %v3126 = vunpack.c.l.b16 %v2797
    %v3127 = vunpack.c.l.b16 %v2798
    %v3128 = vunpack.c.h.b16 %v2798
    %v3129 = vunpack.c.l.b16 %v2799
    %v3130 = vunpack.c.l.b16 %v2800
    %v3131 = vunpack.c.h.b16 %v2800
    %v3132 = vunpack.c.l.b16 %v2801
    %v3133 = vunpack.c.l.b16 %v2802
    %v3134 = vunpack.c.h.b16 %v2802
    %v3135 = vunpack.c.l.b16 %v2803
    %v3136 = vunpack.c.l.b16 %v2804
    %v3137 = vunpack.c.h.b16 %v2804
    %v3138 = vunpack.c.l.b16 %v2805
    %v3139 = vunpack.c.l.b16 %v2806
    %v3140 = vunpack.c.h.b16 %v2806
    %v3141 = vunpack.c.l.b16 %v2807
    %v3142 = vunpack.c.l.b16 %v2808
    %v3143 = vunpack.c.h.b16 %v2808
    %v3144 = vunpack.c.l.b16 %v2809
    %v3145 = vunpack.c.l.b16 %v2810
    %v3146 = vunpack.c.h.b16 %v2810
    %v3147 = vunpack.c.l.b16 %v2811
    %v3148 = vunpack.c.l.b16 %v2812
    %v3149 = vunpack.c.h.b16 %v2812
    %v3150 = vunpack.c.l.b16 %v2813
    %v3151 = vpack.c.b16 %v2962, %v2959
    %v3152 = vpack.c.b16 %v2963, %v2960
    %v3153 = vpack.c.b16 %v2964, %v2961
    %v3154 = vpack.c.b16 %v2968, %v2965
    %v3155 = vpack.c.b16 %v2969, %v2966
    %v3156 = vpack.c.b16 %v2970, %v2967
    %v3157 = vpack.c.b16 %v2974, %v2971
    %v3158 = vpack.c.b16 %v2975, %v2972
    %v3159 = vpack.c.b16 %v2976, %v2973
    %v3160 = vpack.c.b16 %v2980, %v2977
    %v3161 = vpack.c.b16 %v2981, %v2978
    %v3162 = vpack.c.b16 %v2982, %v2979
    %v3163 = vpack.c.b16 %v2986, %v2983
    %v3164 = vpack.c.b16 %v2987, %v2984
    %v3165 = vpack.c.b16 %v2988, %v2985
    %v3166 = vpack.c.b16 %v2992, %v2989
    %v3167 = vpack.c.b16 %v2993, %v2990
    %v3168 = vpack.c.b16 %v2994, %v2991
    %v3169 = vpack.c.b16 %v2998, %v2995
    %v3170 = vpack.c.b16 %v2999, %v2996
    %v3171 = vpack.c.b16 %v3000, %v2997
    %v3172 = vpack.c.b16 %v3004, %v3001
    %v3173 = vpack.c.b16 %v3005, %v3002
    %v3174 = vpack.c.b16 %v3006, %v3003
    %v3175 = vpack.c.b16 %v3010, %v3007
    %v3176 = vpack.c.b16 %v3011, %v3008
    %v3177 = vpack.c.b16 %v3012, %v3009
    %v3178 = vpack.c.b16 %v3016, %v3013
    %v3179 = vpack.c.b16 %v3017, %v3014
    %v3180 = vpack.c.b16 %v3018, %v3015
    %v3181 = vpack.c.b16 %v3022, %v3019
    %v3182 = vpack.c.b16 %v3023, %v3020
    %v3183 = vpack.c.b16 %v3024, %v3021
    %v3184 = vpack.c.b16 %v3028, %v3025
    %v3185 = vpack.c.b16 %v3029, %v3026
    %v3186 = vpack.c.b16 %v3030, %v3027
    %v3187 = vpack.c.b16 %v3034, %v3031
    %v3188 = vpack.c.b16 %v3035, %v3032
    %v3189 = vpack.c.b16 %v3036, %v3033
    %v3190 = vpack.c.b16 %v3040, %v3037
    %v3191 = vpack.c.b16 %v3041, %v3038
    %v3192 = vpack.c.b16 %v3042, %v3039
    %v3193 = vpack.c.b16 %v3046, %v3043
    %v3194 = vpack.c.b16 %v3047, %v3044
    %v3195 = vpack.c.b16 %v3048, %v3045
    %v3196 = vpack.c.b16 %v3052, %v3049
    %v3197 = vpack.c.b16 %v3053, %v3050
    %v3198 = vpack.c.b16 %v3054, %v3051
    %v3199 = vpack.c.b16 %v3058, %v3055
    %v3200 = vpack.c.b16 %v3059, %v3056
    %v3201 = vpack.c.b16 %v3060, %v3057
    %v3202 = vpack.c.b16 %v3064, %v3061
    %v3203 = vpack.c.b16 %v3065, %v3062
    %v3204 = vpack.c.b16 %v3066, %v3063
    %v3205 = vpack.c.b16 %v3070, %v3067
    %v3206 = vpack.c.b16 %v3071, %v3068
    %v3207 = vpack.c.b16 %v3072, %v3069
    %v3208 = vpack.c.b16 %v3076, %v3073
    %v3209 = vpack.c.b16 %v3077, %v3074
    %v3210 = vpack.c.b16 %v3078, %v3075
    %v3211 = vpack.c.b16 %v3082, %v3079
    %v3212 = vpack.c.b16 %v3083, %v3080
    %v3213 = vpack.c.b16 %v3084, %v3081
    %v3214 = vpack.c.b16 %v3088, %v3085
    %v3215 = vpack.c.b16 %v3089, %v3086
    %v3216 = vpack.c.b16 %v3090, %v3087
    %v3217 = vpack.c.b16 %v3094, %v3091
    %v3218 = vpack.c.b16 %v3095, %v3092
    %v3219 = vpack.c.b16 %v3096, %v3093
    %v3220 = vpack.c.b16 %v3100, %v3097
    %v3221 = vpack.c.b16 %v3101, %v3098
    %v3222 = vpack.c.b16 %v3102, %v3099
    %v3223 = vpack.c.b16 %v3106, %v3103
    %v3224 = vpack.c.b16 %v3107, %v3104
    %v3225 = vpack.c.b16 %v3108, %v3105
    %v3226 = vpack.c.b16 %v3112, %v3109
    %v3227 = vpack.c.b16 %v3113, %v3110
    %v3228 = vpack.c.b16 %v3114, %v3111
    %v3229 = vpack.c.b16 %v3118, %v3115
    %v3230 = vpack.c.b16 %v3119, %v3116
    %v3231 = vpack.c.b16 %v3120, %v3117
    %v3232 = vpack.c.b16 %v3124, %v3121
    %v3233 = vpack.c.b16 %v3125, %v3122
    %v3234 = vpack.c.b16 %v3126, %v3123
    %v3235 = vpack.c.b16 %v3130, %v3127
    %v3236 = vpack.c.b16 %v3131, %v3128
    %v3237 = vpack.c.b16 %v3132, %v3129
    %v3238 = vpack.c.b16 %v3136, %v3133
    %v3239 = vpack.c.b16 %v3137, %v3134
    %v3240 = vpack.c.b16 %v3138, %v3135
    %v3241 = vpack.c.b16 %v3142, %v3139
    %v3242 = vpack.c.b16 %v3143, %v3140
    %v3243 = vpack.c.b16 %v3144, %v3141
    %v3244 = vpack.c.b16 %v3148, %v3145
    %v3245 = vpack.c.b16 %v3149, %v3146
    %v3246 = vpack.c.b16 %v3150, %v3147
    %3343 = vmatprep.subr.bf16.mxu0 %v3173
    %3344 = vmatpush1.bf16.msra.mxu0 %v3172
    %3345 = vmatprep.subr.bf16.mxu0 %v3170
    %3346 = vmatpush1.bf16.msra.mxu0 %v3169
    %3347 = vmatprep.subr.bf16.mxu0 %v3167
    %3348 = vmatpush1.bf16.msra.mxu0 %v3166
    %3349 = vmatprep.subr.bf16.mxu0 %v3164
    %3350 = vmatpush1.bf16.msra.mxu0 %v3163
    %3351 = vmatprep.subr.bf16.mxu0 %v3161
    %3352 = vmatpush1.bf16.msra.mxu0 %v3160
    %3353 = vmatprep.subr.bf16.mxu0 %v3158
    %3354 = vmatpush1.bf16.msra.mxu0 %v3157
    %3355 = vmatprep.subr.bf16.mxu0 %v3155
    %3356 = vmatpush1.bf16.msra.mxu0 %v3154
    %3357 = vmatprep.subr.bf16.mxu0 %v3152
    %3358 = vmatpush1.bf16.msra.mxu0 %v3151
    %3359 = vmatprep.subr.bf16.mxu0 %v3197
    %3360 = vmatpush2.bf16.msra.mxu0 %v3196
    %3361 = vmatprep.subr.bf16.mxu0 %v3194
    %3362 = vmatpush2.bf16.msra.mxu0 %v3193
    %3363 = vmatprep.subr.bf16.mxu0 %v3191
    %3364 = vmatpush2.bf16.msra.mxu0 %v3190
    %3365 = vmatprep.subr.bf16.mxu0 %v3188
    %3366 = vmatpush2.bf16.msra.mxu0 %v3187
    %3367 = vmatprep.subr.bf16.mxu0 %v3185
    %3368 = vmatpush2.bf16.msra.mxu0 %v3184
    %3369 = vmatprep.subr.bf16.mxu0 %v3182
    %3370 = vmatpush2.bf16.msra.mxu0 %v3181
    %3371 = vmatprep.subr.bf16.mxu0 %v3179
    %3372 = vmatpush2.bf16.msra.mxu0 %v3178
    %3373 = vmatprep.subr.bf16.mxu0 %v3176
    %3374 = vmatpush2.bf16.msra.mxu0 %v3175
    %3375 = vmatprep.mubr.bf16.mxu0 %v2683
    %3376 = vmatmul.mubr.bf16.gmra.mxu0 %v2682
    %v3377 = vpop.f32.mrf.mxu0
    %v3378 = vadd.f32 %v2819, %v3377
    %v3379 = vpop.f32.mrf.mxu0
    %v3380 = vadd.f32 %v2823, %v3379
    %v3381 = vpop.f32.mrf.mxu0
    %v3382 = vadd.f32 %v2819, %v3381
    %v3383 = vpop.f32.mrf.mxu0
    %v3384 = vadd.f32 %v2823, %v3383
    %3385 = vdwg.mxu0
    %3386 = vmatprep.subr.bf16.mxu0 %v3221
    %3387 = vmatpush1.bf16.msra.mxu0 %v3220
    %3388 = vmatprep.subr.bf16.mxu0 %v3218
    %3389 = vmatpush1.bf16.msra.mxu0 %v3217
    %3390 = vmatprep.subr.bf16.mxu0 %v3215
    %3391 = vmatpush1.bf16.msra.mxu0 %v3214
    %3392 = vmatprep.subr.bf16.mxu0 %v3212
    %3393 = vmatpush1.bf16.msra.mxu0 %v3211
    %3394 = vmatprep.subr.bf16.mxu0 %v3209
    %3395 = vmatpush1.bf16.msra.mxu0 %v3208
    %3396 = vmatprep.subr.bf16.mxu0 %v3206
    %3397 = vmatpush1.bf16.msra.mxu0 %v3205
    %3398 = vmatprep.subr.bf16.mxu0 %v3203
    %3399 = vmatpush1.bf16.msra.mxu0 %v3202
    %3400 = vmatprep.subr.bf16.mxu0 %v3200
    %3401 = vmatpush1.bf16.msra.mxu0 %v3199
    %3402 = vmatprep.subr.bf16.mxu0 %v3245
    %3403 = vmatpush2.bf16.msra.mxu0 %v3244
    %3404 = vmatprep.subr.bf16.mxu0 %v3242
    %3405 = vmatpush2.bf16.msra.mxu0 %v3241
    %3406 = vmatprep.subr.bf16.mxu0 %v3239
    %3407 = vmatpush2.bf16.msra.mxu0 %v3238
    %3408 = vmatprep.subr.bf16.mxu0 %v3236
    %3409 = vmatpush2.bf16.msra.mxu0 %v3235
    %3410 = vmatprep.subr.bf16.mxu0 %v3233
    %3411 = vmatpush2.bf16.msra.mxu0 %v3232
    %3412 = vmatprep.subr.bf16.mxu0 %v3230
    %3413 = vmatpush2.bf16.msra.mxu0 %v3229
    %3414 = vmatprep.subr.bf16.mxu0 %v3227
    %3415 = vmatpush2.bf16.msra.mxu0 %v3226
    %3416 = vmatprep.subr.bf16.mxu0 %v3224
    %3417 = vmatpush2.bf16.msra.mxu0 %v3223
    %3418 = vmatprep.mubr.bf16.mxu0 %v2685
    %3419 = vmatmul.mubr.bf16.gmra.mxu0 %v2684
    %v3420 = vpop.f32.mrf.mxu0
    %v3421 = vadd.f32 %v3378, %v3420
    %v3422 = vpop.f32.mrf.mxu0
    %v3423 = vadd.f32 %v3380, %v3422
    %v3424 = vpop.f32.mrf.mxu0
    %v3425 = vadd.f32 %v3382, %v3424
    %v3426 = vpop.f32.mrf.mxu0
    %v3427 = vadd.f32 %v3384, %v3426
    %3428 = vdwg.mxu0
    %3429 = vmatprep.subr.bf16.mxu0 0
    %3430 = vmatpush1.bf16.msra.mxu0 %v3174
    %3431 = vmatprep.subr.bf16.mxu0 0
    %3432 = vmatpush1.bf16.msra.mxu0 %v3171
    %3433 = vmatprep.subr.bf16.mxu0 0
    %3434 = vmatpush1.bf16.msra.mxu0 %v3168
    %3435 = vmatprep.subr.bf16.mxu0 0
    %3436 = vmatpush1.bf16.msra.mxu0 %v3165
    %3437 = vmatprep.subr.bf16.mxu0 0
    %3438 = vmatpush1.bf16.msra.mxu0 %v3162
    %3439 = vmatprep.subr.bf16.mxu0 0
    %3440 = vmatpush1.bf16.msra.mxu0 %v3159
    %3441 = vmatprep.subr.bf16.mxu0 0
    %3442 = vmatpush1.bf16.msra.mxu0 %v3156
    %3443 = vmatprep.subr.bf16.mxu0 0
    %3444 = vmatpush1.bf16.msra.mxu0 %v3153
    %3445 = vmatprep.subr.bf16.mxu0 0
    %3446 = vmatpush2.bf16.msra.mxu0 %v3198
    %3447 = vmatprep.subr.bf16.mxu0 0
    %3448 = vmatpush2.bf16.msra.mxu0 %v3195
    %3449 = vmatprep.subr.bf16.mxu0 0
    %3450 = vmatpush2.bf16.msra.mxu0 %v3192
    %3451 = vmatprep.subr.bf16.mxu0 0
    %3452 = vmatpush2.bf16.msra.mxu0 %v3189
    %3453 = vmatprep.subr.bf16.mxu0 0
    %3454 = vmatpush2.bf16.msra.mxu0 %v3186
    %3455 = vmatprep.subr.bf16.mxu0 0
    %3456 = vmatpush2.bf16.msra.mxu0 %v3183
    %3457 = vmatprep.subr.bf16.mxu0 0
    %3458 = vmatpush2.bf16.msra.mxu0 %v3180
    %3459 = vmatprep.subr.bf16.mxu0 0
    %3460 = vmatpush2.bf16.msra.mxu0 %v3177
    %3461 = vmatprep.mubr.bf16.mxu0 %v2683
    %3462 = vmatmul.mubr.bf16.gmra.mxu0 %v2682
    %v3463 = vpop.f32.mrf.mxu0
    %v3464 = vadd.f32 %v2827, %v3463
    %v3465 = vpop.f32.mrf.mxu0
    %v3466 = vpop.f32.mrf.mxu0
    %v3467 = vadd.f32 %v2827, %v3466
    %v3468 = vpop.f32.mrf.mxu0
    %3469 = vdwg.mxu0
    %3470 = vmatprep.subr.bf16.mxu0 0
    %3471 = vmatpush1.bf16.msra.mxu0 %v3222
    %3472 = vmatprep.subr.bf16.mxu0 0
    %3473 = vmatpush1.bf16.msra.mxu0 %v3219
    %3474 = vmatprep.subr.bf16.mxu0 0
    %3475 = vmatpush1.bf16.msra.mxu0 %v3216
    %3476 = vmatprep.subr.bf16.mxu0 0
    %3477 = vmatpush1.bf16.msra.mxu0 %v3213
    %3478 = vmatprep.subr.bf16.mxu0 0
    %3479 = vmatpush1.bf16.msra.mxu0 %v3210
    %3480 = vmatprep.subr.bf16.mxu0 0
    %3481 = vmatpush1.bf16.msra.mxu0 %v3207
    %3482 = vmatprep.subr.bf16.mxu0 0
    %3483 = vmatpush1.bf16.msra.mxu0 %v3204
    %3484 = vmatprep.subr.bf16.mxu0 0
    %3485 = vmatpush1.bf16.msra.mxu0 %v3201
    %3486 = vmatprep.subr.bf16.mxu0 0
    %3487 = vmatpush2.bf16.msra.mxu0 %v3246
    %3488 = vmatprep.subr.bf16.mxu0 0
    %3489 = vmatpush2.bf16.msra.mxu0 %v3243
    %3490 = vmatprep.subr.bf16.mxu0 0
    %3491 = vmatpush2.bf16.msra.mxu0 %v3240
    %3492 = vmatprep.subr.bf16.mxu0 0
    %3493 = vmatpush2.bf16.msra.mxu0 %v3237
    %3494 = vmatprep.subr.bf16.mxu0 0
    %3495 = vmatpush2.bf16.msra.mxu0 %v3234
    %3496 = vmatprep.subr.bf16.mxu0 0
    %3497 = vmatpush2.bf16.msra.mxu0 %v3231
    %3498 = vmatprep.subr.bf16.mxu0 0
    %3499 = vmatpush2.bf16.msra.mxu0 %v3228
    %3500 = vmatprep.subr.bf16.mxu0 0
    %3501 = vmatpush2.bf16.msra.mxu0 %v3225
    %3502 = vmatprep.mubr.bf16.mxu0 %v2685
    %3503 = vmatmul.mubr.bf16.gmra.mxu0 %v2684
    %v3504 = vpop.f32.mrf.mxu0
    %v3505 = vadd.f32 %v3464, %v3504
    %v3506 = vpop.f32.mrf.mxu0
    %v3507 = vpop.f32.mrf.mxu0
    %v3508 = vadd.f32 %v3467, %v3507
    %v3509 = vpop.f32.mrf.mxu0
    %3510 = vdwg.mxu0
    %vm3511 = vcmp.ge.f32.partialorder %v3421, 0.0
    %vm3512 = vcmp.ge.f32.partialorder %v3423, 0.0
    %vm3513 = vcmp.ge.f32.partialorder %v3505, 0.0
    %vm3514 = vcmp.ge.f32.partialorder %v3425, 0.0
    %vm3515 = vcmp.ge.f32.partialorder %v3427, 0.0
    %vm3516 = vcmp.ge.f32.partialorder %v3508, 0.0
    %v3517 = vmul.f32 %v3421, 0.01
    %v3518 = vmul.f32 %v3423, 0.01
    %v3519 = vmul.f32 %v3505, 0.01
    %v3520 = vmul.f32 %v3425, 0.01
    %v3521 = vmul.f32 %v3427, 0.01
    %v3522 = vmul.f32 %v3508, 0.01
    %v3523 = vsel %vm3511, %v3421, %v3517
    %v3524 = vsel %vm3512, %v3423, %v3518
    %v3525 = vsel %vm3513, %v3505, %v3519
    %v3526 = vsel %vm3514, %v3425, %v3520
    %v3527 = vsel %vm3515, %v3427, %v3521
    %v3528 = vsel %vm3516, %v3508, %v3522
    %v3529 = vpack.c.bf16 %v3526, %v3523
    %v3530 = vpack.c.bf16 %v3527, %v3524
    %v3531 = vpack.c.bf16 %v3528, %v3525
    %v3532 = vld [vmem:[#allocation7] sm:$0xf]
    %v3533 = vld [vmem:[#allocation7 + $0x4] sm:$0xf]
    %v3534 = vld [vmem:[#allocation7 + $0x8] sm:$0xf]
    %v3535 = vld [vmem:[#allocation7 + $0xc] sm:$0xf]
    %v3536 = vld [vmem:[#allocation7 + $0x10] sm:$0xf]
    %v3537 = vld [vmem:[#allocation7 + $0x14] sm:$0xf]
    %v3538 = vld [vmem:[#allocation7 + $0x18] sm:$0xf]
    %v3539 = vld [vmem:[#allocation7 + $0x1c] sm:$0xf]
    %v3540 = vld [vmem:[#allocation7 + $0x20] sm:$0xf]
    %v3541 = vld [vmem:[#allocation7 + $0x24] sm:$0xf]
    %v3542 = vld [vmem:[#allocation7 + $0x28] sm:$0xf]
    %v3543 = vld [vmem:[#allocation7 + $0x2c] sm:$0xf]
    %v3544 = vld [vmem:[#allocation7 + $0x30] sm:$0xf]
    %v3545 = vld [vmem:[#allocation7 + $0x34] sm:$0xf]
    %v3546 = vld [vmem:[#allocation7 + $0x38] sm:$0xf]
    %v3547 = vld [vmem:[#allocation7 + $0x3c] sm:$0xf]
    %v3548 = vld [vmem:[#allocation7 + $0x40] sm:$0xf]
    %v3549 = vld [vmem:[#allocation7 + $0x44] sm:$0xf]
    %v3550 = vld [vmem:[#allocation7 + $0x48] sm:$0xf]
    %v3551 = vld [vmem:[#allocation7 + $0x4c] sm:$0xf]
    %v3552 = vld [vmem:[#allocation7 + $0x50] sm:$0xf]
    %v3553 = vld [vmem:[#allocation7 + $0x54] sm:$0xf]
    %v3554 = vld [vmem:[#allocation7 + $0x58] sm:$0xf]
    %v3555 = vld [vmem:[#allocation7 + $0x5c] sm:$0xf]
    %v3556 = vld [vmem:[#allocation7 + $0x60] sm:$0xf]
    %v3557 = vld [vmem:[#allocation7 + $0x64] sm:$0xf]
    %v3558 = vld [vmem:[#allocation7 + $0x68] sm:$0xf]
    %v3559 = vld [vmem:[#allocation7 + $0x6c] sm:$0xf]
    %v3560 = vld [vmem:[#allocation7 + $0x70] sm:$0xf]
    %v3561 = vld [vmem:[#allocation7 + $0x74] sm:$0xf]
    %v3562 = vld [vmem:[#allocation7 + $0x78] sm:$0xf]
    %v3563 = vld [vmem:[#allocation7 + $0x7c] sm:$0xf]
    %v3564 = vld [vmem:[#allocation7 + $0x80] sm:$0xf]
    %v3565 = vld [vmem:[#allocation7 + $0x84] sm:$0xf]
    %v3566 = vld [vmem:[#allocation7 + $0x88] sm:$0xf]
    %v3567 = vld [vmem:[#allocation7 + $0x8c] sm:$0xf]
    %v3568 = vld [vmem:[#allocation7 + $0x90] sm:$0xf]
    %v3569 = vld [vmem:[#allocation7 + $0x94] sm:$0xf]
    %v3570 = vld [vmem:[#allocation7 + $0x98] sm:$0xf]
    %v3571 = vld [vmem:[#allocation7 + $0x9c] sm:$0xf]
    %v3572 = vld [vmem:[#allocation7 + $0xa0] sm:$0xf]
    %v3573 = vld [vmem:[#allocation7 + $0xa4] sm:$0xf]
    %v3574 = vld [vmem:[#allocation7 + $0xa8] sm:$0xf]
    %v3575 = vld [vmem:[#allocation7 + $0xac] sm:$0xf]
    %v3576 = vld [vmem:[#allocation7 + $0xb0] sm:$0xf]
    %v3577 = vld [vmem:[#allocation7 + $0xb4] sm:$0xf]
    %v3578 = vld [vmem:[#allocation7 + $0xb8] sm:$0xf]
    %v3579 = vld [vmem:[#allocation7 + $0xbc] sm:$0xf]
    %v3580 = vld [vmem:[%s8] sm:$0x1]
    %v3582 = vlaneseq
    %v3583 = vshrl.u32 %v3582, 7
    %v3584 = vsub.s32 0, %v3583
    %v3585 = vrot.slane %v3580, %v3584
    %v3635 = vunpack.c.l.b16 %v3532
    %v3636 = vunpack.c.l.b16 %v3533
    %v3637 = vunpack.c.l.b16 %v3534
    %v3638 = vunpack.c.l.b16 %v3535
    %v3639 = vunpack.c.l.b16 %v3536
    %v3640 = vunpack.c.l.b16 %v3537
    %v3641 = vunpack.c.l.b16 %v3538
    %v3642 = vunpack.c.l.b16 %v3539
    %v3643 = vunpack.c.l.b16 %v3540
    %v3644 = vunpack.c.l.b16 %v3541
    %v3645 = vunpack.c.l.b16 %v3542
    %v3646 = vunpack.c.l.b16 %v3543
    %v3647 = vunpack.c.l.b16 %v3544
    %v3648 = vunpack.c.l.b16 %v3545
    %v3649 = vunpack.c.l.b16 %v3546
    %v3650 = vunpack.c.l.b16 %v3547
    %v3651 = vunpack.c.l.b16 %v3548
    %v3652 = vunpack.c.l.b16 %v3549
    %v3653 = vunpack.c.l.b16 %v3550
    %v3654 = vunpack.c.l.b16 %v3551
    %v3655 = vunpack.c.l.b16 %v3552
    %v3656 = vunpack.c.l.b16 %v3553
    %v3657 = vunpack.c.l.b16 %v3554
    %v3658 = vunpack.c.l.b16 %v3555
    %v3659 = vunpack.c.l.b16 %v3556
    %v3660 = vunpack.c.l.b16 %v3557
    %v3661 = vunpack.c.l.b16 %v3558
    %v3662 = vunpack.c.l.b16 %v3559
    %v3663 = vunpack.c.l.b16 %v3560
    %v3664 = vunpack.c.l.b16 %v3561
    %v3665 = vunpack.c.l.b16 %v3562
    %v3666 = vunpack.c.l.b16 %v3563
    %v3667 = vunpack.c.l.b16 %v3564
    %v3668 = vunpack.c.l.b16 %v3565
    %v3669 = vunpack.c.l.b16 %v3566
    %v3670 = vunpack.c.l.b16 %v3567
    %v3671 = vunpack.c.l.b16 %v3568
    %v3672 = vunpack.c.l.b16 %v3569
    %v3673 = vunpack.c.l.b16 %v3570
    %v3674 = vunpack.c.l.b16 %v3571
    %v3675 = vunpack.c.l.b16 %v3572
    %v3676 = vunpack.c.l.b16 %v3573
    %v3677 = vunpack.c.l.b16 %v3574
    %v3678 = vunpack.c.l.b16 %v3575
    %v3679 = vunpack.c.l.b16 %v3576
    %v3680 = vunpack.c.l.b16 %v3577
    %v3681 = vunpack.c.l.b16 %v3578
    %v3682 = vunpack.c.l.b16 %v3579
    %v3683 = vpack.c.b16 %v3636, %v3635
    %v3684 = vpack.c.b16 %v3638, %v3637
    %v3685 = vpack.c.b16 %v3640, %v3639
    %v3686 = vpack.c.b16 %v3642, %v3641
    %v3687 = vpack.c.b16 %v3644, %v3643
    %v3688 = vpack.c.b16 %v3646, %v3645
    %v3689 = vpack.c.b16 %v3648, %v3647
    %v3690 = vpack.c.b16 %v3650, %v3649
    %v3691 = vpack.c.b16 %v3652, %v3651
    %v3692 = vpack.c.b16 %v3654, %v3653
    %v3693 = vpack.c.b16 %v3656, %v3655
    %v3694 = vpack.c.b16 %v3658, %v3657
    %v3695 = vpack.c.b16 %v3660, %v3659
    %v3696 = vpack.c.b16 %v3662, %v3661
    %v3697 = vpack.c.b16 %v3664, %v3663
    %v3698 = vpack.c.b16 %v3666, %v3665
    %v3699 = vpack.c.b16 %v3668, %v3667
    %v3700 = vpack.c.b16 %v3670, %v3669
    %v3701 = vpack.c.b16 %v3672, %v3671
    %v3702 = vpack.c.b16 %v3674, %v3673
    %v3703 = vpack.c.b16 %v3676, %v3675
    %v3704 = vpack.c.b16 %v3678, %v3677
    %v3705 = vpack.c.b16 %v3680, %v3679
    %v3706 = vpack.c.b16 %v3682, %v3681
    %3731 = vmatprep.subr.bf16.mxu0 0
    %3732 = vmatpush1.bf16.msra.mxu0 %v3690
    %3733 = vmatprep.subr.bf16.mxu0 0
    %3734 = vmatpush1.bf16.msra.mxu0 %v3689
    %3735 = vmatprep.subr.bf16.mxu0 0
    %3736 = vmatpush1.bf16.msra.mxu0 %v3688
    %3737 = vmatprep.subr.bf16.mxu0 0
    %3738 = vmatpush1.bf16.msra.mxu0 %v3687
    %3739 = vmatprep.subr.bf16.mxu0 0
    %3740 = vmatpush1.bf16.msra.mxu0 %v3686
    %3741 = vmatprep.subr.bf16.mxu0 0
    %3742 = vmatpush1.bf16.msra.mxu0 %v3685
    %3743 = vmatprep.subr.bf16.mxu0 0
    %3744 = vmatpush1.bf16.msra.mxu0 %v3684
    %3745 = vmatprep.subr.bf16.mxu0 0
    %3746 = vmatpush1.bf16.msra.mxu0 %v3683
    %3747 = vmatprep.subr.bf16.mxu0 0
    %3748 = vmatpush2.bf16.msra.mxu0 %v3698
    %3749 = vmatprep.subr.bf16.mxu0 0
    %3750 = vmatpush2.bf16.msra.mxu0 %v3697
    %3751 = vmatprep.subr.bf16.mxu0 0
    %3752 = vmatpush2.bf16.msra.mxu0 %v3696
    %3753 = vmatprep.subr.bf16.mxu0 0
    %3754 = vmatpush2.bf16.msra.mxu0 %v3695
    %3755 = vmatprep.subr.bf16.mxu0 0
    %3756 = vmatpush2.bf16.msra.mxu0 %v3694
    %3757 = vmatprep.subr.bf16.mxu0 0
    %3758 = vmatpush2.bf16.msra.mxu0 %v3693
    %3759 = vmatprep.subr.bf16.mxu0 0
    %3760 = vmatpush2.bf16.msra.mxu0 %v3692
    %3761 = vmatprep.subr.bf16.mxu0 0
    %3762 = vmatpush2.bf16.msra.mxu0 %v3691
    %3763 = vmatprep.mubr.bf16.mxu0 %v3530
    %3764 = vmatmul.mubr.bf16.gmra.mxu0 %v3529
    %v3765 = vpop.f32.mrf.mxu0
    %v3766 = vadd.f32 %v3585, %v3765
    %v3767 = vpop.f32.mrf.mxu0
    %v3768 = vpop.f32.mrf.mxu0
    %v3769 = vadd.f32 %v3585, %v3768
    %v3770 = vpop.f32.mrf.mxu0
    %3771 = vdwg.mxu0
    %3772 = vmatprep.subr.bf16.mxu0 0
    %3773 = vmatpush1.bf16.msra.mxu0 %v3706
    %3774 = vmatprep.subr.bf16.mxu0 0
    %3775 = vmatpush1.bf16.msra.mxu0 %v3705
    %3776 = vmatprep.subr.bf16.mxu0 0
    %3777 = vmatpush1.bf16.msra.mxu0 %v3704
    %3778 = vmatprep.subr.bf16.mxu0 0
    %3779 = vmatpush1.bf16.msra.mxu0 %v3703
    %3780 = vmatprep.subr.bf16.mxu0 0
    %3781 = vmatpush1.bf16.msra.mxu0 %v3702
    %3782 = vmatprep.subr.bf16.mxu0 0
    %3783 = vmatpush1.bf16.msra.mxu0 %v3701
    %3784 = vmatprep.subr.bf16.mxu0 0
    %3785 = vmatpush1.bf16.msra.mxu0 %v3700
    %3786 = vmatprep.subr.bf16.mxu0 0
    %3787 = vmatpush1.bf16.msra.mxu0 %v3699
    %3788 = vmatprep.subr.bf16.mxu0 0
    %3789 = vmatpush2.bf16.msra.mxu0 0
    %3790 = vmatprep.subr.bf16.mxu0 0
    %3791 = vmatpush2.bf16.msra.mxu0 0
    %3792 = vmatprep.subr.bf16.mxu0 0
    %3793 = vmatpush2.bf16.msra.mxu0 0
    %3794 = vmatprep.subr.bf16.mxu0 0
    %3795 = vmatpush2.bf16.msra.mxu0 0
    %3796 = vmatprep.subr.bf16.mxu0 0
    %3797 = vmatpush2.bf16.msra.mxu0 0
    %3798 = vmatprep.subr.bf16.mxu0 0
    %3799 = vmatpush2.bf16.msra.mxu0 0
    %3800 = vmatprep.subr.bf16.mxu0 0
    %3801 = vmatpush2.bf16.msra.mxu0 0
    %3802 = vmatprep.subr.bf16.mxu0 0
    %3803 = vmatpush2.bf16.msra.mxu0 0
    %3804 = vmatprep.mubr.bf16.mxu0 0
    %3805 = vmatmul.mubr.bf16.gmra.mxu0 %v3531
    %v3806 = vpop.f32.mrf.mxu0
    %v3807 = vadd.f32 %v3766, %v3806
    %v3808 = vpop.f32.mrf.mxu0
    %v3809 = vpop.f32.mrf.mxu0
    %v3810 = vadd.f32 %v3769, %v3809
    %v3811 = vpop.f32.mrf.mxu0
    %3812 = vdwg.mxu0
    %vm3813 = vcmp.ge.f32.partialorder %v3807, 0.0
    %vm3814 = vcmp.ge.f32.partialorder %v3810, 0.0
    %v3815 = vmul.f32 %v3807, 0.01
    %v3816 = vmul.f32 %v3810, 0.01
    %v3817 = vsel %vm3813, %v3807, %v3815
    %v3818 = vsel %vm3814, %v3810, %v3816
    %v3819 = vpack.c.bf16 %v3818, %v3817
    %v3820 = vld [vmem:[%s9] sm:$0xf]
    %v3821 = vld [vmem:[%s9 + $0x4] sm:$0xf]
    %v3822 = vld [vmem:[%s9 + $0x8] sm:$0xf]
    %v3823 = vld [vmem:[%s9 + $0xc] sm:$0xf]
    %v3824 = vld [vmem:[%s9 + $0x10] sm:$0xf]
    %v3825 = vld [vmem:[%s9 + $0x14] sm:$0xf]
    %v3826 = vld [vmem:[%s9 + $0x18] sm:$0xf]
    %v3827 = vld [vmem:[%s9 + $0x1c] sm:$0xf]
    %v3828 = vld [vmem:[%s9 + $0x20] sm:$0xf]
    %v3829 = vld [vmem:[%s9 + $0x24] sm:$0xf]
    %v3830 = vld [vmem:[%s9 + $0x28] sm:$0xf]
    %v3831 = vld [vmem:[%s9 + $0x2c] sm:$0xf]
    %v3832 = vld [vmem:[%s9 + $0x30] sm:$0xf]
    %v3833 = vld [vmem:[%s9 + $0x34] sm:$0xf]
    %v3834 = vld [vmem:[%s9 + $0x38] sm:$0xf]
    %v3835 = vld [vmem:[%s9 + $0x3c] sm:$0xf]
    %v3836 = vld [vmem:[%s10] sm:$0x1]
    %v3838 = vlaneseq
    %v3839 = vshrl.u32 %v3838, 7
    %v3840 = vsub.s32 0, %v3839
    %v3841 = vrot.slane %v3836, %v3840
    %v3859 = vunpack.c.l.b16 %v3820
    %v3860 = vunpack.c.l.b16 %v3821
    %v3861 = vunpack.c.l.b16 %v3822
    %v3862 = vunpack.c.l.b16 %v3823
    %v3863 = vunpack.c.l.b16 %v3824
    %v3864 = vunpack.c.l.b16 %v3825
    %v3865 = vunpack.c.l.b16 %v3826
    %v3866 = vunpack.c.l.b16 %v3827
    %v3867 = vunpack.c.l.b16 %v3828
    %v3868 = vunpack.c.l.b16 %v3829
    %v3869 = vunpack.c.l.b16 %v3830
    %v3870 = vunpack.c.l.b16 %v3831
    %v3871 = vunpack.c.l.b16 %v3832
    %v3872 = vunpack.c.l.b16 %v3833
    %v3873 = vunpack.c.l.b16 %v3834
    %v3874 = vunpack.c.l.b16 %v3835
    %v3875 = vpack.c.b16 %v3860, %v3859
    %v3876 = vpack.c.b16 %v3862, %v3861
    %v3877 = vpack.c.b16 %v3864, %v3863
    %v3878 = vpack.c.b16 %v3866, %v3865
    %v3879 = vpack.c.b16 %v3868, %v3867
    %v3880 = vpack.c.b16 %v3870, %v3869
    %v3881 = vpack.c.b16 %v3872, %v3871
    %v3882 = vpack.c.b16 %v3874, %v3873
    %3891 = vmatprep.subr.bf16.mxu0 0
    %3892 = vmatpush1.bf16.msra.mxu0 %v3882
    %3893 = vmatprep.subr.bf16.mxu0 0
    %3894 = vmatpush1.bf16.msra.mxu0 %v3881
    %3895 = vmatprep.subr.bf16.mxu0 0
    %3896 = vmatpush1.bf16.msra.mxu0 %v3880
    %3897 = vmatprep.subr.bf16.mxu0 0
    %3898 = vmatpush1.bf16.msra.mxu0 %v3879
    %3899 = vmatprep.subr.bf16.mxu0 0
    %3900 = vmatpush1.bf16.msra.mxu0 %v3878
    %3901 = vmatprep.subr.bf16.mxu0 0
    %3902 = vmatpush1.bf16.msra.mxu0 %v3877
    %3903 = vmatprep.subr.bf16.mxu0 0
    %3904 = vmatpush1.bf16.msra.mxu0 %v3876
    %3905 = vmatprep.subr.bf16.mxu0 0
    %3906 = vmatpush1.bf16.msra.mxu0 %v3875
    %3907 = vmatprep.subr.bf16.mxu0 0
    %3908 = vmatpush2.bf16.msra.mxu0 0
    %3909 = vmatprep.subr.bf16.mxu0 0
    %3910 = vmatpush2.bf16.msra.mxu0 0
    %3911 = vmatprep.subr.bf16.mxu0 0
    %3912 = vmatpush2.bf16.msra.mxu0 0
    %3913 = vmatprep.subr.bf16.mxu0 0
    %3914 = vmatpush2.bf16.msra.mxu0 0
    %3915 = vmatprep.subr.bf16.mxu0 0
    %3916 = vmatpush2.bf16.msra.mxu0 0
    %3917 = vmatprep.subr.bf16.mxu0 0
    %3918 = vmatpush2.bf16.msra.mxu0 0
    %3919 = vmatprep.subr.bf16.mxu0 0
    %3920 = vmatpush2.bf16.msra.mxu0 0
    %3921 = vmatprep.subr.bf16.mxu0 0
    %3922 = vmatpush2.bf16.msra.mxu0 0
    %3923 = vmatprep.mubr.bf16.mxu0 0
    %3924 = vmatmul.mubr.bf16.gmra.mxu0 %v3819
    %v3925 = vpop.f32.mrf.mxu0
    %v3926 = vadd.f32 %v3841, %v3925
    %v3927 = vpop.f32.mrf.mxu0
    %v3928 = vpop.f32.mrf.mxu0
    %v3929 = vadd.f32 %v3841, %v3928
    %v3930 = vpop.f32.mrf.mxu0
    %3931 = vdwg.mxu0
    %v3932 = vsub.f32 0.0, %v3926
    %v3933 = vsub.f32 0.0, %v3929
    %v3934 = vmul.f32 %v3932, 1.442695
    %v3935 = vpow.pop %v3934
    %v3936 = vmul.f32 %v3933, 1.442695
    %v3937 = vpow.pop %v3936
    %v3938 = vadd.f32 %v3935, 1.0
    %v3939 = vadd.f32 %v3937, 1.0
    %v3940 = vrcp.pop %v3938
    %v3941 = vmul.f32 1.0, %v3940
    %v3942 = vrcp.pop %v3939
    %v3943 = vmul.f32 1.0, %v3942
    %3944 = vst [vmem:[%s11] sm:$0xff] %v3941
    %3945 = vst [vmem:[%s11 + $0x8] sm:$0xff] %v3943
    // Predicated region
    $region62: #{neural_network_forward.1} parent=1 // pred_check
      _
    $region63: #{neural_network_forward.1} parent=1 // pred_check_branch
      %3947 = sbr.rel (0) target = $region65
    $region64: #{neural_network_forward.1} parent=1 // pred_region
      _
    $region65: #{neural_network_forward.1} parent=1 // pred_fallthru
      _
    // Predicated region
    $region66: #{neural_network_forward.1} parent=1 // pred_check
      _
    $region67: #{neural_network_forward.1} parent=1 // pred_check_branch
      %3949 = sbr.rel (0) target = $region69
    $region68: #{neural_network_forward.1} parent=1 // pred_region
      _
    $region69: #{neural_network_forward.1} parent=1 // pred_fallthru
      _
    %3950 = vsyncpa [#allocation3], 1
    %3951 = vsyncpa [#allocation5], 1
    %3952 = vsyncpa [#allocation8], 1

</llo_original>
